<compile_context>
chip_gen: v5e
topology: v5e:2x2
jax: 0.10.0
libtpu: 0.0.40
codegen_flags: <defaults>
</compile_context>

<pallas_src>
import functools

import jax
import jax.numpy as jnp
from jax import lax
from jax.experimental import pallas as pl
from jax.experimental.pallas import tpu as pltpu

BN_EPS = 1e-5


def _is_pow2(n):
    return n > 0 and (n & (n - 1)) == 0


def _fused_residual_kernel(N, H, W, C, x_ref, w_ref, gb_ref, out_ref, act_ref):
    """One grid step = one Conv3x3+BN(+residual)(+ReLU) stage; NHWC as (N*H, W*C)."""
    NH = N * H
    WC = W * C
    inv_cnt = 1.0 / float(N * H * W)
    s = pl.program_id(0)

    # Stage 0 seeds the carried activation with x (x stays resident for the residual).
    @pl.when(s == 0)
    def _():
        act_ref[...] = x_ref[...].astype(jnp.float32)

    act = act_ref[...]

    # H zero-padding masks.  Rows are n-major / h-minor, so these masks also
    # stop the sublane-roll wrap-around from mixing rows across images.
    row_h = lax.broadcasted_iota(jnp.int32, (NH, 1), 0) % H
    m_up = (row_h != 0).astype(jnp.float32)        # tap at h-1 exists
    m_dn = (row_h != (H - 1)).astype(jnp.float32)  # tap at h+1 exists

    tap_up = pltpu.roll(act, shift=1, axis=0) * m_up        # x[.., h-1, ..]
    tap_dn = pltpu.roll(act, shift=NH - 1, axis=0) * m_dn   # x[.., h+1, ..]

    # Single K = 3*W*C matmul per stage: ky taps concatenated along lanes,
    # kx taps + W zero-padding folded into the banded weights (built at prep
    # time).  bf16 operands, f32 accumulation -> one MXU pass.
    inp3 = jnp.concatenate(
        [tap_up.astype(jnp.bfloat16),
         act.astype(jnp.bfloat16),
         tap_dn.astype(jnp.bfloat16)],
        axis=1)                                              # (NH, 3*WC) bf16
    y = jnp.dot(inp3, w_ref[0], preferred_element_type=jnp.float32)   # (NH, WC) f32

    # (Conv bias intentionally absent: cancelled exactly by the BN mean below.)

    # BatchNorm2d, training-mode batch statistics, single pass, f32.
    ssum = jnp.sum(y, axis=0, keepdims=True)       # (1, WC)
    ssq = jnp.sum(y * y, axis=0, keepdims=True)    # (1, WC)
    if _is_pow2(W):
        # log2(W) lane rotations: reduce over the W channel blocks and leave the
        # per-channel totals broadcast to every block (no relayout).
        shift = C
        while shift < WC:
            ssum = ssum + pltpu.roll(ssum, shift=shift, axis=1)
            ssq = ssq + pltpu.roll(ssq, shift=shift, axis=1)
            shift *= 2
    else:  # generic fallback for non-power-of-two W (tiny relayout)
        ssum = jnp.tile(jnp.sum(ssum.reshape(W, C), axis=0, keepdims=True), (1, W))
        ssq = jnp.tile(jnp.sum(ssq.reshape(W, C), axis=0, keepdims=True), (1, W))
    mean = ssum * inv_cnt
    var = ssq * inv_cnt - mean * mean              # biased variance (BN training mode)

    gb = gb_ref[0]                                 # (2, WC) f32: gamma row, beta row
    y = (y - mean) * lax.rsqrt(var + BN_EPS)
    y = y * gb[0:1, :] + gb[1:2, :]

    # Stage 1: + residual x (no ReLU).  Stages 0 and 2: ReLU.
    y = jnp.where(s == 1, y + x_ref[...].astype(jnp.float32), jnp.maximum(y, 0.0))

    @pl.when(s != 2)
    def _():
        act_ref[...] = y           # carry to the next stage

    @pl.when(s == 2)
    def _():
        out_ref[...] = y.astype(out_ref.dtype)


def _vmem_limit_bytes(NH, WC, w_itemsize):
    # Double-buffered per-stage weight slab + resident x/out/scratch slabs +
    # in-kernel temporaries, plus a flat headroom for compiler scratch.
    weights = 2 * (3 * WC) * WC * w_itemsize
    slabs = 8 * NH * WC * 4
    return int(min(weights + slabs + (8 << 20), 48 << 20))   # stay < v7x 64 MiB physical


def residual_struct_forward(x_nchw, prep):
    """x_nchw: (N, C, H, W).  prep: kernel-layout params from prepare_params()."""
    N, C, H, W = x_nchw.shape
    NH, WC = N * H, W * C
    # TODO(synk): if the surrounding model can consume/produce NHWC (or this
    # (N*H, W*C) slab) directly, drop these two transposes (extra XLA ops +
    # activation HBM round trips).
    x2d = jnp.transpose(x_nchw, (0, 2, 3, 1)).reshape(NH, WC)   # lane-dense slab
    w_all, gb_all = prep["w"], prep["gb"]                       # (3,3*WC,WC) bf16, (3,2,WC) f32
    K3 = w_all.shape[1]

    out2d = pl.pallas_call(
        functools.partial(_fused_residual_kernel, N, H, W, C),
        out_shape=jax.ShapeDtypeStruct((NH, WC), x_nchw.dtype),
        grid_spec=pltpu.PrefetchScalarGridSpec(
            num_scalar_prefetch=0,
            grid=(3,),                                          # one step per stage
            in_specs=[
                pl.BlockSpec((NH, WC), lambda s: (0, 0)),       # x: resident, DMA'd once
                pl.BlockSpec((1, K3, WC), lambda s: (s, 0, 0)), # per-stage bf16 weights (pipelined)
                pl.BlockSpec((1, 2, WC), lambda s: (s, 0, 0)),  # per-stage gamma/beta
            ],
            out_specs=pl.BlockSpec((NH, WC), lambda s: (0, 0)), # resident; written at s==2
            scratch_shapes=[pltpu.VMEM((NH, WC), jnp.float32)], # carried activation
        ),
        compiler_params=pltpu.CompilerParams(
            dimension_semantics=("arbitrary",),                 # stages are sequential
            vmem_limit_bytes=_vmem_limit_bytes(NH, WC, jnp.dtype(w_all.dtype).itemsize),
        ),
    )(x2d, w_all, gb_all)
    return jnp.transpose(out2d.reshape(N, H, W, C), (0, 3, 1, 2))


def init_params(key, hidden):
    """PyTorch-style Conv2d init (OIHW weights), BatchNorm gamma=1 / beta=0."""
    params = {}
    keys = jax.random.split(key, 6)
    fan_in = hidden * 9
    bound = 1.0 / float(fan_in ** 0.5)
    for i, name in enumerate(("first", "second", "third")):
        wk, bk = keys[2 * i], keys[2 * i + 1]
        w = jax.random.uniform(wk, (hidden, hidden, 3, 3), jnp.float32, -bound, bound)
        b = jax.random.uniform(bk, (hidden,), jnp.float32, -bound, bound)
        params[name] = dict(w=w, b=b,
                            gamma=jnp.ones((hidden,), jnp.float32),
                            beta=jnp.zeros((hidden,), jnp.float32))
    return params


def prepare_params(params, W, weight_dtype=jnp.bfloat16):
    """One-time repack of PyTorch-layout params into the kernel layout.

    Conv weights (O, I, 3, 3) -> banded (3*W*C, W*C) slabs (kx taps + W zero
    padding folded into the matmul, ky folded into the contraction dim),
    stacked over the three stages and stored in bf16.  gamma/beta are tiled to
    (1, W*C) and packed as one (3, 2, W*C) f32 array.  The conv bias is dropped
    (exactly cancelled by training-mode BN mean subtraction).
    """
    w_slabs, gb_rows = [], []
    for name in ("first", "second", "third"):
        p = params[name]
        w = p["w"]
        C = w.shape[0]
        wt = jnp.transpose(w, (2, 3, 1, 0))                  # (ky, kx, Cin, Cout)
        kx = jnp.arange(3)[:, None, None] - 1
        w_in = jnp.arange(W)[None, :, None]
        w_out = jnp.arange(W)[None, None, :]
        band = (w_in - w_out == kx).astype(w.dtype)          # (3, W, W) indicator
        big = jnp.einsum('kab,ykio->yaibo', band, wt,
                         precision=lax.Precision.HIGHEST)    # (ky, Win, Cin, Wout, Cout)
        w_slabs.append(big.reshape(3 * W * C, W * C))        # ky folded into K
        tile = lambda v: jnp.tile(v.reshape(1, C), (1, W)).reshape(W * C)
        gb_rows.append(jnp.stack([tile(p["gamma"]), tile(p["beta"])], axis=0))
    w_all = jnp.stack(w_slabs, axis=0).astype(weight_dtype)  # (3, 3*W*C, W*C)
    gb_all = jnp.stack(gb_rows, axis=0).astype(jnp.float32)  # (3, 2, W*C)
    return {"w": w_all, "gb": gb_all}


# ---- pure-JAX reference (for correctness check) --------------------------------
def _ref_conv_bn(x_nchw, w, b, gamma, beta, relu, residual=None):
    y = lax.conv_general_dilated(x_nchw, w, (1, 1), ((1, 1), (1, 1)),
                                 dimension_numbers=("NCHW", "OIHW", "NCHW"),
                                 precision=lax.Precision.HIGHEST)
    y = y + b.reshape(1, -1, 1, 1)
    mean = jnp.mean(y, axis=(0, 2, 3), keepdims=True)
    var = jnp.mean(jnp.square(y - mean), axis=(0, 2, 3), keepdims=True)
    y = (y - mean) / jnp.sqrt(var + BN_EPS)
    y = y * gamma.reshape(1, -1, 1, 1) + beta.reshape(1, -1, 1, 1)
    if residual is not None:
        y = y + residual
    if relu:
        y = jnp.maximum(y, 0.0)
    return y


if __name__ == "__main__":
    key = jax.random.PRNGKey(0)
    kx_, kp = jax.random.split(key)

    N, C, H, W = 2, 32, 16, 16                   # batch, hidden, spatial (NCHW)
    x = jax.random.normal(kx_, (N, C, H, W), jnp.float32)
    params = init_params(kp, C)
    prep = prepare_params(params, W)             # one-time weight repack (bf16 slabs)

    fwd = jax.jit(residual_struct_forward)
    out = jax.block_until_ready(fwd(x, prep))
    assert out.shape == (N, C, H, W)

    # reference check (bf16 matmul operands across 3 chained Conv+BN stages ->
    # expected worst-case abs error ~1e-2 on unit-variance activations).
    p1, p2, p3 = params["first"], params["second"], params["third"]
    r = _ref_conv_bn(x, p1["w"], p1["b"], p1["gamma"], p1["beta"], relu=True)
    r = _ref_conv_bn(r, p2["w"], p2["b"], p2["gamma"], p2["beta"], relu=False, residual=x)
    r = _ref_conv_bn(r, p3["w"], p3["b"], p3["gamma"], p3["beta"], relu=True)
    err = float(jnp.max(jnp.abs(out - r)))
    assert bool(jnp.allclose(out, r, atol=2e-2, rtol=2e-2)), f"max abs err {err}"

    print("KERNEL_OK")
</pallas_src>

<mosaic_0001>
module attributes {stable_mosaic.version = 11 : i64} {
  func.func @_fused_residual_kernel(%arg0: i32, %arg1: memref<32x512xf32, #tpu.memory_space<vmem>>, %arg2: memref<1x1536x512xbf16, #tpu.memory_space<vmem>>, %arg3: memref<1x2x512xf32, #tpu.memory_space<vmem>>, %arg4: memref<32x512xf32, #tpu.memory_space<vmem>>, %arg5: memref<32x512xf32, #tpu.memory_space<vmem>>) attributes {dimension_semantics = [#tpu.dimension_semantics<arbitrary>], iteration_bounds = array<i64: 3>, scalar_prefetch = 0 : i64, scratch_operands = 1 : i64, tpu.core_type = #tpu.core_type<tc>, window_params = [{pipeline_mode = #tpu.pipeline_mode<synchronous>, transform_indices = @transform_0, window_bounds = array<i64: 32, 512>}, {transform_indices = @transform_1, window_bounds = array<i64: 1, 1536, 512>}, {transform_indices = @transform_2, window_bounds = array<i64: 1, 2, 512>}, {pipeline_mode = #tpu.pipeline_mode<synchronous>, transform_indices = @transform_3, window_bounds = array<i64: 32, 512>}]} {
    %c0_i32 = arith.constant 0 : i32
    %0 = arith.cmpi eq, %arg0, %c0_i32 : i32
    %1 = arith.extui %0 : i1 to i32
    %c0_i32_0 = arith.constant 0 : i32
    %2 = arith.cmpi ne, %1, %c0_i32_0 : i32
    scf.if %2 {
      %c0_30 = arith.constant 0 : index
      %c0_31 = arith.constant 0 : index
      %96 = vector.load %arg1[%c0_30, %c0_31] : memref<32x512xf32, #tpu.memory_space<vmem>>, vector<32x512xf32>
      %c0_32 = arith.constant 0 : index
      %c0_33 = arith.constant 0 : index
      %97 = vector.load %arg5[%c0_32, %c0_33] : memref<32x512xf32, #tpu.memory_space<vmem>>, vector<32x512xf32>
      tpu.vector_store %arg5[%c0_32, %c0_33], %96 {strides = array<i32>} : memref<32x512xf32, #tpu.memory_space<vmem>>, vector<32x512xf32>,
    } else {
    }
    %c0 = arith.constant 0 : index
    %c0_1 = arith.constant 0 : index
    %3 = vector.load %arg5[%c0, %c0_1] : memref<32x512xf32, #tpu.memory_space<vmem>>, vector<32x512xf32>
    %4 = tpu.iota {dimensions = array<i32: 0>} : vector<32x1xi32>
    %c16_i32 = arith.constant 16 : i32
    %c0_i32_2 = arith.constant 0 : i32
    %5 = arith.cmpi eq, %c16_i32, %c0_i32_2 : i32
    %c1_i32 = arith.constant 1 : i32
    %6 = arith.select %5, %c1_i32, %c16_i32 : i32
    %7 = vector.broadcast %6 : i32 to vector<32x1xi32>
    %8 = arith.remsi %4, %7 : vector<32x1xi32>
    %c0_i32_3 = arith.constant 0 : i32
    %9 = vector.broadcast %c0_i32_3 : i32 to vector<32x1xi32>
    %10 = arith.cmpi ne, %8, %9 : vector<32x1xi32>
    %c0_i32_4 = arith.constant 0 : i32
    %11 = vector.broadcast %c0_i32_4 : i32 to vector<32x1xi32>
    %12 = arith.cmpi slt, %8, %11 : vector<32x1xi32>
    %c0_i32_5 = arith.constant 0 : i32
    %13 = arith.cmpi slt, %6, %c0_i32_5 : i32
    %14 = vector.broadcast %13 : i1 to vector<32x1xi1>
    %15 = vector.broadcast %14 : vector<32x1xi1> to vector<32x1xi1>
    %16 = arith.xori %12, %15 : vector<32x1xi1>
    %17 = arith.andi %16, %10 : vector<32x1xi1>
    %18 = vector.broadcast %6 : i32 to vector<32x1xi32>
    %19 = arith.addi %8, %18 : vector<32x1xi32>
    %20 = arith.select %17, %19, %8 : vector<32x1xi1>, vector<32x1xi32>
    %c0_i32_6 = arith.constant 0 : i32
    %21 = vector.broadcast %c0_i32_6 : i32 to vector<32x1xi32>
    %22 = arith.cmpi ne, %20, %21 : vector<32x1xi32>
    %23 = arith.extui %22 : vector<32x1xi1> to vector<32x1xi32>
    %24 = arith.sitofp %23 : vector<32x1xi32> to vector<32x1xf32>
    %c15_i32 = arith.constant 15 : i32
    %25 = vector.broadcast %c15_i32 : i32 to vector<32x1xi32>
    %26 = arith.cmpi ne, %20, %25 : vector<32x1xi32>
    %27 = arith.extui %26 : vector<32x1xi1> to vector<32x1xi32>
    %28 = arith.sitofp %27 : vector<32x1xi32> to vector<32x1xf32>
    %c1_i32_7 = arith.constant 1 : i32
    %29 = tpu.dynamic_rotate %3 by %c1_i32_7 dim 0 : vector<32x512xf32>, i32 -> vector<32x512xf32>
    %30 = vector.broadcast %24 : vector<32x1xf32> to vector<32x512xf32>
    %31 = arith.mulf %29, %30 : vector<32x512xf32>
    %c31_i32 = arith.constant 31 : i32
    %32 = tpu.dynamic_rotate %3 by %c31_i32 dim 0 : vector<32x512xf32>, i32 -> vector<32x512xf32>
    %33 = vector.broadcast %28 : vector<32x1xf32> to vector<32x512xf32>
    %34 = arith.mulf %32, %33 : vector<32x512xf32>
    %35 = arith.truncf %31 : vector<32x512xf32> to vector<32x512xbf16>
    %36 = arith.truncf %3 : vector<32x512xf32> to vector<32x512xbf16>
    %37 = arith.truncf %34 : vector<32x512xf32> to vector<32x512xbf16>
    %38 = tpu.concatenate %35, %36, %37 in 1 : vector<32x512xbf16>, vector<32x512xbf16>, vector<32x512xbf16> -> vector<32x1536xbf16>
    %c0_8 = arith.constant 0 : index
    %c0_9 = arith.constant 0 : index
    %c0_10 = arith.constant 0 : index
    %39 = vector.load %arg2[%c0_8, %c0_9, %c0_10] : memref<1x1536x512xbf16, #tpu.memory_space<vmem>>, vector<1x1536x512xbf16>
    %40 = vector.shape_cast %39 : vector<1x1536x512xbf16> to vector<1536x512xbf16>
    %cst = arith.constant dense<0.000000e+00> : vector<32x512xf32>
    %41 = tpu.matmul %38, %40, %cst {dimension_numbers = #tpu.dot_dimension_numbers<[1], [0], [0], [1], [0, 0, 1, 1], [], []>} : vector<32x1536xbf16>, vector<1536x512xbf16>, vector<32x512xf32> -> vector<32x512xf32>
    %cst_11 = arith.constant dense<0.000000e+00> : vector<512xf32>
    %42 = vector.multi_reduction <add>, %41, %cst_11 [0] : vector<32x512xf32> to vector<512xf32>
    %43 = vector.shape_cast %42 : vector<512xf32> to vector<1x512xf32>
    %44 = arith.mulf %41, %41 : vector<32x512xf32>
    %cst_12 = arith.constant dense<0.000000e+00> : vector<512xf32>
    %45 = vector.multi_reduction <add>, %44, %cst_12 [0] : vector<32x512xf32> to vector<512xf32>
    %46 = vector.shape_cast %45 : vector<512xf32> to vector<1x512xf32>
    %c32_i32 = arith.constant 32 : i32
    %47 = tpu.dynamic_rotate %43 by %c32_i32 dim 1 : vector<1x512xf32>, i32 -> vector<1x512xf32>
    %48 = arith.addf %43, %47 : vector<1x512xf32>
    %c32_i32_13 = arith.constant 32 : i32
    %49 = tpu.dynamic_rotate %46 by %c32_i32_13 dim 1 : vector<1x512xf32>, i32 -> vector<1x512xf32>
    %50 = arith.addf %46, %49 : vector<1x512xf32>
    %c64_i32 = arith.constant 64 : i32
    %51 = tpu.dynamic_rotate %48 by %c64_i32 dim 1 : vector<1x512xf32>, i32 -> vector<1x512xf32>
    %52 = arith.addf %48, %51 : vector<1x512xf32>
    %c64_i32_14 = arith.constant 64 : i32
    %53 = tpu.dynamic_rotate %50 by %c64_i32_14 dim 1 : vector<1x512xf32>, i32 -> vector<1x512xf32>
    %54 = arith.addf %50, %53 : vector<1x512xf32>
    %c128_i32 = arith.constant 128 : i32
    %55 = tpu.dynamic_rotate %52 by %c128_i32 dim 1 : vector<1x512xf32>, i32 -> vector<1x512xf32>
    %56 = arith.addf %52, %55 : vector<1x512xf32>
    %c128_i32_15 = arith.constant 128 : i32
    %57 = tpu.dynamic_rotate %54 by %c128_i32_15 dim 1 : vector<1x512xf32>, i32 -> vector<1x512xf32>
    %58 = arith.addf %54, %57 : vector<1x512xf32>
    %c256_i32 = arith.constant 256 : i32
    %59 = tpu.dynamic_rotate %56 by %c256_i32 dim 1 : vector<1x512xf32>, i32 -> vector<1x512xf32>
    %60 = arith.addf %56, %59 : vector<1x512xf32>
    %c256_i32_16 = arith.constant 256 : i32
    %61 = tpu.dynamic_rotate %58 by %c256_i32_16 dim 1 : vector<1x512xf32>, i32 -> vector<1x512xf32>
    %62 = arith.addf %58, %61 : vector<1x512xf32>
    %cst_17 = arith.constant 0.001953125 : f32
    %63 = vector.broadcast %cst_17 : f32 to vector<1x512xf32>
    %64 = arith.mulf %60, %63 : vector<1x512xf32>
    %cst_18 = arith.constant 0.001953125 : f32
    %65 = vector.broadcast %cst_18 : f32 to vector<1x512xf32>
    %66 = arith.mulf %62, %65 : vector<1x512xf32>
    %67 = arith.mulf %64, %64 : vector<1x512xf32>
    %68 = arith.subf %66, %67 : vector<1x512xf32>
    %c0_19 = arith.constant 0 : index
    %c0_20 = arith.constant 0 : index
    %c0_21 = arith.constant 0 : index
    %69 = vector.load %arg3[%c0_19, %c0_20, %c0_21] : memref<1x2x512xf32, #tpu.memory_space<vmem>>, vector<1x2x512xf32>
    %70 = vector.shape_cast %69 : vector<1x2x512xf32> to vector<2x512xf32>
    %71 = vector.broadcast %64 : vector<1x512xf32> to vector<32x512xf32>
    %72 = arith.subf %41, %71 : vector<32x512xf32>
    %cst_22 = arith.constant 9.99999974E-6 : f32
    %73 = vector.broadcast %cst_22 : f32 to vector<1x512xf32>
    %74 = arith.addf %68, %73 : vector<1x512xf32>
    %75 = math.rsqrt %74 : vector<1x512xf32>
    %76 = vector.broadcast %75 : vector<1x512xf32> to vector<32x512xf32>
    %77 = arith.mulf %72, %76 : vector<32x512xf32>
    %78 = vector.extract_strided_slice %70 {offsets = [0, 0], sizes = [1, 512], strides = [1, 1]} : vector<2x512xf32> to vector<1x512xf32>
    %79 = vector.broadcast %78 : vector<1x512xf32> to vector<32x512xf32>
    %80 = arith.mulf %77, %79 : vector<32x512xf32>
    %81 = vector.extract_strided_slice %70 {offsets = [1, 0], sizes = [1, 512], strides = [1, 1]} : vector<2x512xf32> to vector<1x512xf32>
    %82 = vector.broadcast %81 : vector<1x512xf32> to vector<32x512xf32>
    %83 = arith.addf %80, %82 : vector<32x512xf32>
    %c1_i32_23 = arith.constant 1 : i32
    %84 = arith.cmpi eq, %arg0, %c1_i32_23 : i32
    %c0_24 = arith.constant 0 : index
    %c0_25 = arith.constant 0 : index
    %85 = vector.load %arg1[%c0_24, %c0_25] : memref<32x512xf32, #tpu.memory_space<vmem>>, vector<32x512xf32>
    %86 = arith.addf %83, %85 : vector<32x512xf32>
    %cst_26 = arith.constant 0.000000e+00 : f32
    %87 = vector.broadcast %cst_26 : f32 to vector<32x512xf32>
    %88 = arith.maximumf %83, %87 : vector<32x512xf32>
    %89 = arith.select %84, %86, %88 : vector<32x512xf32>
    %c2_i32 = arith.constant 2 : i32
    %90 = arith.cmpi ne, %arg0, %c2_i32 : i32
    %91 = arith.extui %90 : i1 to i32
    %c0_i32_27 = arith.constant 0 : i32
    %92 = arith.cmpi ne, %91, %c0_i32_27 : i32
    scf.if %92 {
      %c0_30 = arith.constant 0 : index
      %c0_31 = arith.constant 0 : index
      %96 = vector.load %arg5[%c0_30, %c0_31] : memref<32x512xf32, #tpu.memory_space<vmem>>, vector<32x512xf32>
      tpu.vector_store %arg5[%c0_30, %c0_31], %89 {strides = array<i32>} : memref<32x512xf32, #tpu.memory_space<vmem>>, vector<32x512xf32>,
    } else {
    }
    %c2_i32_28 = arith.constant 2 : i32
    %93 = arith.cmpi eq, %arg0, %c2_i32_28 : i32
    %94 = arith.extui %93 : i1 to i32
    %c0_i32_29 = arith.constant 0 : i32
    %95 = arith.cmpi ne, %94, %c0_i32_29 : i32
    scf.if %95 {
      %c0_30 = arith.constant 0 : index
      %c0_31 = arith.constant 0 : index
      %96 = vector.load %arg4[%c0_30, %c0_31] : memref<32x512xf32, #tpu.memory_space<vmem>>, vector<32x512xf32>
      tpu.vector_store %arg4[%c0_30, %c0_31], %89 {strides = array<i32>} : memref<32x512xf32, #tpu.memory_space<vmem>>, vector<32x512xf32>,
    } else {
    }
    return
  }
  func.func @transform_0(%arg0: i32) -> (i32, i32) {
    %c0_i32 = arith.constant 0 : i32
    %c0_i32_0 = arith.constant 0 : i32
    %c0_i32_1 = arith.constant 0 : i32
    return %c0_i32, %c0_i32_0 : i32, i32
  }
  func.func @transform_1(%arg0: i32) -> (i32, i32, i32) {
    %c0_i32 = arith.constant 0 : i32
    %c0_i32_0 = arith.constant 0 : i32
    %c0_i32_1 = arith.constant 0 : i32
    return %arg0, %c0_i32, %c0_i32_0 : i32, i32, i32
  }
  func.func @transform_2(%arg0: i32) -> (i32, i32, i32) {
    %c0_i32 = arith.constant 0 : i32
    %c0_i32_0 = arith.constant 0 : i32
    %c0_i32_1 = arith.constant 0 : i32
    return %arg0, %c0_i32, %c0_i32_0 : i32, i32, i32
  }
  func.func @transform_3(%arg0: i32) -> (i32, i32) {
    %c0_i32 = arith.constant 0 : i32
    %c0_i32_0 = arith.constant 0 : i32
    %c0_i32_1 = arith.constant 0 : i32
    return %c0_i32, %c0_i32_0 : i32, i32
  }
}

</mosaic_0001>

<llo_original>
// kernel: residual_struct_forward.1
$region0: #{residual_struct_forward.1}
  #allocation0 [shape = 'u32[]', space=smem, size = 0x4, offset = 0x4, fixed_abs, tag = 'smem constant byte address 0x4 - core index']
  #allocation1 [shape = 'u32[72,128]{1,0:T(1,128)}', space=vmem, size = 0x9000, scoped, tag = 'internal scratch']
  #allocation2 [shape = 'f32[32,512]{1,0:T(8,128)}', space=vmem, size = 0x10000, scoped, tag = 'scratch operand']
  %s0 = inlined_call_operand.vmem [shape: f32[32,512], index: 0, kind: input, shape index: {}]
  %s1 = inlined_call_operand.hbm [shape: bf16[3,1536,512], index: 1, kind: input, shape index: {}]
  %s2 = inlined_call_operand.hbm [shape: f32[3,2,512], index: 2, kind: input, shape index: {}]
  %s3 = inlined_call_operand.vmem [shape: f32[32,512], index: 3, kind: output, shape index: {}]
  %s4 = sld [smem:[#allocation0]]
  $region65: #{residual_struct_forward.1} parent=0
    _
  %s6 = ssub.s32 1, %s4
  %s7 = scalar_select 0, %s6, %s4
  $region1: #{residual_struct_forward.1} parent=0
    #allocation3 [shape = 'u8[3145728]{0}', space=vmem, size = 0x300000, scoped, tag = 'input window, operand 1']
    #allocation4 [shape = 's32[2]{0}', space=sflag, size = 0x8, scoped, tag = 'scoped memory for residual_struct_forward.1']
    #allocation5 [shape = 'u8[8192]{0}', space=vmem, size = 0x2000, scoped, tag = 'input window, operand 2']
    #allocation6 [shape = 's32[2]{0}', space=sflag, size = 0x8, scoped, tag = 'scoped memory for residual_struct_forward.1']
    %8 = vsyncpa [#allocation4], 0
    %s9 = scalar_lea.sflag [#allocation4], 1
    %10 = vsyncpa %s9, 0
    %11 = vsyncpa [#allocation6], 0
    %s12 = scalar_lea.sflag [#allocation6], 1
    %13 = vsyncpa %s12, 0
    loop: start=0, step=1, limit=5
    $region2: #{residual_struct_forward.1} parent=1 // loop_pre_header
      _
    $region3: #{residual_struct_forward.1} parent=1 // loop_header
      %s15 = sphi 0, %s19
      %p16 = scmp.ge.s32.totalorder %s15, 5
      %s23 = sphi 0, %s23
      %s25 = sphi 0, %s23
      %s26 = sphi 0, %s25
      %s40 = sphi 0, %s26
      %s46 = sphi 0, %s48
      %s49 = sphi 0, %s46
      %s50 = sphi 0, %s49
      %s66 = sphi 0, %s50
      %s72 = sphi 0, %s74
      %s75 = sphi 0, %s72
      %s76 = sphi 0, %s75
      %s92 = sphi 0, %s76
      %s96 = sphi 0, %s96
      %s98 = sphi 0, %s96
      %s99 = sphi 0, %s98
      %s113 = sphi 0, %s99
    $region4: #{residual_struct_forward.1} parent=1 // loop_header_branch
      %18 = sbr.rel (%p16) target = $region8
    $region5: #{residual_struct_forward.1} parent=1 // loop_body
      %s20 = ssub.s32 %s15, 1
      %s21 = ssub.s32 %s15, 2
      %s22 = sadd.s32 %s15, 1
      %s24 = sadd.s32 %s23, 1
      %p27 = scmp.eq.s32.totalorder %s15, 2
      %p28 = scmp.ne.s32.totalorder %s23, %s25
      %p29 = scmp.eq.s32.totalorder %s15, 0
      %p30 = por %p28, %p29
      %p31 = scmp.ne.s32.totalorder %s23, %s25
      %p32 = scmp.eq.s32.totalorder %s20, 2
      %p33 = por %p31, %p32
      %p34 = scmp.ne.s32.totalorder %s25, %s26
      %p35 = scmp.eq.s32.totalorder %s20, 0
      %p36 = por %p34, %p35
      %p37 = scmp.ne.s32.totalorder %s25, %s26
      %p38 = scmp.eq.s32.totalorder %s21, 2
      %p39 = por %p37, %p38
      %p41 = scmp.ne.s32.totalorder %s26, %s40
      %p42 = scmp.eq.s32.totalorder %s21, 0
      %p43 = por %p41, %p42
      %s44 = ssub.s32 %s15, %s22
      %p45 = scmp.eq.s32.totalorder %s44, 0
      %s47 = sadd.s32 %s46, 1
      %s48 = scalar_select %p45, %s46, %s47
      %p51 = pneg %p45
      %p52 = scmp.eq.s32.totalorder %s15, 2
      %p53 = por %p51, %p52
      %p54 = scmp.ne.s32.totalorder %s46, %s49
      %p55 = scmp.eq.s32.totalorder %s15, 0
      %p56 = por %p54, %p55
      %p57 = scmp.ne.s32.totalorder %s46, %s49
      %p58 = scmp.eq.s32.totalorder %s20, 2
      %p59 = por %p57, %p58
      %p60 = scmp.ne.s32.totalorder %s49, %s50
      %p61 = scmp.eq.s32.totalorder %s20, 0
      %p62 = por %p60, %p61
      %p63 = scmp.ne.s32.totalorder %s49, %s50
      %p64 = scmp.eq.s32.totalorder %s21, 2
      %p65 = por %p63, %p64
      %p67 = scmp.ne.s32.totalorder %s50, %s66
      %p68 = scmp.eq.s32.totalorder %s21, 0
      %p69 = por %p67, %p68
      %s70 = ssub.s32 %s15, %s22
      %p71 = scmp.eq.s32.totalorder %s70, 0
      %s73 = sadd.s32 %s72, 1
      %s74 = scalar_select %p71, %s72, %s73
      %p77 = pneg %p71
      %p78 = scmp.eq.s32.totalorder %s15, 2
      %p79 = por %p77, %p78
      %p80 = scmp.ne.s32.totalorder %s72, %s75
      %p81 = scmp.eq.s32.totalorder %s15, 0
      %p82 = por %p80, %p81
      %p83 = scmp.ne.s32.totalorder %s72, %s75
      %p84 = scmp.eq.s32.totalorder %s20, 2
      %p85 = por %p83, %p84
      %p86 = scmp.ne.s32.totalorder %s75, %s76
      %p87 = scmp.eq.s32.totalorder %s20, 0
      %p88 = por %p86, %p87
      %p89 = scmp.ne.s32.totalorder %s75, %s76
      %p90 = scmp.eq.s32.totalorder %s21, 2
      %p91 = por %p89, %p90
      %p93 = scmp.ne.s32.totalorder %s76, %s92
      %p94 = scmp.eq.s32.totalorder %s21, 0
      %p95 = por %p93, %p94
      %s97 = sadd.s32 %s96, 1
      %p100 = scmp.eq.s32.totalorder %s15, 2
      %p101 = scmp.ne.s32.totalorder %s96, %s98
      %p102 = scmp.eq.s32.totalorder %s15, 0
      %p103 = por %p101, %p102
      %p104 = scmp.ne.s32.totalorder %s96, %s98
      %p105 = scmp.eq.s32.totalorder %s20, 2
      %p106 = por %p104, %p105
      %p107 = scmp.ne.s32.totalorder %s98, %s99
      %p108 = scmp.eq.s32.totalorder %s20, 0
      %p109 = por %p107, %p108
      %p110 = scmp.ne.s32.totalorder %s98, %s99
      %p111 = scmp.eq.s32.totalorder %s21, 2
      %p112 = por %p110, %p111
      %p114 = scmp.ne.s32.totalorder %s99, %s113
      %p115 = scmp.eq.s32.totalorder %s21, 0
      %p116 = por %p114, %p115
      %p117 = scmp.le.s32.totalorder 1, %s15
      %p118 = scmp.lt.s32.totalorder %s15, 4
      %p119 = pnand %p117, %p118
      %p120 = pneg %p119
      // Predicated region
      $region9: #{residual_struct_forward.1} parent=5 // pred_check
        _
      $region10: #{residual_struct_forward.1} parent=5 // pred_check_branch
        %122 = sbr.rel (%p119) target = $region12
      $region11: #{residual_struct_forward.1} parent=5 // pred_region
        %s123 = ssub.s32 %s15, 1
        // Predicated region
        $region13: #{residual_struct_forward.1} parent=11 // pred_check
          %p124 = pneg %p36
        $region14: #{residual_struct_forward.1} parent=11 // pred_check_branch
          %126 = sbr.rel (%p124) target = $region16
        $region15: #{residual_struct_forward.1} parent=11 // pred_region
          _
        $region16: #{residual_struct_forward.1} parent=11 // pred_fallthru
          _
      $region12: #{residual_struct_forward.1} parent=5 // pred_fallthru
        _
      %p127 = scmp.lt.s32.totalorder %s15, 3
      // Predicated region
      $region17: #{residual_struct_forward.1} parent=5 // pred_check
        %p128 = pneg %p127
      $region18: #{residual_struct_forward.1} parent=5 // pred_check_branch
        %130 = sbr.rel (%p128) target = $region20
      $region19: #{residual_struct_forward.1} parent=5 // pred_region
        // Predicated region
        $region21: #{residual_struct_forward.1} parent=19 // pred_check
          %p131 = pneg %p56
        $region22: #{residual_struct_forward.1} parent=19 // pred_check_branch
          %133 = sbr.rel (%p131) target = $region24
        $region23: #{residual_struct_forward.1} parent=19 // pred_region
          %s134 = sand.u32 %s46, 1
          %s135 = scalar_lea.sflag [#allocation4], %s134
          %s136 = sand.u32 %s46, 1
          %s137 = smul.addr %s136, 3072
          %s138 = scalar_lea.vmem [#allocation3], %s137
          %140 = vsyncadd %s135, 0
          %s141 = smul.addr %s15, 768
          %s142 = smul.addr %s141, 4
          %s143 = scalar_lea.hbm %s1, %s142
          %s144 = sshll.u32 %s143, 4
          %s145 = int_to_ptr.hbm [resolvable:$true] %s144
          %s146 = sshll.u32 %s138, 4
          %s147 = int_to_ptr.vmem [resolvable:$true] %s146
          %152 = dma.hbm_to_vmem [thread:$0]  %s145, 49152, %s147, %s135, 256, 256, 16
        $region24: #{residual_struct_forward.1} parent=19 // pred_fallthru
          _
        // Predicated region
        $region25: #{residual_struct_forward.1} parent=19 // pred_check
          %p153 = pneg %p82
        $region26: #{residual_struct_forward.1} parent=19 // pred_check_branch
          %155 = sbr.rel (%p153) target = $region28
        $region27: #{residual_struct_forward.1} parent=19 // pred_region
          %s156 = sand.u32 %s72, 1
          %s157 = scalar_lea.sflag [#allocation6], %s156
          %s158 = sand.u32 %s72, 1
          %s159 = smul.addr %s158, 8
          %s160 = scalar_lea.vmem [#allocation5], %s159
          %162 = vsyncadd %s157, 0
          %s163 = smul.addr %s15, 4
          %s164 = smul.addr %s163, 2
          %s165 = scalar_lea.hbm %s2, %s164
          %s167 = sshll.u32 %s165, 4
          %s168 = int_to_ptr.hbm [resolvable:$true] %s167
          %s169 = sshll.u32 %s160, 4
          %s170 = int_to_ptr.vmem [resolvable:$true] %s169
          %172 = dma.hbm_to_vmem [thread:$0]  %s168, 128, %s170, %s157
        $region28: #{residual_struct_forward.1} parent=19 // pred_fallthru
          _
      $region20: #{residual_struct_forward.1} parent=5 // pred_fallthru
        _
      %p173 = scmp.le.s32.totalorder 1, %s15
      %p174 = scmp.lt.s32.totalorder %s15, 4
      %p175 = pnand %p173, %p174
      %p176 = pneg %p175
      // Predicated region
      $region29: #{residual_struct_forward.1} parent=5 // pred_check
        _
      $region30: #{residual_struct_forward.1} parent=5 // pred_check_branch
        %178 = sbr.rel (%p175) target = $region32
      $region31: #{residual_struct_forward.1} parent=5 // pred_region
        %s179 = ssub.s32 %s15, 1
        %s180 = sand.u32 %s49, 1
        %s181 = scalar_lea.sflag [#allocation4], %s180
        %s182 = sand.u32 %s49, 1
        %s183 = smul.addr %s182, 3072
        %s184 = scalar_lea.vmem [#allocation3], %s183
        // Predicated region
        $region33: #{residual_struct_forward.1} parent=31 // pred_check
          %p185 = pneg %p62
        $region34: #{residual_struct_forward.1} parent=31 // pred_check_branch
          %187 = sbr.rel (%p185) target = $region36
        $region35: #{residual_struct_forward.1} parent=31 // pred_region
          %189 = dma.done %s181, 49152
        $region36: #{residual_struct_forward.1} parent=31 // pred_fallthru
          _
        %s190 = sand.u32 %s75, 1
        %s191 = scalar_lea.sflag [#allocation6], %s190
        %s192 = sand.u32 %s75, 1
        %s193 = smul.addr %s192, 8
        %s194 = scalar_lea.vmem [#allocation5], %s193
        // Predicated region
        $region37: #{residual_struct_forward.1} parent=31 // pred_check
          %p195 = pneg %p88
        $region38: #{residual_struct_forward.1} parent=31 // pred_check_branch
          %197 = sbr.rel (%p195) target = $region40
        $region39: #{residual_struct_forward.1} parent=31 // pred_region
          %199 = dma.done %s191, 128
        $region40: #{residual_struct_forward.1} parent=31 // pred_fallthru
          _
        %p200 = pneg %p36
        %p201 = pneg %p33
        %s202 = sand.u32 %s49, 1
        %s203 = scalar_lea.sflag [#allocation4], %s202
        %s204 = sand.u32 %s49, 1
        %s205 = smul.addr %s204, 3072
        %s206 = scalar_lea.vmem [#allocation3], %s205
        %p207 = pneg %p62
        %p208 = pneg %p59
        %s209 = sand.u32 %s75, 1
        %s210 = scalar_lea.sflag [#allocation6], %s209
        %s211 = sand.u32 %s75, 1
        %s212 = smul.addr %s211, 8
        %s213 = scalar_lea.vmem [#allocation5], %s212
        %p214 = pneg %p88
        %p215 = pneg %p85
        %p216 = pneg %p109
        %p217 = pneg %p106
        %p218 = scmp.eq.s32.totalorder %s20, 0
        // Predicated region
        $region41: #{residual_struct_forward.1} parent=31 // pred_check
          %p219 = pneg %p218
        $region42: #{residual_struct_forward.1} parent=31 // pred_check_branch
          %221 = sbr.rel (%p219) target = $region44
        $region43: #{residual_struct_forward.1} parent=31 // pred_region
          %v222 = vld [vmem:[%s0] sm:$0xff]
          %v223 = vld [vmem:[%s0 + $0x8] sm:$0xff]
          %v224 = vld [vmem:[%s0 + $0x10] sm:$0xff]
          %v225 = vld [vmem:[%s0 + $0x18] sm:$0xff]
          %v226 = vld [vmem:[%s0 + $0x20] sm:$0xff]
          %v227 = vld [vmem:[%s0 + $0x28] sm:$0xff]
          %v228 = vld [vmem:[%s0 + $0x30] sm:$0xff]
          %v229 = vld [vmem:[%s0 + $0x38] sm:$0xff]
          %v230 = vld [vmem:[%s0 + $0x40] sm:$0xff]
          %v231 = vld [vmem:[%s0 + $0x48] sm:$0xff]
          %v232 = vld [vmem:[%s0 + $0x50] sm:$0xff]
          %v233 = vld [vmem:[%s0 + $0x58] sm:$0xff]
          %v234 = vld [vmem:[%s0 + $0x60] sm:$0xff]
          %v235 = vld [vmem:[%s0 + $0x68] sm:$0xff]
          %v236 = vld [vmem:[%s0 + $0x70] sm:$0xff]
          %v237 = vld [vmem:[%s0 + $0x78] sm:$0xff]
          %238 = vst [vmem:[#allocation2] sm:$0xff] %v222
          %239 = vst [vmem:[#allocation2 + $0x8] sm:$0xff] %v223
          %240 = vst [vmem:[#allocation2 + $0x10] sm:$0xff] %v224
          %241 = vst [vmem:[#allocation2 + $0x18] sm:$0xff] %v225
          %242 = vst [vmem:[#allocation2 + $0x20] sm:$0xff] %v226
          %243 = vst [vmem:[#allocation2 + $0x28] sm:$0xff] %v227
          %244 = vst [vmem:[#allocation2 + $0x30] sm:$0xff] %v228
          %245 = vst [vmem:[#allocation2 + $0x38] sm:$0xff] %v229
          %246 = vst [vmem:[#allocation2 + $0x40] sm:$0xff] %v230
          %247 = vst [vmem:[#allocation2 + $0x48] sm:$0xff] %v231
          %248 = vst [vmem:[#allocation2 + $0x50] sm:$0xff] %v232
          %249 = vst [vmem:[#allocation2 + $0x58] sm:$0xff] %v233
          %250 = vst [vmem:[#allocation2 + $0x60] sm:$0xff] %v234
          %251 = vst [vmem:[#allocation2 + $0x68] sm:$0xff] %v235
          %252 = vst [vmem:[#allocation2 + $0x70] sm:$0xff] %v236
          %253 = vst [vmem:[#allocation2 + $0x78] sm:$0xff] %v237
        $region44: #{residual_struct_forward.1} parent=31 // pred_fallthru
          _
        %v254 = vld [vmem:[#allocation2] sm:$0xff]
        %v255 = vld [vmem:[#allocation2 + $0x8] sm:$0xff]
        %v256 = vld [vmem:[#allocation2 + $0x10] sm:$0xff]
        %v257 = vld [vmem:[#allocation2 + $0x18] sm:$0xff]
        %v258 = vld [vmem:[#allocation2 + $0x20] sm:$0xff]
        %v259 = vld [vmem:[#allocation2 + $0x28] sm:$0xff]
        %v260 = vld [vmem:[#allocation2 + $0x30] sm:$0xff]
        %v261 = vld [vmem:[#allocation2 + $0x38] sm:$0xff]
        %v262 = vld [vmem:[#allocation2 + $0x40] sm:$0xff]
        %v263 = vld [vmem:[#allocation2 + $0x48] sm:$0xff]
        %v264 = vld [vmem:[#allocation2 + $0x50] sm:$0xff]
        %v265 = vld [vmem:[#allocation2 + $0x58] sm:$0xff]
        %v266 = vld [vmem:[#allocation2 + $0x60] sm:$0xff]
        %v267 = vld [vmem:[#allocation2 + $0x68] sm:$0xff]
        %v268 = vld [vmem:[#allocation2 + $0x70] sm:$0xff]
        %v269 = vld [vmem:[#allocation2 + $0x78] sm:$0xff]
        %v270 = vlaneseq
        %v271 = vshrl.u32 %v270, 7
        %v272 = vadd.s32 %v271, 8
        %v273 = vadd.s32 %v271, 16
        %v274 = vadd.s32 %v271, 24
        %vm275 = vcmp.lt.s32.totalorder %v271, 0
        %v276 = vsub.s32 0, %v271
        %v277 = vsel %vm275, %v276, %v271
        %v278 = vshrl.u32 %v277, 4
        %v279 = vand.u32 %v277, 15
        %v280 = vsub.s32 0, %v279
        %v281 = vsel %vm275, %v280, %v279
        %vm282 = vcmp.lt.s32.totalorder %v272, 0
        %v283 = vsub.s32 0, %v272
        %v284 = vsel %vm282, %v283, %v272
        %v285 = vshrl.u32 %v284, 4
        %v286 = vand.u32 %v284, 15
        %v287 = vsub.s32 0, %v286
        %v288 = vsel %vm282, %v287, %v286
        %vm289 = vcmp.lt.s32.totalorder %v273, 0
        %v290 = vsub.s32 0, %v273
        %v291 = vsel %vm289, %v290, %v273
        %v292 = vshrl.u32 %v291, 4
        %v293 = vand.u32 %v291, 15
        %v294 = vsub.s32 0, %v293
        %v295 = vsel %vm289, %v294, %v293
        %vm296 = vcmp.lt.s32.totalorder %v274, 0
        %v297 = vsub.s32 0, %v274
        %v298 = vsel %vm296, %v297, %v274
        %v299 = vshrl.u32 %v298, 4
        %v300 = vand.u32 %v298, 15
        %v301 = vsub.s32 0, %v300
        %v302 = vsel %vm296, %v301, %v300
        %vm303 = vcmp.ne.s32.totalorder %v281, 0
        %vm304 = vcmp.ne.s32.totalorder %v288, 0
        %vm305 = vcmp.ne.s32.totalorder %v295, 0
        %vm306 = vcmp.ne.s32.totalorder %v302, 0
        %vm307 = vcmp.lt.s32.totalorder %v281, 0
        %vm308 = vcmp.lt.s32.totalorder %v288, 0
        %vm309 = vcmp.lt.s32.totalorder %v295, 0
        %vm310 = vcmp.lt.s32.totalorder %v302, 0
        %vm311 = vmand %vm307, %vm303
        %vm312 = vmand %vm308, %vm304
        %vm313 = vmand %vm309, %vm305
        %vm314 = vmand %vm310, %vm306
        %v315 = vadd.s32 %v281, 16
        %v316 = vadd.s32 %v288, 16
        %v317 = vadd.s32 %v295, 16
        %v318 = vadd.s32 %v302, 16
        %v319 = vsel %vm311, %v315, %v281
        %v320 = vsel %vm312, %v316, %v288
        %v321 = vsel %vm313, %v317, %v295
        %v322 = vsel %vm314, %v318, %v302
        %vm323 = vcmp.ne.s32.totalorder %v319, 0
        %vm324 = vcmp.ne.s32.totalorder %v320, 0
        %vm325 = vcmp.ne.s32.totalorder %v321, 0
        %vm326 = vcmp.ne.s32.totalorder %v322, 0
        %v327 = vsel %vm323, 1, 0
        %v328 = vsel %vm324, 1, 0
        %v329 = vsel %vm325, 1, 0
        %v330 = vsel %vm326, 1, 0
        %v331 = vcvt.s32.f32 %v327
        %v332 = vcvt.s32.f32 %v328
        %v333 = vcvt.s32.f32 %v329
        %v334 = vcvt.s32.f32 %v330
        %vm335 = vcmp.ne.s32.totalorder %v319, 15
        %vm336 = vcmp.ne.s32.totalorder %v320, 15
        %vm337 = vcmp.ne.s32.totalorder %v321, 15
        %vm338 = vcmp.ne.s32.totalorder %v322, 15
        %v339 = vsel %vm335, 1, 0
        %v340 = vsel %vm336, 1, 0
        %v341 = vsel %vm337, 1, 0
        %v342 = vsel %vm338, 1, 0
        %v343 = vcvt.s32.f32 %v339
        %v344 = vcvt.s32.f32 %v340
        %v345 = vcvt.s32.f32 %v341
        %v346 = vcvt.s32.f32 %v342
        %v347 = vrot.slane %v254, 7
        %v348 = vrot.slane %v255, 7
        %v349 = vrot.slane %v256, 7
        %v350 = vrot.slane %v257, 7
        %v351 = vrot.slane %v258, 7
        %v352 = vrot.slane %v259, 7
        %v353 = vrot.slane %v260, 7
        %v354 = vrot.slane %v261, 7
        %v355 = vrot.slane %v262, 7
        %v356 = vrot.slane %v263, 7
        %v357 = vrot.slane %v264, 7
        %v358 = vrot.slane %v265, 7
        %v359 = vrot.slane %v266, 7
        %v360 = vrot.slane %v267, 7
        %v361 = vrot.slane %v268, 7
        %v362 = vrot.slane %v269, 7
        %vm363 = vcmp.lt.s32.totalorder %v271, 1
        %v364 = vsel %vm363, %v355, %v359
        %v365 = vsel %vm363, %v356, %v360
        %v366 = vsel %vm363, %v357, %v361
        %v367 = vsel %vm363, %v358, %v362
        %v368 = vsel %vm363, %v351, %v355
        %v369 = vsel %vm363, %v352, %v356
        %v370 = vsel %vm363, %v353, %v357
        %v371 = vsel %vm363, %v354, %v358
        %v372 = vsel %vm363, %v347, %v351
        %v373 = vsel %vm363, %v348, %v352
        %v374 = vsel %vm363, %v349, %v353
        %v375 = vsel %vm363, %v350, %v354
        %v376 = vsel %vm363, %v359, %v347
        %v377 = vsel %vm363, %v360, %v348
        %v378 = vsel %vm363, %v361, %v349
        %v379 = vsel %vm363, %v362, %v350
        %v380 = vmul.f32 %v376, %v331
        %v381 = vmul.f32 %v377, %v331
        %v382 = vmul.f32 %v378, %v331
        %v383 = vmul.f32 %v379, %v331
        %v384 = vmul.f32 %v372, %v332
        %v385 = vmul.f32 %v373, %v332
        %v386 = vmul.f32 %v374, %v332
        %v387 = vmul.f32 %v375, %v332
        %v388 = vmul.f32 %v368, %v333
        %v389 = vmul.f32 %v369, %v333
        %v390 = vmul.f32 %v370, %v333
        %v391 = vmul.f32 %v371, %v333
        %v392 = vmul.f32 %v364, %v334
        %v393 = vmul.f32 %v365, %v334
        %v394 = vmul.f32 %v366, %v334
        %v395 = vmul.f32 %v367, %v334
        %v396 = vrot.slane %v254, 1
        %v397 = vrot.slane %v255, 1
        %v398 = vrot.slane %v256, 1
        %v399 = vrot.slane %v257, 1
        %v400 = vrot.slane %v258, 1
        %v401 = vrot.slane %v259, 1
        %v402 = vrot.slane %v260, 1
        %v403 = vrot.slane %v261, 1
        %v404 = vrot.slane %v262, 1
        %v405 = vrot.slane %v263, 1
        %v406 = vrot.slane %v264, 1
        %v407 = vrot.slane %v265, 1
        %v408 = vrot.slane %v266, 1
        %v409 = vrot.slane %v267, 1
        %v410 = vrot.slane %v268, 1
        %v411 = vrot.slane %v269, 1
        %vm412 = vcmp.lt.s32.totalorder %v271, 7
        %v413 = vsel %vm412, %v404, %v408
        %v414 = vsel %vm412, %v405, %v409
        %v415 = vsel %vm412, %v406, %v410
        %v416 = vsel %vm412, %v407, %v411
        %v417 = vsel %vm412, %v400, %v404
        %v418 = vsel %vm412, %v401, %v405
        %v419 = vsel %vm412, %v402, %v406
        %v420 = vsel %vm412, %v403, %v407
        %v421 = vsel %vm412, %v396, %v400
        %v422 = vsel %vm412, %v397, %v401
        %v423 = vsel %vm412, %v398, %v402
        %v424 = vsel %vm412, %v399, %v403
        %v425 = vsel %vm412, %v408, %v396
        %v426 = vsel %vm412, %v409, %v397
        %v427 = vsel %vm412, %v410, %v398
        %v428 = vsel %vm412, %v411, %v399
        %v429 = vmul.f32 %v421, %v343
        %v430 = vmul.f32 %v422, %v343
        %v431 = vmul.f32 %v423, %v343
        %v432 = vmul.f32 %v424, %v343
        %v433 = vmul.f32 %v417, %v344
        %v434 = vmul.f32 %v418, %v344
        %v435 = vmul.f32 %v419, %v344
        %v436 = vmul.f32 %v420, %v344
        %v437 = vmul.f32 %v413, %v345
        %v438 = vmul.f32 %v414, %v345
        %v439 = vmul.f32 %v415, %v345
        %v440 = vmul.f32 %v416, %v345
        %v441 = vmul.f32 %v425, %v346
        %v442 = vmul.f32 %v426, %v346
        %v443 = vmul.f32 %v427, %v346
        %v444 = vmul.f32 %v428, %v346
        %v445 = vpack.c.bf16 %v381, %v380
        %v446 = vpack.c.bf16 %v383, %v382
        %v447 = vpack.c.bf16 %v385, %v384
        %v448 = vpack.c.bf16 %v387, %v386
        %v449 = vpack.c.bf16 %v389, %v388
        %v450 = vpack.c.bf16 %v391, %v390
        %v451 = vpack.c.bf16 %v393, %v392
        %v452 = vpack.c.bf16 %v395, %v394
        %v453 = vpack.c.bf16 %v255, %v254
        %v454 = vpack.c.bf16 %v257, %v256
        %v455 = vpack.c.bf16 %v259, %v258
        %v456 = vpack.c.bf16 %v261, %v260
        %v457 = vpack.c.bf16 %v263, %v262
        %v458 = vpack.c.bf16 %v265, %v264
        %v459 = vpack.c.bf16 %v267, %v266
        %v460 = vpack.c.bf16 %v269, %v268
        %v461 = vpack.c.bf16 %v430, %v429
        %v462 = vpack.c.bf16 %v432, %v431
        %v463 = vpack.c.bf16 %v434, %v433
        %v464 = vpack.c.bf16 %v436, %v435
        %v465 = vpack.c.bf16 %v438, %v437
        %v466 = vpack.c.bf16 %v440, %v439
        %v467 = vpack.c.bf16 %v442, %v441
        %v468 = vpack.c.bf16 %v444, %v443
        %v477 = vunpack.c.l.b16 %v445
        %v478 = vunpack.c.h.b16 %v445
        %v479 = vunpack.c.l.b16 %v446
        %v480 = vunpack.c.h.b16 %v446
        %v481 = vunpack.c.l.b16 %v447
        %v482 = vunpack.c.h.b16 %v447
        %v483 = vunpack.c.l.b16 %v448
        %v484 = vunpack.c.h.b16 %v448
        %v485 = vunpack.c.l.b16 %v449
        %v486 = vunpack.c.h.b16 %v449
        %v487 = vunpack.c.l.b16 %v450
        %v488 = vunpack.c.h.b16 %v450
        %v489 = vunpack.c.l.b16 %v451
        %v490 = vunpack.c.h.b16 %v451
        %v491 = vunpack.c.l.b16 %v452
        %v492 = vunpack.c.h.b16 %v452
        %v493 = vpack.c.b16 %v481, %v477
        %v494 = vpack.c.b16 %v482, %v478
        %v495 = vpack.c.b16 %v483, %v479
        %v496 = vpack.c.b16 %v484, %v480
        %v497 = vpack.c.b16 %v489, %v485
        %v498 = vpack.c.b16 %v490, %v486
        %v499 = vpack.c.b16 %v491, %v487
        %v500 = vpack.c.b16 %v492, %v488
        %v517 = vunpack.c.l.b16 %v453
        %v518 = vunpack.c.h.b16 %v453
        %v519 = vunpack.c.l.b16 %v454
        %v520 = vunpack.c.h.b16 %v454
        %v521 = vunpack.c.l.b16 %v455
        %v522 = vunpack.c.h.b16 %v455
        %v523 = vunpack.c.l.b16 %v456
        %v524 = vunpack.c.h.b16 %v456
        %v525 = vunpack.c.l.b16 %v457
        %v526 = vunpack.c.h.b16 %v457
        %v527 = vunpack.c.l.b16 %v458
        %v528 = vunpack.c.h.b16 %v458
        %v529 = vunpack.c.l.b16 %v459
        %v530 = vunpack.c.h.b16 %v459
        %v531 = vunpack.c.l.b16 %v460
        %v532 = vunpack.c.h.b16 %v460
        %v533 = vpack.c.b16 %v521, %v517
        %v534 = vpack.c.b16 %v522, %v518
        %v535 = vpack.c.b16 %v523, %v519
        %v536 = vpack.c.b16 %v524, %v520
        %v537 = vpack.c.b16 %v529, %v525
        %v538 = vpack.c.b16 %v530, %v526
        %v539 = vpack.c.b16 %v531, %v527
        %v540 = vpack.c.b16 %v532, %v528
        %v557 = vunpack.c.l.b16 %v461
        %v558 = vunpack.c.h.b16 %v461
        %v559 = vunpack.c.l.b16 %v462
        %v560 = vunpack.c.h.b16 %v462
        %v561 = vunpack.c.l.b16 %v463
        %v562 = vunpack.c.h.b16 %v463
        %v563 = vunpack.c.l.b16 %v464
        %v564 = vunpack.c.h.b16 %v464
        %v565 = vunpack.c.l.b16 %v465
        %v566 = vunpack.c.h.b16 %v465
        %v567 = vunpack.c.l.b16 %v466
        %v568 = vunpack.c.h.b16 %v466
        %v569 = vunpack.c.l.b16 %v467
        %v570 = vunpack.c.h.b16 %v467
        %v571 = vunpack.c.l.b16 %v468
        %v572 = vunpack.c.h.b16 %v468
        %v573 = vpack.c.b16 %v561, %v557
        %v574 = vpack.c.b16 %v562, %v558
        %v575 = vpack.c.b16 %v563, %v559
        %v576 = vpack.c.b16 %v564, %v560
        %v577 = vpack.c.b16 %v569, %v565
        %v578 = vpack.c.b16 %v570, %v566
        %v579 = vpack.c.b16 %v571, %v567
        %v580 = vpack.c.b16 %v572, %v568
        %v589 = vld [vmem:[%s184] sm:$0xff]
        %v590 = vld [vmem:[%s184 + $0x8] sm:$0xff]
        %v591 = vld [vmem:[%s184 + $0x10] sm:$0xff]
        %v592 = vld [vmem:[%s184 + $0x18] sm:$0xff]
        %v593 = vld [vmem:[%s184 + $0x20] sm:$0xff]
        %v594 = vld [vmem:[%s184 + $0x28] sm:$0xff]
        %v595 = vld [vmem:[%s184 + $0x30] sm:$0xff]
        %v596 = vld [vmem:[%s184 + $0x38] sm:$0xff]
        %v597 = vld [vmem:[%s184 + $0x40] sm:$0xff]
        %v598 = vld [vmem:[%s184 + $0x48] sm:$0xff]
        %v599 = vld [vmem:[%s184 + $0x50] sm:$0xff]
        %v600 = vld [vmem:[%s184 + $0x58] sm:$0xff]
        %v601 = vld [vmem:[%s184 + $0x60] sm:$0xff]
        %v602 = vld [vmem:[%s184 + $0x68] sm:$0xff]
        %v603 = vld [vmem:[%s184 + $0x70] sm:$0xff]
        %v604 = vld [vmem:[%s184 + $0x78] sm:$0xff]
        %v605 = vld [vmem:[%s184 + $0x80] sm:$0xff]
        %v606 = vld [vmem:[%s184 + $0x88] sm:$0xff]
        %v607 = vld [vmem:[%s184 + $0x90] sm:$0xff]
        %v608 = vld [vmem:[%s184 + $0x98] sm:$0xff]
        %v609 = vld [vmem:[%s184 + $0xa0] sm:$0xff]
        %v610 = vld [vmem:[%s184 + $0xa8] sm:$0xff]
        %v611 = vld [vmem:[%s184 + $0xb0] sm:$0xff]
        %v612 = vld [vmem:[%s184 + $0xb8] sm:$0xff]
        %v613 = vld [vmem:[%s184 + $0xc0] sm:$0xff]
        %v614 = vld [vmem:[%s184 + $0xc8] sm:$0xff]
        %v615 = vld [vmem:[%s184 + $0xd0] sm:$0xff]
        %v616 = vld [vmem:[%s184 + $0xd8] sm:$0xff]
        %v617 = vld [vmem:[%s184 + $0xe0] sm:$0xff]
        %v618 = vld [vmem:[%s184 + $0xe8] sm:$0xff]
        %v619 = vld [vmem:[%s184 + $0xf0] sm:$0xff]
        %v620 = vld [vmem:[%s184 + $0xf8] sm:$0xff]
        %v621 = vld [vmem:[%s184 + $0x100] sm:$0xff]
        %v622 = vld [vmem:[%s184 + $0x108] sm:$0xff]
        %v623 = vld [vmem:[%s184 + $0x110] sm:$0xff]
        %v624 = vld [vmem:[%s184 + $0x118] sm:$0xff]
        %v625 = vld [vmem:[%s184 + $0x120] sm:$0xff]
        %v626 = vld [vmem:[%s184 + $0x128] sm:$0xff]
        %v627 = vld [vmem:[%s184 + $0x130] sm:$0xff]
        %v628 = vld [vmem:[%s184 + $0x138] sm:$0xff]
        %v629 = vld [vmem:[%s184 + $0x140] sm:$0xff]
        %v630 = vld [vmem:[%s184 + $0x148] sm:$0xff]
        %v631 = vld [vmem:[%s184 + $0x150] sm:$0xff]
        %v632 = vld [vmem:[%s184 + $0x158] sm:$0xff]
        %v633 = vld [vmem:[%s184 + $0x160] sm:$0xff]
        %v634 = vld [vmem:[%s184 + $0x168] sm:$0xff]
        %v635 = vld [vmem:[%s184 + $0x170] sm:$0xff]
        %v636 = vld [vmem:[%s184 + $0x178] sm:$0xff]
        %v637 = vld [vmem:[%s184 + $0x180] sm:$0xff]
        %v638 = vld [vmem:[%s184 + $0x188] sm:$0xff]
        %v639 = vld [vmem:[%s184 + $0x190] sm:$0xff]
        %v640 = vld [vmem:[%s184 + $0x198] sm:$0xff]
        %v641 = vld [vmem:[%s184 + $0x1a0] sm:$0xff]
        %v642 = vld [vmem:[%s184 + $0x1a8] sm:$0xff]
        %v643 = vld [vmem:[%s184 + $0x1b0] sm:$0xff]
        %v644 = vld [vmem:[%s184 + $0x1b8] sm:$0xff]
        %v645 = vld [vmem:[%s184 + $0x1c0] sm:$0xff]
        %v646 = vld [vmem:[%s184 + $0x1c8] sm:$0xff]
        %v647 = vld [vmem:[%s184 + $0x1d0] sm:$0xff]
        %v648 = vld [vmem:[%s184 + $0x1d8] sm:$0xff]
        %v649 = vld [vmem:[%s184 + $0x1e0] sm:$0xff]
        %v650 = vld [vmem:[%s184 + $0x1e8] sm:$0xff]
        %v651 = vld [vmem:[%s184 + $0x1f0] sm:$0xff]
        %v652 = vld [vmem:[%s184 + $0x1f8] sm:$0xff]
        %v653 = vld [vmem:[%s184 + $0x200] sm:$0xff]
        %v654 = vld [vmem:[%s184 + $0x208] sm:$0xff]
        %v655 = vld [vmem:[%s184 + $0x210] sm:$0xff]
        %v656 = vld [vmem:[%s184 + $0x218] sm:$0xff]
        %v657 = vld [vmem:[%s184 + $0x220] sm:$0xff]
        %v658 = vld [vmem:[%s184 + $0x228] sm:$0xff]
        %v659 = vld [vmem:[%s184 + $0x230] sm:$0xff]
        %v660 = vld [vmem:[%s184 + $0x238] sm:$0xff]
        %v661 = vld [vmem:[%s184 + $0x240] sm:$0xff]
        %v662 = vld [vmem:[%s184 + $0x248] sm:$0xff]
        %v663 = vld [vmem:[%s184 + $0x250] sm:$0xff]
        %v664 = vld [vmem:[%s184 + $0x258] sm:$0xff]
        %v665 = vld [vmem:[%s184 + $0x260] sm:$0xff]
        %v666 = vld [vmem:[%s184 + $0x268] sm:$0xff]
        %v667 = vld [vmem:[%s184 + $0x270] sm:$0xff]
        %v668 = vld [vmem:[%s184 + $0x278] sm:$0xff]
        %v669 = vld [vmem:[%s184 + $0x280] sm:$0xff]
        %v670 = vld [vmem:[%s184 + $0x288] sm:$0xff]
        %v671 = vld [vmem:[%s184 + $0x290] sm:$0xff]
        %v672 = vld [vmem:[%s184 + $0x298] sm:$0xff]
        %v673 = vld [vmem:[%s184 + $0x2a0] sm:$0xff]
        %v674 = vld [vmem:[%s184 + $0x2a8] sm:$0xff]
        %v675 = vld [vmem:[%s184 + $0x2b0] sm:$0xff]
        %v676 = vld [vmem:[%s184 + $0x2b8] sm:$0xff]
        %v677 = vld [vmem:[%s184 + $0x2c0] sm:$0xff]
        %v678 = vld [vmem:[%s184 + $0x2c8] sm:$0xff]
        %v679 = vld [vmem:[%s184 + $0x2d0] sm:$0xff]
        %v680 = vld [vmem:[%s184 + $0x2d8] sm:$0xff]
        %v681 = vld [vmem:[%s184 + $0x2e0] sm:$0xff]
        %v682 = vld [vmem:[%s184 + $0x2e8] sm:$0xff]
        %v683 = vld [vmem:[%s184 + $0x2f0] sm:$0xff]
        %v684 = vld [vmem:[%s184 + $0x2f8] sm:$0xff]
        %v685 = vld [vmem:[%s184 + $0x300] sm:$0xff]
        %v686 = vld [vmem:[%s184 + $0x308] sm:$0xff]
        %v687 = vld [vmem:[%s184 + $0x310] sm:$0xff]
        %v688 = vld [vmem:[%s184 + $0x318] sm:$0xff]
        %v689 = vld [vmem:[%s184 + $0x320] sm:$0xff]
        %v690 = vld [vmem:[%s184 + $0x328] sm:$0xff]
        %v691 = vld [vmem:[%s184 + $0x330] sm:$0xff]
        %v692 = vld [vmem:[%s184 + $0x338] sm:$0xff]
        %v693 = vld [vmem:[%s184 + $0x340] sm:$0xff]
        %v694 = vld [vmem:[%s184 + $0x348] sm:$0xff]
        %v695 = vld [vmem:[%s184 + $0x350] sm:$0xff]
        %v696 = vld [vmem:[%s184 + $0x358] sm:$0xff]
        %v697 = vld [vmem:[%s184 + $0x360] sm:$0xff]
        %v698 = vld [vmem:[%s184 + $0x368] sm:$0xff]
        %v699 = vld [vmem:[%s184 + $0x370] sm:$0xff]
        %v700 = vld [vmem:[%s184 + $0x378] sm:$0xff]
        %v701 = vld [vmem:[%s184 + $0x380] sm:$0xff]
        %v702 = vld [vmem:[%s184 + $0x388] sm:$0xff]
        %v703 = vld [vmem:[%s184 + $0x390] sm:$0xff]
        %v704 = vld [vmem:[%s184 + $0x398] sm:$0xff]
        %v705 = vld [vmem:[%s184 + $0x3a0] sm:$0xff]
        %v706 = vld [vmem:[%s184 + $0x3a8] sm:$0xff]
        %v707 = vld [vmem:[%s184 + $0x3b0] sm:$0xff]
        %v708 = vld [vmem:[%s184 + $0x3b8] sm:$0xff]
        %v709 = vld [vmem:[%s184 + $0x3c0] sm:$0xff]
        %v710 = vld [vmem:[%s184 + $0x3c8] sm:$0xff]
        %v711 = vld [vmem:[%s184 + $0x3d0] sm:$0xff]
        %v712 = vld [vmem:[%s184 + $0x3d8] sm:$0xff]
        %v713 = vld [vmem:[%s184 + $0x3e0] sm:$0xff]
        %v714 = vld [vmem:[%s184 + $0x3e8] sm:$0xff]
        %v715 = vld [vmem:[%s184 + $0x3f0] sm:$0xff]
        %v716 = vld [vmem:[%s184 + $0x3f8] sm:$0xff]
        %v717 = vld [vmem:[%s184 + $0x400] sm:$0xff]
        %v718 = vld [vmem:[%s184 + $0x408] sm:$0xff]
        %v719 = vld [vmem:[%s184 + $0x410] sm:$0xff]
        %v720 = vld [vmem:[%s184 + $0x418] sm:$0xff]
        %v721 = vld [vmem:[%s184 + $0x420] sm:$0xff]
        %v722 = vld [vmem:[%s184 + $0x428] sm:$0xff]
        %v723 = vld [vmem:[%s184 + $0x430] sm:$0xff]
        %v724 = vld [vmem:[%s184 + $0x438] sm:$0xff]
        %v725 = vld [vmem:[%s184 + $0x440] sm:$0xff]
        %v726 = vld [vmem:[%s184 + $0x448] sm:$0xff]
        %v727 = vld [vmem:[%s184 + $0x450] sm:$0xff]
        %v728 = vld [vmem:[%s184 + $0x458] sm:$0xff]
        %v729 = vld [vmem:[%s184 + $0x460] sm:$0xff]
        %v730 = vld [vmem:[%s184 + $0x468] sm:$0xff]
        %v731 = vld [vmem:[%s184 + $0x470] sm:$0xff]
        %v732 = vld [vmem:[%s184 + $0x478] sm:$0xff]
        %v733 = vld [vmem:[%s184 + $0x480] sm:$0xff]
        %v734 = vld [vmem:[%s184 + $0x488] sm:$0xff]
        %v735 = vld [vmem:[%s184 + $0x490] sm:$0xff]
        %v736 = vld [vmem:[%s184 + $0x498] sm:$0xff]
        %v737 = vld [vmem:[%s184 + $0x4a0] sm:$0xff]
        %v738 = vld [vmem:[%s184 + $0x4a8] sm:$0xff]
        %v739 = vld [vmem:[%s184 + $0x4b0] sm:$0xff]
        %v740 = vld [vmem:[%s184 + $0x4b8] sm:$0xff]
        %v741 = vld [vmem:[%s184 + $0x4c0] sm:$0xff]
        %v742 = vld [vmem:[%s184 + $0x4c8] sm:$0xff]
        %v743 = vld [vmem:[%s184 + $0x4d0] sm:$0xff]
        %v744 = vld [vmem:[%s184 + $0x4d8] sm:$0xff]
        %v745 = vld [vmem:[%s184 + $0x4e0] sm:$0xff]
        %v746 = vld [vmem:[%s184 + $0x4e8] sm:$0xff]
        %v747 = vld [vmem:[%s184 + $0x4f0] sm:$0xff]
        %v748 = vld [vmem:[%s184 + $0x4f8] sm:$0xff]
        %v749 = vld [vmem:[%s184 + $0x500] sm:$0xff]
        %v750 = vld [vmem:[%s184 + $0x508] sm:$0xff]
        %v751 = vld [vmem:[%s184 + $0x510] sm:$0xff]
        %v752 = vld [vmem:[%s184 + $0x518] sm:$0xff]
        %v753 = vld [vmem:[%s184 + $0x520] sm:$0xff]
        %v754 = vld [vmem:[%s184 + $0x528] sm:$0xff]
        %v755 = vld [vmem:[%s184 + $0x530] sm:$0xff]
        %v756 = vld [vmem:[%s184 + $0x538] sm:$0xff]
        %v757 = vld [vmem:[%s184 + $0x540] sm:$0xff]
        %v758 = vld [vmem:[%s184 + $0x548] sm:$0xff]
        %v759 = vld [vmem:[%s184 + $0x550] sm:$0xff]
        %v760 = vld [vmem:[%s184 + $0x558] sm:$0xff]
        %v761 = vld [vmem:[%s184 + $0x560] sm:$0xff]
        %v762 = vld [vmem:[%s184 + $0x568] sm:$0xff]
        %v763 = vld [vmem:[%s184 + $0x570] sm:$0xff]
        %v764 = vld [vmem:[%s184 + $0x578] sm:$0xff]
        %v765 = vld [vmem:[%s184 + $0x580] sm:$0xff]
        %v766 = vld [vmem:[%s184 + $0x588] sm:$0xff]
        %v767 = vld [vmem:[%s184 + $0x590] sm:$0xff]
        %v768 = vld [vmem:[%s184 + $0x598] sm:$0xff]
        %v769 = vld [vmem:[%s184 + $0x5a0] sm:$0xff]
        %v770 = vld [vmem:[%s184 + $0x5a8] sm:$0xff]
        %v771 = vld [vmem:[%s184 + $0x5b0] sm:$0xff]
        %v772 = vld [vmem:[%s184 + $0x5b8] sm:$0xff]
        %v773 = vld [vmem:[%s184 + $0x5c0] sm:$0xff]
        %v774 = vld [vmem:[%s184 + $0x5c8] sm:$0xff]
        %v775 = vld [vmem:[%s184 + $0x5d0] sm:$0xff]
        %v776 = vld [vmem:[%s184 + $0x5d8] sm:$0xff]
        %v777 = vld [vmem:[%s184 + $0x5e0] sm:$0xff]
        %v778 = vld [vmem:[%s184 + $0x5e8] sm:$0xff]
        %v779 = vld [vmem:[%s184 + $0x5f0] sm:$0xff]
        %v780 = vld [vmem:[%s184 + $0x5f8] sm:$0xff]
        %v781 = vld [vmem:[%s184 + $0x600] sm:$0xff]
        %v782 = vld [vmem:[%s184 + $0x608] sm:$0xff]
        %v783 = vld [vmem:[%s184 + $0x610] sm:$0xff]
        %v784 = vld [vmem:[%s184 + $0x618] sm:$0xff]
        %v785 = vld [vmem:[%s184 + $0x620] sm:$0xff]
        %v786 = vld [vmem:[%s184 + $0x628] sm:$0xff]
        %v787 = vld [vmem:[%s184 + $0x630] sm:$0xff]
        %v788 = vld [vmem:[%s184 + $0x638] sm:$0xff]
        %v789 = vld [vmem:[%s184 + $0x640] sm:$0xff]
        %v790 = vld [vmem:[%s184 + $0x648] sm:$0xff]
        %v791 = vld [vmem:[%s184 + $0x650] sm:$0xff]
        %v792 = vld [vmem:[%s184 + $0x658] sm:$0xff]
        %v793 = vld [vmem:[%s184 + $0x660] sm:$0xff]
        %v794 = vld [vmem:[%s184 + $0x668] sm:$0xff]
        %v795 = vld [vmem:[%s184 + $0x670] sm:$0xff]
        %v796 = vld [vmem:[%s184 + $0x678] sm:$0xff]
        %v797 = vld [vmem:[%s184 + $0x680] sm:$0xff]
        %v798 = vld [vmem:[%s184 + $0x688] sm:$0xff]
        %v799 = vld [vmem:[%s184 + $0x690] sm:$0xff]
        %v800 = vld [vmem:[%s184 + $0x698] sm:$0xff]
        %v801 = vld [vmem:[%s184 + $0x6a0] sm:$0xff]
        %v802 = vld [vmem:[%s184 + $0x6a8] sm:$0xff]
        %v803 = vld [vmem:[%s184 + $0x6b0] sm:$0xff]
        %v804 = vld [vmem:[%s184 + $0x6b8] sm:$0xff]
        %v805 = vld [vmem:[%s184 + $0x6c0] sm:$0xff]
        %v806 = vld [vmem:[%s184 + $0x6c8] sm:$0xff]
        %v807 = vld [vmem:[%s184 + $0x6d0] sm:$0xff]
        %v808 = vld [vmem:[%s184 + $0x6d8] sm:$0xff]
        %v809 = vld [vmem:[%s184 + $0x6e0] sm:$0xff]
        %v810 = vld [vmem:[%s184 + $0x6e8] sm:$0xff]
        %v811 = vld [vmem:[%s184 + $0x6f0] sm:$0xff]
        %v812 = vld [vmem:[%s184 + $0x6f8] sm:$0xff]
        %v813 = vld [vmem:[%s184 + $0x700] sm:$0xff]
        %v814 = vld [vmem:[%s184 + $0x708] sm:$0xff]
        %v815 = vld [vmem:[%s184 + $0x710] sm:$0xff]
        %v816 = vld [vmem:[%s184 + $0x718] sm:$0xff]
        %v817 = vld [vmem:[%s184 + $0x720] sm:$0xff]
        %v818 = vld [vmem:[%s184 + $0x728] sm:$0xff]
        %v819 = vld [vmem:[%s184 + $0x730] sm:$0xff]
        %v820 = vld [vmem:[%s184 + $0x738] sm:$0xff]
        %v821 = vld [vmem:[%s184 + $0x740] sm:$0xff]
        %v822 = vld [vmem:[%s184 + $0x748] sm:$0xff]
        %v823 = vld [vmem:[%s184 + $0x750] sm:$0xff]
        %v824 = vld [vmem:[%s184 + $0x758] sm:$0xff]
        %v825 = vld [vmem:[%s184 + $0x760] sm:$0xff]
        %v826 = vld [vmem:[%s184 + $0x768] sm:$0xff]
        %v827 = vld [vmem:[%s184 + $0x770] sm:$0xff]
        %v828 = vld [vmem:[%s184 + $0x778] sm:$0xff]
        %v829 = vld [vmem:[%s184 + $0x780] sm:$0xff]
        %v830 = vld [vmem:[%s184 + $0x788] sm:$0xff]
        %v831 = vld [vmem:[%s184 + $0x790] sm:$0xff]
        %v832 = vld [vmem:[%s184 + $0x798] sm:$0xff]
        %v833 = vld [vmem:[%s184 + $0x7a0] sm:$0xff]
        %v834 = vld [vmem:[%s184 + $0x7a8] sm:$0xff]
        %v835 = vld [vmem:[%s184 + $0x7b0] sm:$0xff]
        %v836 = vld [vmem:[%s184 + $0x7b8] sm:$0xff]
        %v837 = vld [vmem:[%s184 + $0x7c0] sm:$0xff]
        %v838 = vld [vmem:[%s184 + $0x7c8] sm:$0xff]
        %v839 = vld [vmem:[%s184 + $0x7d0] sm:$0xff]
        %v840 = vld [vmem:[%s184 + $0x7d8] sm:$0xff]
        %v841 = vld [vmem:[%s184 + $0x7e0] sm:$0xff]
        %v842 = vld [vmem:[%s184 + $0x7e8] sm:$0xff]
        %v843 = vld [vmem:[%s184 + $0x7f0] sm:$0xff]
        %v844 = vld [vmem:[%s184 + $0x7f8] sm:$0xff]
        %v845 = vld [vmem:[%s184 + $0x800] sm:$0xff]
        %v846 = vld [vmem:[%s184 + $0x808] sm:$0xff]
        %v847 = vld [vmem:[%s184 + $0x810] sm:$0xff]
        %v848 = vld [vmem:[%s184 + $0x818] sm:$0xff]
        %v849 = vld [vmem:[%s184 + $0x820] sm:$0xff]
        %v850 = vld [vmem:[%s184 + $0x828] sm:$0xff]
        %v851 = vld [vmem:[%s184 + $0x830] sm:$0xff]
        %v852 = vld [vmem:[%s184 + $0x838] sm:$0xff]
        %v853 = vld [vmem:[%s184 + $0x840] sm:$0xff]
        %v854 = vld [vmem:[%s184 + $0x848] sm:$0xff]
        %v855 = vld [vmem:[%s184 + $0x850] sm:$0xff]
        %v856 = vld [vmem:[%s184 + $0x858] sm:$0xff]
        %v857 = vld [vmem:[%s184 + $0x860] sm:$0xff]
        %v858 = vld [vmem:[%s184 + $0x868] sm:$0xff]
        %v859 = vld [vmem:[%s184 + $0x870] sm:$0xff]
        %v860 = vld [vmem:[%s184 + $0x878] sm:$0xff]
        %v861 = vld [vmem:[%s184 + $0x880] sm:$0xff]
        %v862 = vld [vmem:[%s184 + $0x888] sm:$0xff]
        %v863 = vld [vmem:[%s184 + $0x890] sm:$0xff]
        %v864 = vld [vmem:[%s184 + $0x898] sm:$0xff]
        %v865 = vld [vmem:[%s184 + $0x8a0] sm:$0xff]
        %v866 = vld [vmem:[%s184 + $0x8a8] sm:$0xff]
        %v867 = vld [vmem:[%s184 + $0x8b0] sm:$0xff]
        %v868 = vld [vmem:[%s184 + $0x8b8] sm:$0xff]
        %v869 = vld [vmem:[%s184 + $0x8c0] sm:$0xff]
        %v870 = vld [vmem:[%s184 + $0x8c8] sm:$0xff]
        %v871 = vld [vmem:[%s184 + $0x8d0] sm:$0xff]
        %v872 = vld [vmem:[%s184 + $0x8d8] sm:$0xff]
        %v873 = vld [vmem:[%s184 + $0x8e0] sm:$0xff]
        %v874 = vld [vmem:[%s184 + $0x8e8] sm:$0xff]
        %v875 = vld [vmem:[%s184 + $0x8f0] sm:$0xff]
        %v876 = vld [vmem:[%s184 + $0x8f8] sm:$0xff]
        %v877 = vld [vmem:[%s184 + $0x900] sm:$0xff]
        %v878 = vld [vmem:[%s184 + $0x908] sm:$0xff]
        %v879 = vld [vmem:[%s184 + $0x910] sm:$0xff]
        %v880 = vld [vmem:[%s184 + $0x918] sm:$0xff]
        %v881 = vld [vmem:[%s184 + $0x920] sm:$0xff]
        %v882 = vld [vmem:[%s184 + $0x928] sm:$0xff]
        %v883 = vld [vmem:[%s184 + $0x930] sm:$0xff]
        %v884 = vld [vmem:[%s184 + $0x938] sm:$0xff]
        %v885 = vld [vmem:[%s184 + $0x940] sm:$0xff]
        %v886 = vld [vmem:[%s184 + $0x948] sm:$0xff]
        %v887 = vld [vmem:[%s184 + $0x950] sm:$0xff]
        %v888 = vld [vmem:[%s184 + $0x958] sm:$0xff]
        %v889 = vld [vmem:[%s184 + $0x960] sm:$0xff]
        %v890 = vld [vmem:[%s184 + $0x968] sm:$0xff]
        %v891 = vld [vmem:[%s184 + $0x970] sm:$0xff]
        %v892 = vld [vmem:[%s184 + $0x978] sm:$0xff]
        %v893 = vld [vmem:[%s184 + $0x980] sm:$0xff]
        %v894 = vld [vmem:[%s184 + $0x988] sm:$0xff]
        %v895 = vld [vmem:[%s184 + $0x990] sm:$0xff]
        %v896 = vld [vmem:[%s184 + $0x998] sm:$0xff]
        %v897 = vld [vmem:[%s184 + $0x9a0] sm:$0xff]
        %v898 = vld [vmem:[%s184 + $0x9a8] sm:$0xff]
        %v899 = vld [vmem:[%s184 + $0x9b0] sm:$0xff]
        %v900 = vld [vmem:[%s184 + $0x9b8] sm:$0xff]
        %v901 = vld [vmem:[%s184 + $0x9c0] sm:$0xff]
        %v902 = vld [vmem:[%s184 + $0x9c8] sm:$0xff]
        %v903 = vld [vmem:[%s184 + $0x9d0] sm:$0xff]
        %v904 = vld [vmem:[%s184 + $0x9d8] sm:$0xff]
        %v905 = vld [vmem:[%s184 + $0x9e0] sm:$0xff]
        %v906 = vld [vmem:[%s184 + $0x9e8] sm:$0xff]
        %v907 = vld [vmem:[%s184 + $0x9f0] sm:$0xff]
        %v908 = vld [vmem:[%s184 + $0x9f8] sm:$0xff]
        %v909 = vld [vmem:[%s184 + $0xa00] sm:$0xff]
        %v910 = vld [vmem:[%s184 + $0xa08] sm:$0xff]
        %v911 = vld [vmem:[%s184 + $0xa10] sm:$0xff]
        %v912 = vld [vmem:[%s184 + $0xa18] sm:$0xff]
        %v913 = vld [vmem:[%s184 + $0xa20] sm:$0xff]
        %v914 = vld [vmem:[%s184 + $0xa28] sm:$0xff]
        %v915 = vld [vmem:[%s184 + $0xa30] sm:$0xff]
        %v916 = vld [vmem:[%s184 + $0xa38] sm:$0xff]
        %v917 = vld [vmem:[%s184 + $0xa40] sm:$0xff]
        %v918 = vld [vmem:[%s184 + $0xa48] sm:$0xff]
        %v919 = vld [vmem:[%s184 + $0xa50] sm:$0xff]
        %v920 = vld [vmem:[%s184 + $0xa58] sm:$0xff]
        %v921 = vld [vmem:[%s184 + $0xa60] sm:$0xff]
        %v922 = vld [vmem:[%s184 + $0xa68] sm:$0xff]
        %v923 = vld [vmem:[%s184 + $0xa70] sm:$0xff]
        %v924 = vld [vmem:[%s184 + $0xa78] sm:$0xff]
        %v925 = vld [vmem:[%s184 + $0xa80] sm:$0xff]
        %v926 = vld [vmem:[%s184 + $0xa88] sm:$0xff]
        %v927 = vld [vmem:[%s184 + $0xa90] sm:$0xff]
        %v928 = vld [vmem:[%s184 + $0xa98] sm:$0xff]
        %v929 = vld [vmem:[%s184 + $0xaa0] sm:$0xff]
        %v930 = vld [vmem:[%s184 + $0xaa8] sm:$0xff]
        %v931 = vld [vmem:[%s184 + $0xab0] sm:$0xff]
        %v932 = vld [vmem:[%s184 + $0xab8] sm:$0xff]
        %v933 = vld [vmem:[%s184 + $0xac0] sm:$0xff]
        %v934 = vld [vmem:[%s184 + $0xac8] sm:$0xff]
        %v935 = vld [vmem:[%s184 + $0xad0] sm:$0xff]
        %v936 = vld [vmem:[%s184 + $0xad8] sm:$0xff]
        %v937 = vld [vmem:[%s184 + $0xae0] sm:$0xff]
        %v938 = vld [vmem:[%s184 + $0xae8] sm:$0xff]
        %v939 = vld [vmem:[%s184 + $0xaf0] sm:$0xff]
        %v940 = vld [vmem:[%s184 + $0xaf8] sm:$0xff]
        %v941 = vld [vmem:[%s184 + $0xb00] sm:$0xff]
        %v942 = vld [vmem:[%s184 + $0xb08] sm:$0xff]
        %v943 = vld [vmem:[%s184 + $0xb10] sm:$0xff]
        %v944 = vld [vmem:[%s184 + $0xb18] sm:$0xff]
        %v945 = vld [vmem:[%s184 + $0xb20] sm:$0xff]
        %v946 = vld [vmem:[%s184 + $0xb28] sm:$0xff]
        %v947 = vld [vmem:[%s184 + $0xb30] sm:$0xff]
        %v948 = vld [vmem:[%s184 + $0xb38] sm:$0xff]
        %v949 = vld [vmem:[%s184 + $0xb40] sm:$0xff]
        %v950 = vld [vmem:[%s184 + $0xb48] sm:$0xff]
        %v951 = vld [vmem:[%s184 + $0xb50] sm:$0xff]
        %v952 = vld [vmem:[%s184 + $0xb58] sm:$0xff]
        %v953 = vld [vmem:[%s184 + $0xb60] sm:$0xff]
        %v954 = vld [vmem:[%s184 + $0xb68] sm:$0xff]
        %v955 = vld [vmem:[%s184 + $0xb70] sm:$0xff]
        %v956 = vld [vmem:[%s184 + $0xb78] sm:$0xff]
        %v957 = vld [vmem:[%s184 + $0xb80] sm:$0xff]
        %v958 = vld [vmem:[%s184 + $0xb88] sm:$0xff]
        %v959 = vld [vmem:[%s184 + $0xb90] sm:$0xff]
        %v960 = vld [vmem:[%s184 + $0xb98] sm:$0xff]
        %v961 = vld [vmem:[%s184 + $0xba0] sm:$0xff]
        %v962 = vld [vmem:[%s184 + $0xba8] sm:$0xff]
        %v963 = vld [vmem:[%s184 + $0xbb0] sm:$0xff]
        %v964 = vld [vmem:[%s184 + $0xbb8] sm:$0xff]
        %v965 = vld [vmem:[%s184 + $0xbc0] sm:$0xff]
        %v966 = vld [vmem:[%s184 + $0xbc8] sm:$0xff]
        %v967 = vld [vmem:[%s184 + $0xbd0] sm:$0xff]
        %v968 = vld [vmem:[%s184 + $0xbd8] sm:$0xff]
        %v969 = vld [vmem:[%s184 + $0xbe0] sm:$0xff]
        %v970 = vld [vmem:[%s184 + $0xbe8] sm:$0xff]
        %v971 = vld [vmem:[%s184 + $0xbf0] sm:$0xff]
        %v972 = vld [vmem:[%s184 + $0xbf8] sm:$0xff]
        %v1357 = vunpack.c.l.b16 %v589
        %v1358 = vunpack.c.h.b16 %v589
        %v1359 = vunpack.c.l.b16 %v590
        %v1360 = vunpack.c.h.b16 %v590
        %v1361 = vunpack.c.l.b16 %v591
        %v1362 = vunpack.c.h.b16 %v591
        %v1363 = vunpack.c.l.b16 %v592
        %v1364 = vunpack.c.h.b16 %v592
        %v1365 = vunpack.c.l.b16 %v593
        %v1366 = vunpack.c.h.b16 %v593
        %v1367 = vunpack.c.l.b16 %v594
        %v1368 = vunpack.c.h.b16 %v594
        %v1369 = vunpack.c.l.b16 %v595
        %v1370 = vunpack.c.h.b16 %v595
        %v1371 = vunpack.c.l.b16 %v596
        %v1372 = vunpack.c.h.b16 %v596
        %v1373 = vunpack.c.l.b16 %v597
        %v1374 = vunpack.c.h.b16 %v597
        %v1375 = vunpack.c.l.b16 %v598
        %v1376 = vunpack.c.h.b16 %v598
        %v1377 = vunpack.c.l.b16 %v599
        %v1378 = vunpack.c.h.b16 %v599
        %v1379 = vunpack.c.l.b16 %v600
        %v1380 = vunpack.c.h.b16 %v600
        %v1381 = vunpack.c.l.b16 %v601
        %v1382 = vunpack.c.h.b16 %v601
        %v1383 = vunpack.c.l.b16 %v602
        %v1384 = vunpack.c.h.b16 %v602
        %v1385 = vunpack.c.l.b16 %v603
        %v1386 = vunpack.c.h.b16 %v603
        %v1387 = vunpack.c.l.b16 %v604
        %v1388 = vunpack.c.h.b16 %v604
        %v1389 = vunpack.c.l.b16 %v605
        %v1390 = vunpack.c.h.b16 %v605
        %v1391 = vunpack.c.l.b16 %v606
        %v1392 = vunpack.c.h.b16 %v606
        %v1393 = vunpack.c.l.b16 %v607
        %v1394 = vunpack.c.h.b16 %v607
        %v1395 = vunpack.c.l.b16 %v608
        %v1396 = vunpack.c.h.b16 %v608
        %v1397 = vunpack.c.l.b16 %v609
        %v1398 = vunpack.c.h.b16 %v609
        %v1399 = vunpack.c.l.b16 %v610
        %v1400 = vunpack.c.h.b16 %v610
        %v1401 = vunpack.c.l.b16 %v611
        %v1402 = vunpack.c.h.b16 %v611
        %v1403 = vunpack.c.l.b16 %v612
        %v1404 = vunpack.c.h.b16 %v612
        %v1405 = vunpack.c.l.b16 %v613
        %v1406 = vunpack.c.h.b16 %v613
        %v1407 = vunpack.c.l.b16 %v614
        %v1408 = vunpack.c.h.b16 %v614
        %v1409 = vunpack.c.l.b16 %v615
        %v1410 = vunpack.c.h.b16 %v615
        %v1411 = vunpack.c.l.b16 %v616
        %v1412 = vunpack.c.h.b16 %v616
        %v1413 = vunpack.c.l.b16 %v617
        %v1414 = vunpack.c.h.b16 %v617
        %v1415 = vunpack.c.l.b16 %v618
        %v1416 = vunpack.c.h.b16 %v618
        %v1417 = vunpack.c.l.b16 %v619
        %v1418 = vunpack.c.h.b16 %v619
        %v1419 = vunpack.c.l.b16 %v620
        %v1420 = vunpack.c.h.b16 %v620
        %v1421 = vunpack.c.l.b16 %v621
        %v1422 = vunpack.c.h.b16 %v621
        %v1423 = vunpack.c.l.b16 %v622
        %v1424 = vunpack.c.h.b16 %v622
        %v1425 = vunpack.c.l.b16 %v623
        %v1426 = vunpack.c.h.b16 %v623
        %v1427 = vunpack.c.l.b16 %v624
        %v1428 = vunpack.c.h.b16 %v624
        %v1429 = vunpack.c.l.b16 %v625
        %v1430 = vunpack.c.h.b16 %v625
        %v1431 = vunpack.c.l.b16 %v626
        %v1432 = vunpack.c.h.b16 %v626
        %v1433 = vunpack.c.l.b16 %v627
        %v1434 = vunpack.c.h.b16 %v627
        %v1435 = vunpack.c.l.b16 %v628
        %v1436 = vunpack.c.h.b16 %v628
        %v1437 = vunpack.c.l.b16 %v629
        %v1438 = vunpack.c.h.b16 %v629
        %v1439 = vunpack.c.l.b16 %v630
        %v1440 = vunpack.c.h.b16 %v630
        %v1441 = vunpack.c.l.b16 %v631
        %v1442 = vunpack.c.h.b16 %v631
        %v1443 = vunpack.c.l.b16 %v632
        %v1444 = vunpack.c.h.b16 %v632
        %v1445 = vunpack.c.l.b16 %v633
        %v1446 = vunpack.c.h.b16 %v633
        %v1447 = vunpack.c.l.b16 %v634
        %v1448 = vunpack.c.h.b16 %v634
        %v1449 = vunpack.c.l.b16 %v635
        %v1450 = vunpack.c.h.b16 %v635
        %v1451 = vunpack.c.l.b16 %v636
        %v1452 = vunpack.c.h.b16 %v636
        %v1453 = vunpack.c.l.b16 %v637
        %v1454 = vunpack.c.h.b16 %v637
        %v1455 = vunpack.c.l.b16 %v638
        %v1456 = vunpack.c.h.b16 %v638
        %v1457 = vunpack.c.l.b16 %v639
        %v1458 = vunpack.c.h.b16 %v639
        %v1459 = vunpack.c.l.b16 %v640
        %v1460 = vunpack.c.h.b16 %v640
        %v1461 = vunpack.c.l.b16 %v641
        %v1462 = vunpack.c.h.b16 %v641
        %v1463 = vunpack.c.l.b16 %v642
        %v1464 = vunpack.c.h.b16 %v642
        %v1465 = vunpack.c.l.b16 %v643
        %v1466 = vunpack.c.h.b16 %v643
        %v1467 = vunpack.c.l.b16 %v644
        %v1468 = vunpack.c.h.b16 %v644
        %v1469 = vunpack.c.l.b16 %v645
        %v1470 = vunpack.c.h.b16 %v645
        %v1471 = vunpack.c.l.b16 %v646
        %v1472 = vunpack.c.h.b16 %v646
        %v1473 = vunpack.c.l.b16 %v647
        %v1474 = vunpack.c.h.b16 %v647
        %v1475 = vunpack.c.l.b16 %v648
        %v1476 = vunpack.c.h.b16 %v648
        %v1477 = vunpack.c.l.b16 %v649
        %v1478 = vunpack.c.h.b16 %v649
        %v1479 = vunpack.c.l.b16 %v650
        %v1480 = vunpack.c.h.b16 %v650
        %v1481 = vunpack.c.l.b16 %v651
        %v1482 = vunpack.c.h.b16 %v651
        %v1483 = vunpack.c.l.b16 %v652
        %v1484 = vunpack.c.h.b16 %v652
        %v1485 = vunpack.c.l.b16 %v653
        %v1486 = vunpack.c.h.b16 %v653
        %v1487 = vunpack.c.l.b16 %v654
        %v1488 = vunpack.c.h.b16 %v654
        %v1489 = vunpack.c.l.b16 %v655
        %v1490 = vunpack.c.h.b16 %v655
        %v1491 = vunpack.c.l.b16 %v656
        %v1492 = vunpack.c.h.b16 %v656
        %v1493 = vunpack.c.l.b16 %v657
        %v1494 = vunpack.c.h.b16 %v657
        %v1495 = vunpack.c.l.b16 %v658
        %v1496 = vunpack.c.h.b16 %v658
        %v1497 = vunpack.c.l.b16 %v659
        %v1498 = vunpack.c.h.b16 %v659
        %v1499 = vunpack.c.l.b16 %v660
        %v1500 = vunpack.c.h.b16 %v660
        %v1501 = vunpack.c.l.b16 %v661
        %v1502 = vunpack.c.h.b16 %v661
        %v1503 = vunpack.c.l.b16 %v662
        %v1504 = vunpack.c.h.b16 %v662
        %v1505 = vunpack.c.l.b16 %v663
        %v1506 = vunpack.c.h.b16 %v663
        %v1507 = vunpack.c.l.b16 %v664
        %v1508 = vunpack.c.h.b16 %v664
        %v1509 = vunpack.c.l.b16 %v665
        %v1510 = vunpack.c.h.b16 %v665
        %v1511 = vunpack.c.l.b16 %v666
        %v1512 = vunpack.c.h.b16 %v666
        %v1513 = vunpack.c.l.b16 %v667
        %v1514 = vunpack.c.h.b16 %v667
        %v1515 = vunpack.c.l.b16 %v668
        %v1516 = vunpack.c.h.b16 %v668
        %v1517 = vunpack.c.l.b16 %v669
        %v1518 = vunpack.c.h.b16 %v669
        %v1519 = vunpack.c.l.b16 %v670
        %v1520 = vunpack.c.h.b16 %v670
        %v1521 = vunpack.c.l.b16 %v671
        %v1522 = vunpack.c.h.b16 %v671
        %v1523 = vunpack.c.l.b16 %v672
        %v1524 = vunpack.c.h.b16 %v672
        %v1525 = vunpack.c.l.b16 %v673
        %v1526 = vunpack.c.h.b16 %v673
        %v1527 = vunpack.c.l.b16 %v674
        %v1528 = vunpack.c.h.b16 %v674
        %v1529 = vunpack.c.l.b16 %v675
        %v1530 = vunpack.c.h.b16 %v675
        %v1531 = vunpack.c.l.b16 %v676
        %v1532 = vunpack.c.h.b16 %v676
        %v1533 = vunpack.c.l.b16 %v677
        %v1534 = vunpack.c.h.b16 %v677
        %v1535 = vunpack.c.l.b16 %v678
        %v1536 = vunpack.c.h.b16 %v678
        %v1537 = vunpack.c.l.b16 %v679
        %v1538 = vunpack.c.h.b16 %v679
        %v1539 = vunpack.c.l.b16 %v680
        %v1540 = vunpack.c.h.b16 %v680
        %v1541 = vunpack.c.l.b16 %v681
        %v1542 = vunpack.c.h.b16 %v681
        %v1543 = vunpack.c.l.b16 %v682
        %v1544 = vunpack.c.h.b16 %v682
        %v1545 = vunpack.c.l.b16 %v683
        %v1546 = vunpack.c.h.b16 %v683
        %v1547 = vunpack.c.l.b16 %v684
        %v1548 = vunpack.c.h.b16 %v684
        %v1549 = vunpack.c.l.b16 %v685
        %v1550 = vunpack.c.h.b16 %v685
        %v1551 = vunpack.c.l.b16 %v686
        %v1552 = vunpack.c.h.b16 %v686
        %v1553 = vunpack.c.l.b16 %v687
        %v1554 = vunpack.c.h.b16 %v687
        %v1555 = vunpack.c.l.b16 %v688
        %v1556 = vunpack.c.h.b16 %v688
        %v1557 = vunpack.c.l.b16 %v689
        %v1558 = vunpack.c.h.b16 %v689
        %v1559 = vunpack.c.l.b16 %v690
        %v1560 = vunpack.c.h.b16 %v690
        %v1561 = vunpack.c.l.b16 %v691
        %v1562 = vunpack.c.h.b16 %v691
        %v1563 = vunpack.c.l.b16 %v692
        %v1564 = vunpack.c.h.b16 %v692
        %v1565 = vunpack.c.l.b16 %v693
        %v1566 = vunpack.c.h.b16 %v693
        %v1567 = vunpack.c.l.b16 %v694
        %v1568 = vunpack.c.h.b16 %v694
        %v1569 = vunpack.c.l.b16 %v695
        %v1570 = vunpack.c.h.b16 %v695
        %v1571 = vunpack.c.l.b16 %v696
        %v1572 = vunpack.c.h.b16 %v696
        %v1573 = vunpack.c.l.b16 %v697
        %v1574 = vunpack.c.h.b16 %v697
        %v1575 = vunpack.c.l.b16 %v698
        %v1576 = vunpack.c.h.b16 %v698
        %v1577 = vunpack.c.l.b16 %v699
        %v1578 = vunpack.c.h.b16 %v699
        %v1579 = vunpack.c.l.b16 %v700
        %v1580 = vunpack.c.h.b16 %v700
        %v1581 = vunpack.c.l.b16 %v701
        %v1582 = vunpack.c.h.b16 %v701
        %v1583 = vunpack.c.l.b16 %v702
        %v1584 = vunpack.c.h.b16 %v702
        %v1585 = vunpack.c.l.b16 %v703
        %v1586 = vunpack.c.h.b16 %v703
        %v1587 = vunpack.c.l.b16 %v704
        %v1588 = vunpack.c.h.b16 %v704
        %v1589 = vunpack.c.l.b16 %v705
        %v1590 = vunpack.c.h.b16 %v705
        %v1591 = vunpack.c.l.b16 %v706
        %v1592 = vunpack.c.h.b16 %v706
        %v1593 = vunpack.c.l.b16 %v707
        %v1594 = vunpack.c.h.b16 %v707
        %v1595 = vunpack.c.l.b16 %v708
        %v1596 = vunpack.c.h.b16 %v708
        %v1597 = vunpack.c.l.b16 %v709
        %v1598 = vunpack.c.h.b16 %v709
        %v1599 = vunpack.c.l.b16 %v710
        %v1600 = vunpack.c.h.b16 %v710
        %v1601 = vunpack.c.l.b16 %v711
        %v1602 = vunpack.c.h.b16 %v711
        %v1603 = vunpack.c.l.b16 %v712
        %v1604 = vunpack.c.h.b16 %v712
        %v1605 = vunpack.c.l.b16 %v713
        %v1606 = vunpack.c.h.b16 %v713
        %v1607 = vunpack.c.l.b16 %v714
        %v1608 = vunpack.c.h.b16 %v714
        %v1609 = vunpack.c.l.b16 %v715
        %v1610 = vunpack.c.h.b16 %v715
        %v1611 = vunpack.c.l.b16 %v716
        %v1612 = vunpack.c.h.b16 %v716
        %v1613 = vunpack.c.l.b16 %v717
        %v1614 = vunpack.c.h.b16 %v717
        %v1615 = vunpack.c.l.b16 %v718
        %v1616 = vunpack.c.h.b16 %v718
        %v1617 = vunpack.c.l.b16 %v719
        %v1618 = vunpack.c.h.b16 %v719
        %v1619 = vunpack.c.l.b16 %v720
        %v1620 = vunpack.c.h.b16 %v720
        %v1621 = vunpack.c.l.b16 %v721
        %v1622 = vunpack.c.h.b16 %v721
        %v1623 = vunpack.c.l.b16 %v722
        %v1624 = vunpack.c.h.b16 %v722
        %v1625 = vunpack.c.l.b16 %v723
        %v1626 = vunpack.c.h.b16 %v723
        %v1627 = vunpack.c.l.b16 %v724
        %v1628 = vunpack.c.h.b16 %v724
        %v1629 = vunpack.c.l.b16 %v725
        %v1630 = vunpack.c.h.b16 %v725
        %v1631 = vunpack.c.l.b16 %v726
        %v1632 = vunpack.c.h.b16 %v726
        %v1633 = vunpack.c.l.b16 %v727
        %v1634 = vunpack.c.h.b16 %v727
        %v1635 = vunpack.c.l.b16 %v728
        %v1636 = vunpack.c.h.b16 %v728
        %v1637 = vunpack.c.l.b16 %v729
        %v1638 = vunpack.c.h.b16 %v729
        %v1639 = vunpack.c.l.b16 %v730
        %v1640 = vunpack.c.h.b16 %v730
        %v1641 = vunpack.c.l.b16 %v731
        %v1642 = vunpack.c.h.b16 %v731
        %v1643 = vunpack.c.l.b16 %v732
        %v1644 = vunpack.c.h.b16 %v732
        %v1645 = vunpack.c.l.b16 %v733
        %v1646 = vunpack.c.h.b16 %v733
        %v1647 = vunpack.c.l.b16 %v734
        %v1648 = vunpack.c.h.b16 %v734
        %v1649 = vunpack.c.l.b16 %v735
        %v1650 = vunpack.c.h.b16 %v735
        %v1651 = vunpack.c.l.b16 %v736
        %v1652 = vunpack.c.h.b16 %v736
        %v1653 = vunpack.c.l.b16 %v737
        %v1654 = vunpack.c.h.b16 %v737
        %v1655 = vunpack.c.l.b16 %v738
        %v1656 = vunpack.c.h.b16 %v738
        %v1657 = vunpack.c.l.b16 %v739
        %v1658 = vunpack.c.h.b16 %v739
        %v1659 = vunpack.c.l.b16 %v740
        %v1660 = vunpack.c.h.b16 %v740
        %v1661 = vunpack.c.l.b16 %v741
        %v1662 = vunpack.c.h.b16 %v741
        %v1663 = vunpack.c.l.b16 %v742
        %v1664 = vunpack.c.h.b16 %v742
        %v1665 = vunpack.c.l.b16 %v743
        %v1666 = vunpack.c.h.b16 %v743
        %v1667 = vunpack.c.l.b16 %v744
        %v1668 = vunpack.c.h.b16 %v744
        %v1669 = vunpack.c.l.b16 %v745
        %v1670 = vunpack.c.h.b16 %v745
        %v1671 = vunpack.c.l.b16 %v746
        %v1672 = vunpack.c.h.b16 %v746
        %v1673 = vunpack.c.l.b16 %v747
        %v1674 = vunpack.c.h.b16 %v747
        %v1675 = vunpack.c.l.b16 %v748
        %v1676 = vunpack.c.h.b16 %v748
        %v1677 = vunpack.c.l.b16 %v749
        %v1678 = vunpack.c.h.b16 %v749
        %v1679 = vunpack.c.l.b16 %v750
        %v1680 = vunpack.c.h.b16 %v750
        %v1681 = vunpack.c.l.b16 %v751
        %v1682 = vunpack.c.h.b16 %v751
        %v1683 = vunpack.c.l.b16 %v752
        %v1684 = vunpack.c.h.b16 %v752
        %v1685 = vunpack.c.l.b16 %v753
        %v1686 = vunpack.c.h.b16 %v753
        %v1687 = vunpack.c.l.b16 %v754
        %v1688 = vunpack.c.h.b16 %v754
        %v1689 = vunpack.c.l.b16 %v755
        %v1690 = vunpack.c.h.b16 %v755
        %v1691 = vunpack.c.l.b16 %v756
        %v1692 = vunpack.c.h.b16 %v756
        %v1693 = vunpack.c.l.b16 %v757
        %v1694 = vunpack.c.h.b16 %v757
        %v1695 = vunpack.c.l.b16 %v758
        %v1696 = vunpack.c.h.b16 %v758
        %v1697 = vunpack.c.l.b16 %v759
        %v1698 = vunpack.c.h.b16 %v759
        %v1699 = vunpack.c.l.b16 %v760
        %v1700 = vunpack.c.h.b16 %v760
        %v1701 = vunpack.c.l.b16 %v761
        %v1702 = vunpack.c.h.b16 %v761
        %v1703 = vunpack.c.l.b16 %v762
        %v1704 = vunpack.c.h.b16 %v762
        %v1705 = vunpack.c.l.b16 %v763
        %v1706 = vunpack.c.h.b16 %v763
        %v1707 = vunpack.c.l.b16 %v764
        %v1708 = vunpack.c.h.b16 %v764
        %v1709 = vunpack.c.l.b16 %v765
        %v1710 = vunpack.c.h.b16 %v765
        %v1711 = vunpack.c.l.b16 %v766
        %v1712 = vunpack.c.h.b16 %v766
        %v1713 = vunpack.c.l.b16 %v767
        %v1714 = vunpack.c.h.b16 %v767
        %v1715 = vunpack.c.l.b16 %v768
        %v1716 = vunpack.c.h.b16 %v768
        %v1717 = vunpack.c.l.b16 %v769
        %v1718 = vunpack.c.h.b16 %v769
        %v1719 = vunpack.c.l.b16 %v770
        %v1720 = vunpack.c.h.b16 %v770
        %v1721 = vunpack.c.l.b16 %v771
        %v1722 = vunpack.c.h.b16 %v771
        %v1723 = vunpack.c.l.b16 %v772
        %v1724 = vunpack.c.h.b16 %v772
        %v1725 = vunpack.c.l.b16 %v773
        %v1726 = vunpack.c.h.b16 %v773
        %v1727 = vunpack.c.l.b16 %v774
        %v1728 = vunpack.c.h.b16 %v774
        %v1729 = vunpack.c.l.b16 %v775
        %v1730 = vunpack.c.h.b16 %v775
        %v1731 = vunpack.c.l.b16 %v776
        %v1732 = vunpack.c.h.b16 %v776
        %v1733 = vunpack.c.l.b16 %v777
        %v1734 = vunpack.c.h.b16 %v777
        %v1735 = vunpack.c.l.b16 %v778
        %v1736 = vunpack.c.h.b16 %v778
        %v1737 = vunpack.c.l.b16 %v779
        %v1738 = vunpack.c.h.b16 %v779
        %v1739 = vunpack.c.l.b16 %v780
        %v1740 = vunpack.c.h.b16 %v780
        %v1741 = vunpack.c.l.b16 %v781
        %v1742 = vunpack.c.h.b16 %v781
        %v1743 = vunpack.c.l.b16 %v782
        %v1744 = vunpack.c.h.b16 %v782
        %v1745 = vunpack.c.l.b16 %v783
        %v1746 = vunpack.c.h.b16 %v783
        %v1747 = vunpack.c.l.b16 %v784
        %v1748 = vunpack.c.h.b16 %v784
        %v1749 = vunpack.c.l.b16 %v785
        %v1750 = vunpack.c.h.b16 %v785
        %v1751 = vunpack.c.l.b16 %v786
        %v1752 = vunpack.c.h.b16 %v786
        %v1753 = vunpack.c.l.b16 %v787
        %v1754 = vunpack.c.h.b16 %v787
        %v1755 = vunpack.c.l.b16 %v788
        %v1756 = vunpack.c.h.b16 %v788
        %v1757 = vunpack.c.l.b16 %v789
        %v1758 = vunpack.c.h.b16 %v789
        %v1759 = vunpack.c.l.b16 %v790
        %v1760 = vunpack.c.h.b16 %v790
        %v1761 = vunpack.c.l.b16 %v791
        %v1762 = vunpack.c.h.b16 %v791
        %v1763 = vunpack.c.l.b16 %v792
        %v1764 = vunpack.c.h.b16 %v792
        %v1765 = vunpack.c.l.b16 %v793
        %v1766 = vunpack.c.h.b16 %v793
        %v1767 = vunpack.c.l.b16 %v794
        %v1768 = vunpack.c.h.b16 %v794
        %v1769 = vunpack.c.l.b16 %v795
        %v1770 = vunpack.c.h.b16 %v795
        %v1771 = vunpack.c.l.b16 %v796
        %v1772 = vunpack.c.h.b16 %v796
        %v1773 = vunpack.c.l.b16 %v797
        %v1774 = vunpack.c.h.b16 %v797
        %v1775 = vunpack.c.l.b16 %v798
        %v1776 = vunpack.c.h.b16 %v798
        %v1777 = vunpack.c.l.b16 %v799
        %v1778 = vunpack.c.h.b16 %v799
        %v1779 = vunpack.c.l.b16 %v800
        %v1780 = vunpack.c.h.b16 %v800
        %v1781 = vunpack.c.l.b16 %v801
        %v1782 = vunpack.c.h.b16 %v801
        %v1783 = vunpack.c.l.b16 %v802
        %v1784 = vunpack.c.h.b16 %v802
        %v1785 = vunpack.c.l.b16 %v803
        %v1786 = vunpack.c.h.b16 %v803
        %v1787 = vunpack.c.l.b16 %v804
        %v1788 = vunpack.c.h.b16 %v804
        %v1789 = vunpack.c.l.b16 %v805
        %v1790 = vunpack.c.h.b16 %v805
        %v1791 = vunpack.c.l.b16 %v806
        %v1792 = vunpack.c.h.b16 %v806
        %v1793 = vunpack.c.l.b16 %v807
        %v1794 = vunpack.c.h.b16 %v807
        %v1795 = vunpack.c.l.b16 %v808
        %v1796 = vunpack.c.h.b16 %v808
        %v1797 = vunpack.c.l.b16 %v809
        %v1798 = vunpack.c.h.b16 %v809
        %v1799 = vunpack.c.l.b16 %v810
        %v1800 = vunpack.c.h.b16 %v810
        %v1801 = vunpack.c.l.b16 %v811
        %v1802 = vunpack.c.h.b16 %v811
        %v1803 = vunpack.c.l.b16 %v812
        %v1804 = vunpack.c.h.b16 %v812
        %v1805 = vunpack.c.l.b16 %v813
        %v1806 = vunpack.c.h.b16 %v813
        %v1807 = vunpack.c.l.b16 %v814
        %v1808 = vunpack.c.h.b16 %v814
        %v1809 = vunpack.c.l.b16 %v815
        %v1810 = vunpack.c.h.b16 %v815
        %v1811 = vunpack.c.l.b16 %v816
        %v1812 = vunpack.c.h.b16 %v816
        %v1813 = vunpack.c.l.b16 %v817
        %v1814 = vunpack.c.h.b16 %v817
        %v1815 = vunpack.c.l.b16 %v818
        %v1816 = vunpack.c.h.b16 %v818
        %v1817 = vunpack.c.l.b16 %v819
        %v1818 = vunpack.c.h.b16 %v819
        %v1819 = vunpack.c.l.b16 %v820
        %v1820 = vunpack.c.h.b16 %v820
        %v1821 = vunpack.c.l.b16 %v821
        %v1822 = vunpack.c.h.b16 %v821
        %v1823 = vunpack.c.l.b16 %v822
        %v1824 = vunpack.c.h.b16 %v822
        %v1825 = vunpack.c.l.b16 %v823
        %v1826 = vunpack.c.h.b16 %v823
        %v1827 = vunpack.c.l.b16 %v824
        %v1828 = vunpack.c.h.b16 %v824
        %v1829 = vunpack.c.l.b16 %v825
        %v1830 = vunpack.c.h.b16 %v825
        %v1831 = vunpack.c.l.b16 %v826
        %v1832 = vunpack.c.h.b16 %v826
        %v1833 = vunpack.c.l.b16 %v827
        %v1834 = vunpack.c.h.b16 %v827
        %v1835 = vunpack.c.l.b16 %v828
        %v1836 = vunpack.c.h.b16 %v828
        %v1837 = vunpack.c.l.b16 %v829
        %v1838 = vunpack.c.h.b16 %v829
        %v1839 = vunpack.c.l.b16 %v830
        %v1840 = vunpack.c.h.b16 %v830
        %v1841 = vunpack.c.l.b16 %v831
        %v1842 = vunpack.c.h.b16 %v831
        %v1843 = vunpack.c.l.b16 %v832
        %v1844 = vunpack.c.h.b16 %v832
        %v1845 = vunpack.c.l.b16 %v833
        %v1846 = vunpack.c.h.b16 %v833
        %v1847 = vunpack.c.l.b16 %v834
        %v1848 = vunpack.c.h.b16 %v834
        %v1849 = vunpack.c.l.b16 %v835
        %v1850 = vunpack.c.h.b16 %v835
        %v1851 = vunpack.c.l.b16 %v836
        %v1852 = vunpack.c.h.b16 %v836
        %v1853 = vunpack.c.l.b16 %v837
        %v1854 = vunpack.c.h.b16 %v837
        %v1855 = vunpack.c.l.b16 %v838
        %v1856 = vunpack.c.h.b16 %v838
        %v1857 = vunpack.c.l.b16 %v839
        %v1858 = vunpack.c.h.b16 %v839
        %v1859 = vunpack.c.l.b16 %v840
        %v1860 = vunpack.c.h.b16 %v840
        %v1861 = vunpack.c.l.b16 %v841
        %v1862 = vunpack.c.h.b16 %v841
        %v1863 = vunpack.c.l.b16 %v842
        %v1864 = vunpack.c.h.b16 %v842
        %v1865 = vunpack.c.l.b16 %v843
        %v1866 = vunpack.c.h.b16 %v843
        %v1867 = vunpack.c.l.b16 %v844
        %v1868 = vunpack.c.h.b16 %v844
        %v1869 = vunpack.c.l.b16 %v845
        %v1870 = vunpack.c.h.b16 %v845
        %v1871 = vunpack.c.l.b16 %v846
        %v1872 = vunpack.c.h.b16 %v846
        %v1873 = vunpack.c.l.b16 %v847
        %v1874 = vunpack.c.h.b16 %v847
        %v1875 = vunpack.c.l.b16 %v848
        %v1876 = vunpack.c.h.b16 %v848
        %v1877 = vunpack.c.l.b16 %v849
        %v1878 = vunpack.c.h.b16 %v849
        %v1879 = vunpack.c.l.b16 %v850
        %v1880 = vunpack.c.h.b16 %v850
        %v1881 = vunpack.c.l.b16 %v851
        %v1882 = vunpack.c.h.b16 %v851
        %v1883 = vunpack.c.l.b16 %v852
        %v1884 = vunpack.c.h.b16 %v852
        %v1885 = vunpack.c.l.b16 %v853
        %v1886 = vunpack.c.h.b16 %v853
        %v1887 = vunpack.c.l.b16 %v854
        %v1888 = vunpack.c.h.b16 %v854
        %v1889 = vunpack.c.l.b16 %v855
        %v1890 = vunpack.c.h.b16 %v855
        %v1891 = vunpack.c.l.b16 %v856
        %v1892 = vunpack.c.h.b16 %v856
        %v1893 = vunpack.c.l.b16 %v857
        %v1894 = vunpack.c.h.b16 %v857
        %v1895 = vunpack.c.l.b16 %v858
        %v1896 = vunpack.c.h.b16 %v858
        %v1897 = vunpack.c.l.b16 %v859
        %v1898 = vunpack.c.h.b16 %v859
        %v1899 = vunpack.c.l.b16 %v860
        %v1900 = vunpack.c.h.b16 %v860
        %v1901 = vunpack.c.l.b16 %v861
        %v1902 = vunpack.c.h.b16 %v861
        %v1903 = vunpack.c.l.b16 %v862
        %v1904 = vunpack.c.h.b16 %v862
        %v1905 = vunpack.c.l.b16 %v863
        %v1906 = vunpack.c.h.b16 %v863
        %v1907 = vunpack.c.l.b16 %v864
        %v1908 = vunpack.c.h.b16 %v864
        %v1909 = vunpack.c.l.b16 %v865
        %v1910 = vunpack.c.h.b16 %v865
        %v1911 = vunpack.c.l.b16 %v866
        %v1912 = vunpack.c.h.b16 %v866
        %v1913 = vunpack.c.l.b16 %v867
        %v1914 = vunpack.c.h.b16 %v867
        %v1915 = vunpack.c.l.b16 %v868
        %v1916 = vunpack.c.h.b16 %v868
        %v1917 = vunpack.c.l.b16 %v869
        %v1918 = vunpack.c.h.b16 %v869
        %v1919 = vunpack.c.l.b16 %v870
        %v1920 = vunpack.c.h.b16 %v870
        %v1921 = vunpack.c.l.b16 %v871
        %v1922 = vunpack.c.h.b16 %v871
        %v1923 = vunpack.c.l.b16 %v872
        %v1924 = vunpack.c.h.b16 %v872
        %v1925 = vunpack.c.l.b16 %v873
        %v1926 = vunpack.c.h.b16 %v873
        %v1927 = vunpack.c.l.b16 %v874
        %v1928 = vunpack.c.h.b16 %v874
        %v1929 = vunpack.c.l.b16 %v875
        %v1930 = vunpack.c.h.b16 %v875
        %v1931 = vunpack.c.l.b16 %v876
        %v1932 = vunpack.c.h.b16 %v876
        %v1933 = vunpack.c.l.b16 %v877
        %v1934 = vunpack.c.h.b16 %v877
        %v1935 = vunpack.c.l.b16 %v878
        %v1936 = vunpack.c.h.b16 %v878
        %v1937 = vunpack.c.l.b16 %v879
        %v1938 = vunpack.c.h.b16 %v879
        %v1939 = vunpack.c.l.b16 %v880
        %v1940 = vunpack.c.h.b16 %v880
        %v1941 = vunpack.c.l.b16 %v881
        %v1942 = vunpack.c.h.b16 %v881
        %v1943 = vunpack.c.l.b16 %v882
        %v1944 = vunpack.c.h.b16 %v882
        %v1945 = vunpack.c.l.b16 %v883
        %v1946 = vunpack.c.h.b16 %v883
        %v1947 = vunpack.c.l.b16 %v884
        %v1948 = vunpack.c.h.b16 %v884
        %v1949 = vunpack.c.l.b16 %v885
        %v1950 = vunpack.c.h.b16 %v885
        %v1951 = vunpack.c.l.b16 %v886
        %v1952 = vunpack.c.h.b16 %v886
        %v1953 = vunpack.c.l.b16 %v887
        %v1954 = vunpack.c.h.b16 %v887
        %v1955 = vunpack.c.l.b16 %v888
        %v1956 = vunpack.c.h.b16 %v888
        %v1957 = vunpack.c.l.b16 %v889
        %v1958 = vunpack.c.h.b16 %v889
        %v1959 = vunpack.c.l.b16 %v890
        %v1960 = vunpack.c.h.b16 %v890
        %v1961 = vunpack.c.l.b16 %v891
        %v1962 = vunpack.c.h.b16 %v891
        %v1963 = vunpack.c.l.b16 %v892
        %v1964 = vunpack.c.h.b16 %v892
        %v1965 = vunpack.c.l.b16 %v893
        %v1966 = vunpack.c.h.b16 %v893
        %v1967 = vunpack.c.l.b16 %v894
        %v1968 = vunpack.c.h.b16 %v894
        %v1969 = vunpack.c.l.b16 %v895
        %v1970 = vunpack.c.h.b16 %v895
        %v1971 = vunpack.c.l.b16 %v896
        %v1972 = vunpack.c.h.b16 %v896
        %v1973 = vunpack.c.l.b16 %v897
        %v1974 = vunpack.c.h.b16 %v897
        %v1975 = vunpack.c.l.b16 %v898
        %v1976 = vunpack.c.h.b16 %v898
        %v1977 = vunpack.c.l.b16 %v899
        %v1978 = vunpack.c.h.b16 %v899
        %v1979 = vunpack.c.l.b16 %v900
        %v1980 = vunpack.c.h.b16 %v900
        %v1981 = vunpack.c.l.b16 %v901
        %v1982 = vunpack.c.h.b16 %v901
        %v1983 = vunpack.c.l.b16 %v902
        %v1984 = vunpack.c.h.b16 %v902
        %v1985 = vunpack.c.l.b16 %v903
        %v1986 = vunpack.c.h.b16 %v903
        %v1987 = vunpack.c.l.b16 %v904
        %v1988 = vunpack.c.h.b16 %v904
        %v1989 = vunpack.c.l.b16 %v905
        %v1990 = vunpack.c.h.b16 %v905
        %v1991 = vunpack.c.l.b16 %v906
        %v1992 = vunpack.c.h.b16 %v906
        %v1993 = vunpack.c.l.b16 %v907
        %v1994 = vunpack.c.h.b16 %v907
        %v1995 = vunpack.c.l.b16 %v908
        %v1996 = vunpack.c.h.b16 %v908
        %v1997 = vunpack.c.l.b16 %v909
        %v1998 = vunpack.c.h.b16 %v909
        %v1999 = vunpack.c.l.b16 %v910
        %v2000 = vunpack.c.h.b16 %v910
        %v2001 = vunpack.c.l.b16 %v911
        %v2002 = vunpack.c.h.b16 %v911
        %v2003 = vunpack.c.l.b16 %v912
        %v2004 = vunpack.c.h.b16 %v912
        %v2005 = vunpack.c.l.b16 %v913
        %v2006 = vunpack.c.h.b16 %v913
        %v2007 = vunpack.c.l.b16 %v914
        %v2008 = vunpack.c.h.b16 %v914
        %v2009 = vunpack.c.l.b16 %v915
        %v2010 = vunpack.c.h.b16 %v915
        %v2011 = vunpack.c.l.b16 %v916
        %v2012 = vunpack.c.h.b16 %v916
        %v2013 = vunpack.c.l.b16 %v917
        %v2014 = vunpack.c.h.b16 %v917
        %v2015 = vunpack.c.l.b16 %v918
        %v2016 = vunpack.c.h.b16 %v918
        %v2017 = vunpack.c.l.b16 %v919
        %v2018 = vunpack.c.h.b16 %v919
        %v2019 = vunpack.c.l.b16 %v920
        %v2020 = vunpack.c.h.b16 %v920
        %v2021 = vunpack.c.l.b16 %v921
        %v2022 = vunpack.c.h.b16 %v921
        %v2023 = vunpack.c.l.b16 %v922
        %v2024 = vunpack.c.h.b16 %v922
        %v2025 = vunpack.c.l.b16 %v923
        %v2026 = vunpack.c.h.b16 %v923
        %v2027 = vunpack.c.l.b16 %v924
        %v2028 = vunpack.c.h.b16 %v924
        %v2029 = vunpack.c.l.b16 %v925
        %v2030 = vunpack.c.h.b16 %v925
        %v2031 = vunpack.c.l.b16 %v926
        %v2032 = vunpack.c.h.b16 %v926
        %v2033 = vunpack.c.l.b16 %v927
        %v2034 = vunpack.c.h.b16 %v927
        %v2035 = vunpack.c.l.b16 %v928
        %v2036 = vunpack.c.h.b16 %v928
        %v2037 = vunpack.c.l.b16 %v929
        %v2038 = vunpack.c.h.b16 %v929
        %v2039 = vunpack.c.l.b16 %v930
        %v2040 = vunpack.c.h.b16 %v930
        %v2041 = vunpack.c.l.b16 %v931
        %v2042 = vunpack.c.h.b16 %v931
        %v2043 = vunpack.c.l.b16 %v932
        %v2044 = vunpack.c.h.b16 %v932
        %v2045 = vunpack.c.l.b16 %v933
        %v2046 = vunpack.c.h.b16 %v933
        %v2047 = vunpack.c.l.b16 %v934
        %v2048 = vunpack.c.h.b16 %v934
        %v2049 = vunpack.c.l.b16 %v935
        %v2050 = vunpack.c.h.b16 %v935
        %v2051 = vunpack.c.l.b16 %v936
        %v2052 = vunpack.c.h.b16 %v936
        %v2053 = vunpack.c.l.b16 %v937
        %v2054 = vunpack.c.h.b16 %v937
        %v2055 = vunpack.c.l.b16 %v938
        %v2056 = vunpack.c.h.b16 %v938
        %v2057 = vunpack.c.l.b16 %v939
        %v2058 = vunpack.c.h.b16 %v939
        %v2059 = vunpack.c.l.b16 %v940
        %v2060 = vunpack.c.h.b16 %v940
        %v2061 = vunpack.c.l.b16 %v941
        %v2062 = vunpack.c.h.b16 %v941
        %v2063 = vunpack.c.l.b16 %v942
        %v2064 = vunpack.c.h.b16 %v942
        %v2065 = vunpack.c.l.b16 %v943
        %v2066 = vunpack.c.h.b16 %v943
        %v2067 = vunpack.c.l.b16 %v944
        %v2068 = vunpack.c.h.b16 %v944
        %v2069 = vunpack.c.l.b16 %v945
        %v2070 = vunpack.c.h.b16 %v945
        %v2071 = vunpack.c.l.b16 %v946
        %v2072 = vunpack.c.h.b16 %v946
        %v2073 = vunpack.c.l.b16 %v947
        %v2074 = vunpack.c.h.b16 %v947
        %v2075 = vunpack.c.l.b16 %v948
        %v2076 = vunpack.c.h.b16 %v948
        %v2077 = vunpack.c.l.b16 %v949
        %v2078 = vunpack.c.h.b16 %v949
        %v2079 = vunpack.c.l.b16 %v950
        %v2080 = vunpack.c.h.b16 %v950
        %v2081 = vunpack.c.l.b16 %v951
        %v2082 = vunpack.c.h.b16 %v951
        %v2083 = vunpack.c.l.b16 %v952
        %v2084 = vunpack.c.h.b16 %v952
        %v2085 = vunpack.c.l.b16 %v953
        %v2086 = vunpack.c.h.b16 %v953
        %v2087 = vunpack.c.l.b16 %v954
        %v2088 = vunpack.c.h.b16 %v954
        %v2089 = vunpack.c.l.b16 %v955
        %v2090 = vunpack.c.h.b16 %v955
        %v2091 = vunpack.c.l.b16 %v956
        %v2092 = vunpack.c.h.b16 %v956
        %v2093 = vunpack.c.l.b16 %v957
        %v2094 = vunpack.c.h.b16 %v957
        %v2095 = vunpack.c.l.b16 %v958
        %v2096 = vunpack.c.h.b16 %v958
        %v2097 = vunpack.c.l.b16 %v959
        %v2098 = vunpack.c.h.b16 %v959
        %v2099 = vunpack.c.l.b16 %v960
        %v2100 = vunpack.c.h.b16 %v960
        %v2101 = vunpack.c.l.b16 %v961
        %v2102 = vunpack.c.h.b16 %v961
        %v2103 = vunpack.c.l.b16 %v962
        %v2104 = vunpack.c.h.b16 %v962
        %v2105 = vunpack.c.l.b16 %v963
        %v2106 = vunpack.c.h.b16 %v963
        %v2107 = vunpack.c.l.b16 %v964
        %v2108 = vunpack.c.h.b16 %v964
        %v2109 = vunpack.c.l.b16 %v965
        %v2110 = vunpack.c.h.b16 %v965
        %v2111 = vunpack.c.l.b16 %v966
        %v2112 = vunpack.c.h.b16 %v966
        %v2113 = vunpack.c.l.b16 %v967
        %v2114 = vunpack.c.h.b16 %v967
        %v2115 = vunpack.c.l.b16 %v968
        %v2116 = vunpack.c.h.b16 %v968
        %v2117 = vunpack.c.l.b16 %v969
        %v2118 = vunpack.c.h.b16 %v969
        %v2119 = vunpack.c.l.b16 %v970
        %v2120 = vunpack.c.h.b16 %v970
        %v2121 = vunpack.c.l.b16 %v971
        %v2122 = vunpack.c.h.b16 %v971
        %v2123 = vunpack.c.l.b16 %v972
        %v2124 = vunpack.c.h.b16 %v972
        %v2125 = vpack.c.b16 %v1361, %v1357
        %v2126 = vpack.c.b16 %v1362, %v1358
        %v2127 = vpack.c.b16 %v1363, %v1359
        %v2128 = vpack.c.b16 %v1364, %v1360
        %v2129 = vpack.c.b16 %v1369, %v1365
        %v2130 = vpack.c.b16 %v1370, %v1366
        %v2131 = vpack.c.b16 %v1371, %v1367
        %v2132 = vpack.c.b16 %v1372, %v1368
        %v2133 = vpack.c.b16 %v1377, %v1373
        %v2134 = vpack.c.b16 %v1378, %v1374
        %v2135 = vpack.c.b16 %v1379, %v1375
        %v2136 = vpack.c.b16 %v1380, %v1376
        %v2137 = vpack.c.b16 %v1385, %v1381
        %v2138 = vpack.c.b16 %v1386, %v1382
        %v2139 = vpack.c.b16 %v1387, %v1383
        %v2140 = vpack.c.b16 %v1388, %v1384
        %v2141 = vpack.c.b16 %v1393, %v1389
        %v2142 = vpack.c.b16 %v1394, %v1390
        %v2143 = vpack.c.b16 %v1395, %v1391
        %v2144 = vpack.c.b16 %v1396, %v1392
        %v2145 = vpack.c.b16 %v1401, %v1397
        %v2146 = vpack.c.b16 %v1402, %v1398
        %v2147 = vpack.c.b16 %v1403, %v1399
        %v2148 = vpack.c.b16 %v1404, %v1400
        %v2149 = vpack.c.b16 %v1409, %v1405
        %v2150 = vpack.c.b16 %v1410, %v1406
        %v2151 = vpack.c.b16 %v1411, %v1407
        %v2152 = vpack.c.b16 %v1412, %v1408
        %v2153 = vpack.c.b16 %v1417, %v1413
        %v2154 = vpack.c.b16 %v1418, %v1414
        %v2155 = vpack.c.b16 %v1419, %v1415
        %v2156 = vpack.c.b16 %v1420, %v1416
        %v2157 = vpack.c.b16 %v1425, %v1421
        %v2158 = vpack.c.b16 %v1426, %v1422
        %v2159 = vpack.c.b16 %v1427, %v1423
        %v2160 = vpack.c.b16 %v1428, %v1424
        %v2161 = vpack.c.b16 %v1433, %v1429
        %v2162 = vpack.c.b16 %v1434, %v1430
        %v2163 = vpack.c.b16 %v1435, %v1431
        %v2164 = vpack.c.b16 %v1436, %v1432
        %v2165 = vpack.c.b16 %v1441, %v1437
        %v2166 = vpack.c.b16 %v1442, %v1438
        %v2167 = vpack.c.b16 %v1443, %v1439
        %v2168 = vpack.c.b16 %v1444, %v1440
        %v2169 = vpack.c.b16 %v1449, %v1445
        %v2170 = vpack.c.b16 %v1450, %v1446
        %v2171 = vpack.c.b16 %v1451, %v1447
        %v2172 = vpack.c.b16 %v1452, %v1448
        %v2173 = vpack.c.b16 %v1457, %v1453
        %v2174 = vpack.c.b16 %v1458, %v1454
        %v2175 = vpack.c.b16 %v1459, %v1455
        %v2176 = vpack.c.b16 %v1460, %v1456
        %v2177 = vpack.c.b16 %v1465, %v1461
        %v2178 = vpack.c.b16 %v1466, %v1462
        %v2179 = vpack.c.b16 %v1467, %v1463
        %v2180 = vpack.c.b16 %v1468, %v1464
        %v2181 = vpack.c.b16 %v1473, %v1469
        %v2182 = vpack.c.b16 %v1474, %v1470
        %v2183 = vpack.c.b16 %v1475, %v1471
        %v2184 = vpack.c.b16 %v1476, %v1472
        %v2185 = vpack.c.b16 %v1481, %v1477
        %v2186 = vpack.c.b16 %v1482, %v1478
        %v2187 = vpack.c.b16 %v1483, %v1479
        %v2188 = vpack.c.b16 %v1484, %v1480
        %v2189 = vpack.c.b16 %v1489, %v1485
        %v2190 = vpack.c.b16 %v1490, %v1486
        %v2191 = vpack.c.b16 %v1491, %v1487
        %v2192 = vpack.c.b16 %v1492, %v1488
        %v2193 = vpack.c.b16 %v1497, %v1493
        %v2194 = vpack.c.b16 %v1498, %v1494
        %v2195 = vpack.c.b16 %v1499, %v1495
        %v2196 = vpack.c.b16 %v1500, %v1496
        %v2197 = vpack.c.b16 %v1505, %v1501
        %v2198 = vpack.c.b16 %v1506, %v1502
        %v2199 = vpack.c.b16 %v1507, %v1503
        %v2200 = vpack.c.b16 %v1508, %v1504
        %v2201 = vpack.c.b16 %v1513, %v1509
        %v2202 = vpack.c.b16 %v1514, %v1510
        %v2203 = vpack.c.b16 %v1515, %v1511
        %v2204 = vpack.c.b16 %v1516, %v1512
        %v2205 = vpack.c.b16 %v1521, %v1517
        %v2206 = vpack.c.b16 %v1522, %v1518
        %v2207 = vpack.c.b16 %v1523, %v1519
        %v2208 = vpack.c.b16 %v1524, %v1520
        %v2209 = vpack.c.b16 %v1529, %v1525
        %v2210 = vpack.c.b16 %v1530, %v1526
        %v2211 = vpack.c.b16 %v1531, %v1527
        %v2212 = vpack.c.b16 %v1532, %v1528
        %v2213 = vpack.c.b16 %v1537, %v1533
        %v2214 = vpack.c.b16 %v1538, %v1534
        %v2215 = vpack.c.b16 %v1539, %v1535
        %v2216 = vpack.c.b16 %v1540, %v1536
        %v2217 = vpack.c.b16 %v1545, %v1541
        %v2218 = vpack.c.b16 %v1546, %v1542
        %v2219 = vpack.c.b16 %v1547, %v1543
        %v2220 = vpack.c.b16 %v1548, %v1544
        %v2221 = vpack.c.b16 %v1553, %v1549
        %v2222 = vpack.c.b16 %v1554, %v1550
        %v2223 = vpack.c.b16 %v1555, %v1551
        %v2224 = vpack.c.b16 %v1556, %v1552
        %v2225 = vpack.c.b16 %v1561, %v1557
        %v2226 = vpack.c.b16 %v1562, %v1558
        %v2227 = vpack.c.b16 %v1563, %v1559
        %v2228 = vpack.c.b16 %v1564, %v1560
        %v2229 = vpack.c.b16 %v1569, %v1565
        %v2230 = vpack.c.b16 %v1570, %v1566
        %v2231 = vpack.c.b16 %v1571, %v1567
        %v2232 = vpack.c.b16 %v1572, %v1568
        %v2233 = vpack.c.b16 %v1577, %v1573
        %v2234 = vpack.c.b16 %v1578, %v1574
        %v2235 = vpack.c.b16 %v1579, %v1575
        %v2236 = vpack.c.b16 %v1580, %v1576
        %v2237 = vpack.c.b16 %v1585, %v1581
        %v2238 = vpack.c.b16 %v1586, %v1582
        %v2239 = vpack.c.b16 %v1587, %v1583
        %v2240 = vpack.c.b16 %v1588, %v1584
        %v2241 = vpack.c.b16 %v1593, %v1589
        %v2242 = vpack.c.b16 %v1594, %v1590
        %v2243 = vpack.c.b16 %v1595, %v1591
        %v2244 = vpack.c.b16 %v1596, %v1592
        %v2245 = vpack.c.b16 %v1601, %v1597
        %v2246 = vpack.c.b16 %v1602, %v1598
        %v2247 = vpack.c.b16 %v1603, %v1599
        %v2248 = vpack.c.b16 %v1604, %v1600
        %v2249 = vpack.c.b16 %v1609, %v1605
        %v2250 = vpack.c.b16 %v1610, %v1606
        %v2251 = vpack.c.b16 %v1611, %v1607
        %v2252 = vpack.c.b16 %v1612, %v1608
        %v2253 = vpack.c.b16 %v1617, %v1613
        %v2254 = vpack.c.b16 %v1618, %v1614
        %v2255 = vpack.c.b16 %v1619, %v1615
        %v2256 = vpack.c.b16 %v1620, %v1616
        %v2257 = vpack.c.b16 %v1625, %v1621
        %v2258 = vpack.c.b16 %v1626, %v1622
        %v2259 = vpack.c.b16 %v1627, %v1623
        %v2260 = vpack.c.b16 %v1628, %v1624
        %v2261 = vpack.c.b16 %v1633, %v1629
        %v2262 = vpack.c.b16 %v1634, %v1630
        %v2263 = vpack.c.b16 %v1635, %v1631
        %v2264 = vpack.c.b16 %v1636, %v1632
        %v2265 = vpack.c.b16 %v1641, %v1637
        %v2266 = vpack.c.b16 %v1642, %v1638
        %v2267 = vpack.c.b16 %v1643, %v1639
        %v2268 = vpack.c.b16 %v1644, %v1640
        %v2269 = vpack.c.b16 %v1649, %v1645
        %v2270 = vpack.c.b16 %v1650, %v1646
        %v2271 = vpack.c.b16 %v1651, %v1647
        %v2272 = vpack.c.b16 %v1652, %v1648
        %v2273 = vpack.c.b16 %v1657, %v1653
        %v2274 = vpack.c.b16 %v1658, %v1654
        %v2275 = vpack.c.b16 %v1659, %v1655
        %v2276 = vpack.c.b16 %v1660, %v1656
        %v2277 = vpack.c.b16 %v1665, %v1661
        %v2278 = vpack.c.b16 %v1666, %v1662
        %v2279 = vpack.c.b16 %v1667, %v1663
        %v2280 = vpack.c.b16 %v1668, %v1664
        %v2281 = vpack.c.b16 %v1673, %v1669
        %v2282 = vpack.c.b16 %v1674, %v1670
        %v2283 = vpack.c.b16 %v1675, %v1671
        %v2284 = vpack.c.b16 %v1676, %v1672
        %v2285 = vpack.c.b16 %v1681, %v1677
        %v2286 = vpack.c.b16 %v1682, %v1678
        %v2287 = vpack.c.b16 %v1683, %v1679
        %v2288 = vpack.c.b16 %v1684, %v1680
        %v2289 = vpack.c.b16 %v1689, %v1685
        %v2290 = vpack.c.b16 %v1690, %v1686
        %v2291 = vpack.c.b16 %v1691, %v1687
        %v2292 = vpack.c.b16 %v1692, %v1688
        %v2293 = vpack.c.b16 %v1697, %v1693
        %v2294 = vpack.c.b16 %v1698, %v1694
        %v2295 = vpack.c.b16 %v1699, %v1695
        %v2296 = vpack.c.b16 %v1700, %v1696
        %v2297 = vpack.c.b16 %v1705, %v1701
        %v2298 = vpack.c.b16 %v1706, %v1702
        %v2299 = vpack.c.b16 %v1707, %v1703
        %v2300 = vpack.c.b16 %v1708, %v1704
        %v2301 = vpack.c.b16 %v1713, %v1709
        %v2302 = vpack.c.b16 %v1714, %v1710
        %v2303 = vpack.c.b16 %v1715, %v1711
        %v2304 = vpack.c.b16 %v1716, %v1712
        %v2305 = vpack.c.b16 %v1721, %v1717
        %v2306 = vpack.c.b16 %v1722, %v1718
        %v2307 = vpack.c.b16 %v1723, %v1719
        %v2308 = vpack.c.b16 %v1724, %v1720
        %v2309 = vpack.c.b16 %v1729, %v1725
        %v2310 = vpack.c.b16 %v1730, %v1726
        %v2311 = vpack.c.b16 %v1731, %v1727
        %v2312 = vpack.c.b16 %v1732, %v1728
        %v2313 = vpack.c.b16 %v1737, %v1733
        %v2314 = vpack.c.b16 %v1738, %v1734
        %v2315 = vpack.c.b16 %v1739, %v1735
        %v2316 = vpack.c.b16 %v1740, %v1736
        %v2317 = vpack.c.b16 %v1745, %v1741
        %v2318 = vpack.c.b16 %v1746, %v1742
        %v2319 = vpack.c.b16 %v1747, %v1743
        %v2320 = vpack.c.b16 %v1748, %v1744
        %v2321 = vpack.c.b16 %v1753, %v1749
        %v2322 = vpack.c.b16 %v1754, %v1750
        %v2323 = vpack.c.b16 %v1755, %v1751
        %v2324 = vpack.c.b16 %v1756, %v1752
        %v2325 = vpack.c.b16 %v1761, %v1757
        %v2326 = vpack.c.b16 %v1762, %v1758
        %v2327 = vpack.c.b16 %v1763, %v1759
        %v2328 = vpack.c.b16 %v1764, %v1760
        %v2329 = vpack.c.b16 %v1769, %v1765
        %v2330 = vpack.c.b16 %v1770, %v1766
        %v2331 = vpack.c.b16 %v1771, %v1767
        %v2332 = vpack.c.b16 %v1772, %v1768
        %v2333 = vpack.c.b16 %v1777, %v1773
        %v2334 = vpack.c.b16 %v1778, %v1774
        %v2335 = vpack.c.b16 %v1779, %v1775
        %v2336 = vpack.c.b16 %v1780, %v1776
        %v2337 = vpack.c.b16 %v1785, %v1781
        %v2338 = vpack.c.b16 %v1786, %v1782
        %v2339 = vpack.c.b16 %v1787, %v1783
        %v2340 = vpack.c.b16 %v1788, %v1784
        %v2341 = vpack.c.b16 %v1793, %v1789
        %v2342 = vpack.c.b16 %v1794, %v1790
        %v2343 = vpack.c.b16 %v1795, %v1791
        %v2344 = vpack.c.b16 %v1796, %v1792
        %v2345 = vpack.c.b16 %v1801, %v1797
        %v2346 = vpack.c.b16 %v1802, %v1798
        %v2347 = vpack.c.b16 %v1803, %v1799
        %v2348 = vpack.c.b16 %v1804, %v1800
        %v2349 = vpack.c.b16 %v1809, %v1805
        %v2350 = vpack.c.b16 %v1810, %v1806
        %v2351 = vpack.c.b16 %v1811, %v1807
        %v2352 = vpack.c.b16 %v1812, %v1808
        %v2353 = vpack.c.b16 %v1817, %v1813
        %v2354 = vpack.c.b16 %v1818, %v1814
        %v2355 = vpack.c.b16 %v1819, %v1815
        %v2356 = vpack.c.b16 %v1820, %v1816
        %v2357 = vpack.c.b16 %v1825, %v1821
        %v2358 = vpack.c.b16 %v1826, %v1822
        %v2359 = vpack.c.b16 %v1827, %v1823
        %v2360 = vpack.c.b16 %v1828, %v1824
        %v2361 = vpack.c.b16 %v1833, %v1829
        %v2362 = vpack.c.b16 %v1834, %v1830
        %v2363 = vpack.c.b16 %v1835, %v1831
        %v2364 = vpack.c.b16 %v1836, %v1832
        %v2365 = vpack.c.b16 %v1841, %v1837
        %v2366 = vpack.c.b16 %v1842, %v1838
        %v2367 = vpack.c.b16 %v1843, %v1839
        %v2368 = vpack.c.b16 %v1844, %v1840
        %v2369 = vpack.c.b16 %v1849, %v1845
        %v2370 = vpack.c.b16 %v1850, %v1846
        %v2371 = vpack.c.b16 %v1851, %v1847
        %v2372 = vpack.c.b16 %v1852, %v1848
        %v2373 = vpack.c.b16 %v1857, %v1853
        %v2374 = vpack.c.b16 %v1858, %v1854
        %v2375 = vpack.c.b16 %v1859, %v1855
        %v2376 = vpack.c.b16 %v1860, %v1856
        %v2377 = vpack.c.b16 %v1865, %v1861
        %v2378 = vpack.c.b16 %v1866, %v1862
        %v2379 = vpack.c.b16 %v1867, %v1863
        %v2380 = vpack.c.b16 %v1868, %v1864
        %v2381 = vpack.c.b16 %v1873, %v1869
        %v2382 = vpack.c.b16 %v1874, %v1870
        %v2383 = vpack.c.b16 %v1875, %v1871
        %v2384 = vpack.c.b16 %v1876, %v1872
        %v2385 = vpack.c.b16 %v1881, %v1877
        %v2386 = vpack.c.b16 %v1882, %v1878
        %v2387 = vpack.c.b16 %v1883, %v1879
        %v2388 = vpack.c.b16 %v1884, %v1880
        %v2389 = vpack.c.b16 %v1889, %v1885
        %v2390 = vpack.c.b16 %v1890, %v1886
        %v2391 = vpack.c.b16 %v1891, %v1887
        %v2392 = vpack.c.b16 %v1892, %v1888
        %v2393 = vpack.c.b16 %v1897, %v1893
        %v2394 = vpack.c.b16 %v1898, %v1894
        %v2395 = vpack.c.b16 %v1899, %v1895
        %v2396 = vpack.c.b16 %v1900, %v1896
        %v2397 = vpack.c.b16 %v1905, %v1901
        %v2398 = vpack.c.b16 %v1906, %v1902
        %v2399 = vpack.c.b16 %v1907, %v1903
        %v2400 = vpack.c.b16 %v1908, %v1904
        %v2401 = vpack.c.b16 %v1913, %v1909
        %v2402 = vpack.c.b16 %v1914, %v1910
        %v2403 = vpack.c.b16 %v1915, %v1911
        %v2404 = vpack.c.b16 %v1916, %v1912
        %v2405 = vpack.c.b16 %v1921, %v1917
        %v2406 = vpack.c.b16 %v1922, %v1918
        %v2407 = vpack.c.b16 %v1923, %v1919
        %v2408 = vpack.c.b16 %v1924, %v1920
        %v2409 = vpack.c.b16 %v1929, %v1925
        %v2410 = vpack.c.b16 %v1930, %v1926
        %v2411 = vpack.c.b16 %v1931, %v1927
        %v2412 = vpack.c.b16 %v1932, %v1928
        %v2413 = vpack.c.b16 %v1937, %v1933
        %v2414 = vpack.c.b16 %v1938, %v1934
        %v2415 = vpack.c.b16 %v1939, %v1935
        %v2416 = vpack.c.b16 %v1940, %v1936
        %v2417 = vpack.c.b16 %v1945, %v1941
        %v2418 = vpack.c.b16 %v1946, %v1942
        %v2419 = vpack.c.b16 %v1947, %v1943
        %v2420 = vpack.c.b16 %v1948, %v1944
        %v2421 = vpack.c.b16 %v1953, %v1949
        %v2422 = vpack.c.b16 %v1954, %v1950
        %v2423 = vpack.c.b16 %v1955, %v1951
        %v2424 = vpack.c.b16 %v1956, %v1952
        %v2425 = vpack.c.b16 %v1961, %v1957
        %v2426 = vpack.c.b16 %v1962, %v1958
        %v2427 = vpack.c.b16 %v1963, %v1959
        %v2428 = vpack.c.b16 %v1964, %v1960
        %v2429 = vpack.c.b16 %v1969, %v1965
        %v2430 = vpack.c.b16 %v1970, %v1966
        %v2431 = vpack.c.b16 %v1971, %v1967
        %v2432 = vpack.c.b16 %v1972, %v1968
        %v2433 = vpack.c.b16 %v1977, %v1973
        %v2434 = vpack.c.b16 %v1978, %v1974
        %v2435 = vpack.c.b16 %v1979, %v1975
        %v2436 = vpack.c.b16 %v1980, %v1976
        %v2437 = vpack.c.b16 %v1985, %v1981
        %v2438 = vpack.c.b16 %v1986, %v1982
        %v2439 = vpack.c.b16 %v1987, %v1983
        %v2440 = vpack.c.b16 %v1988, %v1984
        %v2441 = vpack.c.b16 %v1993, %v1989
        %v2442 = vpack.c.b16 %v1994, %v1990
        %v2443 = vpack.c.b16 %v1995, %v1991
        %v2444 = vpack.c.b16 %v1996, %v1992
        %v2445 = vpack.c.b16 %v2001, %v1997
        %v2446 = vpack.c.b16 %v2002, %v1998
        %v2447 = vpack.c.b16 %v2003, %v1999
        %v2448 = vpack.c.b16 %v2004, %v2000
        %v2449 = vpack.c.b16 %v2009, %v2005
        %v2450 = vpack.c.b16 %v2010, %v2006
        %v2451 = vpack.c.b16 %v2011, %v2007
        %v2452 = vpack.c.b16 %v2012, %v2008
        %v2453 = vpack.c.b16 %v2017, %v2013
        %v2454 = vpack.c.b16 %v2018, %v2014
        %v2455 = vpack.c.b16 %v2019, %v2015
        %v2456 = vpack.c.b16 %v2020, %v2016
        %v2457 = vpack.c.b16 %v2025, %v2021
        %v2458 = vpack.c.b16 %v2026, %v2022
        %v2459 = vpack.c.b16 %v2027, %v2023
        %v2460 = vpack.c.b16 %v2028, %v2024
        %v2461 = vpack.c.b16 %v2033, %v2029
        %v2462 = vpack.c.b16 %v2034, %v2030
        %v2463 = vpack.c.b16 %v2035, %v2031
        %v2464 = vpack.c.b16 %v2036, %v2032
        %v2465 = vpack.c.b16 %v2041, %v2037
        %v2466 = vpack.c.b16 %v2042, %v2038
        %v2467 = vpack.c.b16 %v2043, %v2039
        %v2468 = vpack.c.b16 %v2044, %v2040
        %v2469 = vpack.c.b16 %v2049, %v2045
        %v2470 = vpack.c.b16 %v2050, %v2046
        %v2471 = vpack.c.b16 %v2051, %v2047
        %v2472 = vpack.c.b16 %v2052, %v2048
        %v2473 = vpack.c.b16 %v2057, %v2053
        %v2474 = vpack.c.b16 %v2058, %v2054
        %v2475 = vpack.c.b16 %v2059, %v2055
        %v2476 = vpack.c.b16 %v2060, %v2056
        %v2477 = vpack.c.b16 %v2065, %v2061
        %v2478 = vpack.c.b16 %v2066, %v2062
        %v2479 = vpack.c.b16 %v2067, %v2063
        %v2480 = vpack.c.b16 %v2068, %v2064
        %v2481 = vpack.c.b16 %v2073, %v2069
        %v2482 = vpack.c.b16 %v2074, %v2070
        %v2483 = vpack.c.b16 %v2075, %v2071
        %v2484 = vpack.c.b16 %v2076, %v2072
        %v2485 = vpack.c.b16 %v2081, %v2077
        %v2486 = vpack.c.b16 %v2082, %v2078
        %v2487 = vpack.c.b16 %v2083, %v2079
        %v2488 = vpack.c.b16 %v2084, %v2080
        %v2489 = vpack.c.b16 %v2089, %v2085
        %v2490 = vpack.c.b16 %v2090, %v2086
        %v2491 = vpack.c.b16 %v2091, %v2087
        %v2492 = vpack.c.b16 %v2092, %v2088
        %v2493 = vpack.c.b16 %v2097, %v2093
        %v2494 = vpack.c.b16 %v2098, %v2094
        %v2495 = vpack.c.b16 %v2099, %v2095
        %v2496 = vpack.c.b16 %v2100, %v2096
        %v2497 = vpack.c.b16 %v2105, %v2101
        %v2498 = vpack.c.b16 %v2106, %v2102
        %v2499 = vpack.c.b16 %v2107, %v2103
        %v2500 = vpack.c.b16 %v2108, %v2104
        %v2501 = vpack.c.b16 %v2113, %v2109
        %v2502 = vpack.c.b16 %v2114, %v2110
        %v2503 = vpack.c.b16 %v2115, %v2111
        %v2504 = vpack.c.b16 %v2116, %v2112
        %v2505 = vpack.c.b16 %v2121, %v2117
        %v2506 = vpack.c.b16 %v2122, %v2118
        %v2507 = vpack.c.b16 %v2123, %v2119
        %v2508 = vpack.c.b16 %v2124, %v2120
        %2893 = vmatpush.bf16.msra.mxu0 %v2153
        %2894 = vmatpush.bf16.msra.mxu0 %v2149
        %2895 = vmatpush.bf16.msra.mxu0 %v2145
        %2896 = vmatpush.bf16.msra.mxu0 %v2141
        %2897 = vmatpush.bf16.msra.mxu0 %v2137
        %2898 = vmatpush.bf16.msra.mxu0 %v2133
        %2899 = vmatpush.bf16.msra.mxu0 %v2129
        %2900 = vmatpush.bf16.msra.mxu0 %v2125
        %2901 = vmatmul.bf16.gmra.mxu0 %v493
        %v2902 = vpop.f32.mrf.mxu0
        %v2903 = vadd.f32 0.0, %v2902
        %v2904 = vpop.f32.mrf.mxu0
        %v2905 = vadd.f32 0.0, %v2904
        %2906 = vmatmul.bf16.gmra.mxu0 %v497
        %v2907 = vpop.f32.mrf.mxu0
        %v2908 = vadd.f32 0.0, %v2907
        %v2909 = vpop.f32.mrf.mxu0
        %v2910 = vadd.f32 0.0, %v2909
        %2911 = vdwg.mxu0
        %2912 = vmatpush.bf16.msra.mxu0 %v2185
        %2913 = vmatpush.bf16.msra.mxu0 %v2181
        %2914 = vmatpush.bf16.msra.mxu0 %v2177
        %2915 = vmatpush.bf16.msra.mxu0 %v2173
        %2916 = vmatpush.bf16.msra.mxu0 %v2169
        %2917 = vmatpush.bf16.msra.mxu0 %v2165
        %2918 = vmatpush.bf16.msra.mxu0 %v2161
        %2919 = vmatpush.bf16.msra.mxu0 %v2157
        %2920 = vmatmul.bf16.gmra.mxu0 %v494
        %v2921 = vpop.f32.mrf.mxu0
        %v2922 = vadd.f32 %v2903, %v2921
        %v2923 = vpop.f32.mrf.mxu0
        %v2924 = vadd.f32 %v2905, %v2923
        %2925 = vmatmul.bf16.gmra.mxu0 %v498
        %v2926 = vpop.f32.mrf.mxu0
        %v2927 = vadd.f32 %v2908, %v2926
        %v2928 = vpop.f32.mrf.mxu0
        %v2929 = vadd.f32 %v2910, %v2928
        %2930 = vdwg.mxu0
        %2931 = vmatpush.bf16.msra.mxu0 %v2217
        %2932 = vmatpush.bf16.msra.mxu0 %v2213
        %2933 = vmatpush.bf16.msra.mxu0 %v2209
        %2934 = vmatpush.bf16.msra.mxu0 %v2205
        %2935 = vmatpush.bf16.msra.mxu0 %v2201
        %2936 = vmatpush.bf16.msra.mxu0 %v2197
        %2937 = vmatpush.bf16.msra.mxu0 %v2193
        %2938 = vmatpush.bf16.msra.mxu0 %v2189
        %2939 = vmatmul.bf16.gmra.mxu0 %v495
        %v2940 = vpop.f32.mrf.mxu0
        %v2941 = vadd.f32 %v2922, %v2940
        %v2942 = vpop.f32.mrf.mxu0
        %v2943 = vadd.f32 %v2924, %v2942
        %2944 = vmatmul.bf16.gmra.mxu0 %v499
        %v2945 = vpop.f32.mrf.mxu0
        %v2946 = vadd.f32 %v2927, %v2945
        %v2947 = vpop.f32.mrf.mxu0
        %v2948 = vadd.f32 %v2929, %v2947
        %2949 = vdwg.mxu0
        %2950 = vmatpush.bf16.msra.mxu0 %v2249
        %2951 = vmatpush.bf16.msra.mxu0 %v2245
        %2952 = vmatpush.bf16.msra.mxu0 %v2241
        %2953 = vmatpush.bf16.msra.mxu0 %v2237
        %2954 = vmatpush.bf16.msra.mxu0 %v2233
        %2955 = vmatpush.bf16.msra.mxu0 %v2229
        %2956 = vmatpush.bf16.msra.mxu0 %v2225
        %2957 = vmatpush.bf16.msra.mxu0 %v2221
        %2958 = vmatmul.bf16.gmra.mxu0 %v496
        %v2959 = vpop.f32.mrf.mxu0
        %v2960 = vadd.f32 %v2941, %v2959
        %v2961 = vpop.f32.mrf.mxu0
        %v2962 = vadd.f32 %v2943, %v2961
        %2963 = vmatmul.bf16.gmra.mxu0 %v500
        %v2964 = vpop.f32.mrf.mxu0
        %v2965 = vadd.f32 %v2946, %v2964
        %v2966 = vpop.f32.mrf.mxu0
        %v2967 = vadd.f32 %v2948, %v2966
        %2968 = vdwg.mxu0
        %2969 = vmatpush.bf16.msra.mxu0 %v2281
        %2970 = vmatpush.bf16.msra.mxu0 %v2277
        %2971 = vmatpush.bf16.msra.mxu0 %v2273
        %2972 = vmatpush.bf16.msra.mxu0 %v2269
        %2973 = vmatpush.bf16.msra.mxu0 %v2265
        %2974 = vmatpush.bf16.msra.mxu0 %v2261
        %2975 = vmatpush.bf16.msra.mxu0 %v2257
        %2976 = vmatpush.bf16.msra.mxu0 %v2253
        %2977 = vmatmul.bf16.gmra.mxu0 %v533
        %v2978 = vpop.f32.mrf.mxu0
        %v2979 = vadd.f32 %v2960, %v2978
        %v2980 = vpop.f32.mrf.mxu0
        %v2981 = vadd.f32 %v2962, %v2980
        %2982 = vmatmul.bf16.gmra.mxu0 %v537
        %v2983 = vpop.f32.mrf.mxu0
        %v2984 = vadd.f32 %v2965, %v2983
        %v2985 = vpop.f32.mrf.mxu0
        %v2986 = vadd.f32 %v2967, %v2985
        %2987 = vdwg.mxu0
        %2988 = vmatpush.bf16.msra.mxu0 %v2313
        %2989 = vmatpush.bf16.msra.mxu0 %v2309
        %2990 = vmatpush.bf16.msra.mxu0 %v2305
        %2991 = vmatpush.bf16.msra.mxu0 %v2301
        %2992 = vmatpush.bf16.msra.mxu0 %v2297
        %2993 = vmatpush.bf16.msra.mxu0 %v2293
        %2994 = vmatpush.bf16.msra.mxu0 %v2289
        %2995 = vmatpush.bf16.msra.mxu0 %v2285
        %2996 = vmatmul.bf16.gmra.mxu0 %v534
        %v2997 = vpop.f32.mrf.mxu0
        %v2998 = vadd.f32 %v2979, %v2997
        %v2999 = vpop.f32.mrf.mxu0
        %v3000 = vadd.f32 %v2981, %v2999
        %3001 = vmatmul.bf16.gmra.mxu0 %v538
        %v3002 = vpop.f32.mrf.mxu0
        %v3003 = vadd.f32 %v2984, %v3002
        %v3004 = vpop.f32.mrf.mxu0
        %v3005 = vadd.f32 %v2986, %v3004
        %3006 = vdwg.mxu0
        %3007 = vmatpush.bf16.msra.mxu0 %v2345
        %3008 = vmatpush.bf16.msra.mxu0 %v2341
        %3009 = vmatpush.bf16.msra.mxu0 %v2337
        %3010 = vmatpush.bf16.msra.mxu0 %v2333
        %3011 = vmatpush.bf16.msra.mxu0 %v2329
        %3012 = vmatpush.bf16.msra.mxu0 %v2325
        %3013 = vmatpush.bf16.msra.mxu0 %v2321
        %3014 = vmatpush.bf16.msra.mxu0 %v2317
        %3015 = vmatmul.bf16.gmra.mxu0 %v535
        %v3016 = vpop.f32.mrf.mxu0
        %v3017 = vadd.f32 %v2998, %v3016
        %v3018 = vpop.f32.mrf.mxu0
        %v3019 = vadd.f32 %v3000, %v3018
        %3020 = vmatmul.bf16.gmra.mxu0 %v539
        %v3021 = vpop.f32.mrf.mxu0
        %v3022 = vadd.f32 %v3003, %v3021
        %v3023 = vpop.f32.mrf.mxu0
        %v3024 = vadd.f32 %v3005, %v3023
        %3025 = vdwg.mxu0
        %3026 = vmatpush.bf16.msra.mxu0 %v2377
        %3027 = vmatpush.bf16.msra.mxu0 %v2373
        %3028 = vmatpush.bf16.msra.mxu0 %v2369
        %3029 = vmatpush.bf16.msra.mxu0 %v2365
        %3030 = vmatpush.bf16.msra.mxu0 %v2361
        %3031 = vmatpush.bf16.msra.mxu0 %v2357
        %3032 = vmatpush.bf16.msra.mxu0 %v2353
        %3033 = vmatpush.bf16.msra.mxu0 %v2349
        %3034 = vmatmul.bf16.gmra.mxu0 %v536
        %v3035 = vpop.f32.mrf.mxu0
        %v3036 = vadd.f32 %v3017, %v3035
        %v3037 = vpop.f32.mrf.mxu0
        %v3038 = vadd.f32 %v3019, %v3037
        %3039 = vmatmul.bf16.gmra.mxu0 %v540
        %v3040 = vpop.f32.mrf.mxu0
        %v3041 = vadd.f32 %v3022, %v3040
        %v3042 = vpop.f32.mrf.mxu0
        %v3043 = vadd.f32 %v3024, %v3042
        %3044 = vdwg.mxu0
        %3045 = vmatpush.bf16.msra.mxu0 %v2409
        %3046 = vmatpush.bf16.msra.mxu0 %v2405
        %3047 = vmatpush.bf16.msra.mxu0 %v2401
        %3048 = vmatpush.bf16.msra.mxu0 %v2397
        %3049 = vmatpush.bf16.msra.mxu0 %v2393
        %3050 = vmatpush.bf16.msra.mxu0 %v2389
        %3051 = vmatpush.bf16.msra.mxu0 %v2385
        %3052 = vmatpush.bf16.msra.mxu0 %v2381
        %3053 = vmatmul.bf16.gmra.mxu0 %v573
        %v3054 = vpop.f32.mrf.mxu0
        %v3055 = vadd.f32 %v3036, %v3054
        %v3056 = vpop.f32.mrf.mxu0
        %v3057 = vadd.f32 %v3038, %v3056
        %3058 = vmatmul.bf16.gmra.mxu0 %v577
        %v3059 = vpop.f32.mrf.mxu0
        %v3060 = vadd.f32 %v3041, %v3059
        %v3061 = vpop.f32.mrf.mxu0
        %v3062 = vadd.f32 %v3043, %v3061
        %3063 = vdwg.mxu0
        %3064 = vmatpush.bf16.msra.mxu0 %v2441
        %3065 = vmatpush.bf16.msra.mxu0 %v2437
        %3066 = vmatpush.bf16.msra.mxu0 %v2433
        %3067 = vmatpush.bf16.msra.mxu0 %v2429
        %3068 = vmatpush.bf16.msra.mxu0 %v2425
        %3069 = vmatpush.bf16.msra.mxu0 %v2421
        %3070 = vmatpush.bf16.msra.mxu0 %v2417
        %3071 = vmatpush.bf16.msra.mxu0 %v2413
        %3072 = vmatmul.bf16.gmra.mxu0 %v574
        %v3073 = vpop.f32.mrf.mxu0
        %v3074 = vadd.f32 %v3055, %v3073
        %v3075 = vpop.f32.mrf.mxu0
        %v3076 = vadd.f32 %v3057, %v3075
        %3077 = vmatmul.bf16.gmra.mxu0 %v578
        %v3078 = vpop.f32.mrf.mxu0
        %v3079 = vadd.f32 %v3060, %v3078
        %v3080 = vpop.f32.mrf.mxu0
        %v3081 = vadd.f32 %v3062, %v3080
        %3082 = vdwg.mxu0
        %3083 = vmatpush.bf16.msra.mxu0 %v2473
        %3084 = vmatpush.bf16.msra.mxu0 %v2469
        %3085 = vmatpush.bf16.msra.mxu0 %v2465
        %3086 = vmatpush.bf16.msra.mxu0 %v2461
        %3087 = vmatpush.bf16.msra.mxu0 %v2457
        %3088 = vmatpush.bf16.msra.mxu0 %v2453
        %3089 = vmatpush.bf16.msra.mxu0 %v2449
        %3090 = vmatpush.bf16.msra.mxu0 %v2445
        %3091 = vmatmul.bf16.gmra.mxu0 %v575
        %v3092 = vpop.f32.mrf.mxu0
        %v3093 = vadd.f32 %v3074, %v3092
        %v3094 = vpop.f32.mrf.mxu0
        %v3095 = vadd.f32 %v3076, %v3094
        %3096 = vmatmul.bf16.gmra.mxu0 %v579
        %v3097 = vpop.f32.mrf.mxu0
        %v3098 = vadd.f32 %v3079, %v3097
        %v3099 = vpop.f32.mrf.mxu0
        %v3100 = vadd.f32 %v3081, %v3099
        %3101 = vdwg.mxu0
        %3102 = vmatpush.bf16.msra.mxu0 %v2505
        %3103 = vmatpush.bf16.msra.mxu0 %v2501
        %3104 = vmatpush.bf16.msra.mxu0 %v2497
        %3105 = vmatpush.bf16.msra.mxu0 %v2493
        %3106 = vmatpush.bf16.msra.mxu0 %v2489
        %3107 = vmatpush.bf16.msra.mxu0 %v2485
        %3108 = vmatpush.bf16.msra.mxu0 %v2481
        %3109 = vmatpush.bf16.msra.mxu0 %v2477
        %3110 = vmatmul.bf16.gmra.mxu0 %v576
        %v3111 = vpop.f32.mrf.mxu0
        %v3112 = vadd.f32 %v3093, %v3111
        %v3113 = vpop.f32.mrf.mxu0
        %v3114 = vadd.f32 %v3095, %v3113
        %3115 = vmatmul.bf16.gmra.mxu0 %v580
        %v3116 = vpop.f32.mrf.mxu0
        %v3117 = vadd.f32 %v3098, %v3116
        %v3118 = vpop.f32.mrf.mxu0
        %v3119 = vadd.f32 %v3100, %v3118
        %3120 = vdwg.mxu0
        %3121 = vmatpush.bf16.msra.mxu0 %v2154
        %3122 = vmatpush.bf16.msra.mxu0 %v2150
        %3123 = vmatpush.bf16.msra.mxu0 %v2146
        %3124 = vmatpush.bf16.msra.mxu0 %v2142
        %3125 = vmatpush.bf16.msra.mxu0 %v2138
        %3126 = vmatpush.bf16.msra.mxu0 %v2134
        %3127 = vmatpush.bf16.msra.mxu0 %v2130
        %3128 = vmatpush.bf16.msra.mxu0 %v2126
        %3129 = vmatmul.bf16.gmra.mxu0 %v493
        %v3130 = vpop.f32.mrf.mxu0
        %v3131 = vadd.f32 0.0, %v3130
        %v3132 = vpop.f32.mrf.mxu0
        %v3133 = vadd.f32 0.0, %v3132
        %3134 = vmatmul.bf16.gmra.mxu0 %v497
        %v3135 = vpop.f32.mrf.mxu0
        %v3136 = vadd.f32 0.0, %v3135
        %v3137 = vpop.f32.mrf.mxu0
        %v3138 = vadd.f32 0.0, %v3137
        %3139 = vdwg.mxu0
        %3140 = vmatpush.bf16.msra.mxu0 %v2186
        %3141 = vmatpush.bf16.msra.mxu0 %v2182
        %3142 = vmatpush.bf16.msra.mxu0 %v2178
        %3143 = vmatpush.bf16.msra.mxu0 %v2174
        %3144 = vmatpush.bf16.msra.mxu0 %v2170
        %3145 = vmatpush.bf16.msra.mxu0 %v2166
        %3146 = vmatpush.bf16.msra.mxu0 %v2162
        %3147 = vmatpush.bf16.msra.mxu0 %v2158
        %3148 = vmatmul.bf16.gmra.mxu0 %v494
        %v3149 = vpop.f32.mrf.mxu0
        %v3150 = vadd.f32 %v3131, %v3149
        %v3151 = vpop.f32.mrf.mxu0
        %v3152 = vadd.f32 %v3133, %v3151
        %3153 = vmatmul.bf16.gmra.mxu0 %v498
        %v3154 = vpop.f32.mrf.mxu0
        %v3155 = vadd.f32 %v3136, %v3154
        %v3156 = vpop.f32.mrf.mxu0
        %v3157 = vadd.f32 %v3138, %v3156
        %3158 = vdwg.mxu0
        %3159 = vmatpush.bf16.msra.mxu0 %v2218
        %3160 = vmatpush.bf16.msra.mxu0 %v2214
        %3161 = vmatpush.bf16.msra.mxu0 %v2210
        %3162 = vmatpush.bf16.msra.mxu0 %v2206
        %3163 = vmatpush.bf16.msra.mxu0 %v2202
        %3164 = vmatpush.bf16.msra.mxu0 %v2198
        %3165 = vmatpush.bf16.msra.mxu0 %v2194
        %3166 = vmatpush.bf16.msra.mxu0 %v2190
        %3167 = vmatmul.bf16.gmra.mxu0 %v495
        %v3168 = vpop.f32.mrf.mxu0
        %v3169 = vadd.f32 %v3150, %v3168
        %v3170 = vpop.f32.mrf.mxu0
        %v3171 = vadd.f32 %v3152, %v3170
        %3172 = vmatmul.bf16.gmra.mxu0 %v499
        %v3173 = vpop.f32.mrf.mxu0
        %v3174 = vadd.f32 %v3155, %v3173
        %v3175 = vpop.f32.mrf.mxu0
        %v3176 = vadd.f32 %v3157, %v3175
        %3177 = vdwg.mxu0
        %3178 = vmatpush.bf16.msra.mxu0 %v2250
        %3179 = vmatpush.bf16.msra.mxu0 %v2246
        %3180 = vmatpush.bf16.msra.mxu0 %v2242
        %3181 = vmatpush.bf16.msra.mxu0 %v2238
        %3182 = vmatpush.bf16.msra.mxu0 %v2234
        %3183 = vmatpush.bf16.msra.mxu0 %v2230
        %3184 = vmatpush.bf16.msra.mxu0 %v2226
        %3185 = vmatpush.bf16.msra.mxu0 %v2222
        %3186 = vmatmul.bf16.gmra.mxu0 %v496
        %v3187 = vpop.f32.mrf.mxu0
        %v3188 = vadd.f32 %v3169, %v3187
        %v3189 = vpop.f32.mrf.mxu0
        %v3190 = vadd.f32 %v3171, %v3189
        %3191 = vmatmul.bf16.gmra.mxu0 %v500
        %v3192 = vpop.f32.mrf.mxu0
        %v3193 = vadd.f32 %v3174, %v3192
        %v3194 = vpop.f32.mrf.mxu0
        %v3195 = vadd.f32 %v3176, %v3194
        %3196 = vdwg.mxu0
        %3197 = vmatpush.bf16.msra.mxu0 %v2282
        %3198 = vmatpush.bf16.msra.mxu0 %v2278
        %3199 = vmatpush.bf16.msra.mxu0 %v2274
        %3200 = vmatpush.bf16.msra.mxu0 %v2270
        %3201 = vmatpush.bf16.msra.mxu0 %v2266
        %3202 = vmatpush.bf16.msra.mxu0 %v2262
        %3203 = vmatpush.bf16.msra.mxu0 %v2258
        %3204 = vmatpush.bf16.msra.mxu0 %v2254
        %3205 = vmatmul.bf16.gmra.mxu0 %v533
        %v3206 = vpop.f32.mrf.mxu0
        %v3207 = vadd.f32 %v3188, %v3206
        %v3208 = vpop.f32.mrf.mxu0
        %v3209 = vadd.f32 %v3190, %v3208
        %3210 = vmatmul.bf16.gmra.mxu0 %v537
        %v3211 = vpop.f32.mrf.mxu0
        %v3212 = vadd.f32 %v3193, %v3211
        %v3213 = vpop.f32.mrf.mxu0
        %v3214 = vadd.f32 %v3195, %v3213
        %3215 = vdwg.mxu0
        %3216 = vmatpush.bf16.msra.mxu0 %v2314
        %3217 = vmatpush.bf16.msra.mxu0 %v2310
        %3218 = vmatpush.bf16.msra.mxu0 %v2306
        %3219 = vmatpush.bf16.msra.mxu0 %v2302
        %3220 = vmatpush.bf16.msra.mxu0 %v2298
        %3221 = vmatpush.bf16.msra.mxu0 %v2294
        %3222 = vmatpush.bf16.msra.mxu0 %v2290
        %3223 = vmatpush.bf16.msra.mxu0 %v2286
        %3224 = vmatmul.bf16.gmra.mxu0 %v534
        %v3225 = vpop.f32.mrf.mxu0
        %v3226 = vadd.f32 %v3207, %v3225
        %v3227 = vpop.f32.mrf.mxu0
        %v3228 = vadd.f32 %v3209, %v3227
        %3229 = vmatmul.bf16.gmra.mxu0 %v538
        %v3230 = vpop.f32.mrf.mxu0
        %v3231 = vadd.f32 %v3212, %v3230
        %v3232 = vpop.f32.mrf.mxu0
        %v3233 = vadd.f32 %v3214, %v3232
        %3234 = vdwg.mxu0
        %3235 = vmatpush.bf16.msra.mxu0 %v2346
        %3236 = vmatpush.bf16.msra.mxu0 %v2342
        %3237 = vmatpush.bf16.msra.mxu0 %v2338
        %3238 = vmatpush.bf16.msra.mxu0 %v2334
        %3239 = vmatpush.bf16.msra.mxu0 %v2330
        %3240 = vmatpush.bf16.msra.mxu0 %v2326
        %3241 = vmatpush.bf16.msra.mxu0 %v2322
        %3242 = vmatpush.bf16.msra.mxu0 %v2318
        %3243 = vmatmul.bf16.gmra.mxu0 %v535
        %v3244 = vpop.f32.mrf.mxu0
        %v3245 = vadd.f32 %v3226, %v3244
        %v3246 = vpop.f32.mrf.mxu0
        %v3247 = vadd.f32 %v3228, %v3246
        %3248 = vmatmul.bf16.gmra.mxu0 %v539
        %v3249 = vpop.f32.mrf.mxu0
        %v3250 = vadd.f32 %v3231, %v3249
        %v3251 = vpop.f32.mrf.mxu0
        %v3252 = vadd.f32 %v3233, %v3251
        %3253 = vdwg.mxu0
        %3254 = vmatpush.bf16.msra.mxu0 %v2378
        %3255 = vmatpush.bf16.msra.mxu0 %v2374
        %3256 = vmatpush.bf16.msra.mxu0 %v2370
        %3257 = vmatpush.bf16.msra.mxu0 %v2366
        %3258 = vmatpush.bf16.msra.mxu0 %v2362
        %3259 = vmatpush.bf16.msra.mxu0 %v2358
        %3260 = vmatpush.bf16.msra.mxu0 %v2354
        %3261 = vmatpush.bf16.msra.mxu0 %v2350
        %3262 = vmatmul.bf16.gmra.mxu0 %v536
        %v3263 = vpop.f32.mrf.mxu0
        %v3264 = vadd.f32 %v3245, %v3263
        %v3265 = vpop.f32.mrf.mxu0
        %v3266 = vadd.f32 %v3247, %v3265
        %3267 = vmatmul.bf16.gmra.mxu0 %v540
        %v3268 = vpop.f32.mrf.mxu0
        %v3269 = vadd.f32 %v3250, %v3268
        %v3270 = vpop.f32.mrf.mxu0
        %v3271 = vadd.f32 %v3252, %v3270
        %3272 = vdwg.mxu0
        %3273 = vmatpush.bf16.msra.mxu0 %v2410
        %3274 = vmatpush.bf16.msra.mxu0 %v2406
        %3275 = vmatpush.bf16.msra.mxu0 %v2402
        %3276 = vmatpush.bf16.msra.mxu0 %v2398
        %3277 = vmatpush.bf16.msra.mxu0 %v2394
        %3278 = vmatpush.bf16.msra.mxu0 %v2390
        %3279 = vmatpush.bf16.msra.mxu0 %v2386
        %3280 = vmatpush.bf16.msra.mxu0 %v2382
        %3281 = vmatmul.bf16.gmra.mxu0 %v573
        %v3282 = vpop.f32.mrf.mxu0
        %v3283 = vadd.f32 %v3264, %v3282
        %v3284 = vpop.f32.mrf.mxu0
        %v3285 = vadd.f32 %v3266, %v3284
        %3286 = vmatmul.bf16.gmra.mxu0 %v577
        %v3287 = vpop.f32.mrf.mxu0
        %v3288 = vadd.f32 %v3269, %v3287
        %v3289 = vpop.f32.mrf.mxu0
        %v3290 = vadd.f32 %v3271, %v3289
        %3291 = vdwg.mxu0
        %3292 = vmatpush.bf16.msra.mxu0 %v2442
        %3293 = vmatpush.bf16.msra.mxu0 %v2438
        %3294 = vmatpush.bf16.msra.mxu0 %v2434
        %3295 = vmatpush.bf16.msra.mxu0 %v2430
        %3296 = vmatpush.bf16.msra.mxu0 %v2426
        %3297 = vmatpush.bf16.msra.mxu0 %v2422
        %3298 = vmatpush.bf16.msra.mxu0 %v2418
        %3299 = vmatpush.bf16.msra.mxu0 %v2414
        %3300 = vmatmul.bf16.gmra.mxu0 %v574
        %v3301 = vpop.f32.mrf.mxu0
        %v3302 = vadd.f32 %v3283, %v3301
        %v3303 = vpop.f32.mrf.mxu0
        %v3304 = vadd.f32 %v3285, %v3303
        %3305 = vmatmul.bf16.gmra.mxu0 %v578
        %v3306 = vpop.f32.mrf.mxu0
        %v3307 = vadd.f32 %v3288, %v3306
        %v3308 = vpop.f32.mrf.mxu0
        %v3309 = vadd.f32 %v3290, %v3308
        %3310 = vdwg.mxu0
        %3311 = vmatpush.bf16.msra.mxu0 %v2474
        %3312 = vmatpush.bf16.msra.mxu0 %v2470
        %3313 = vmatpush.bf16.msra.mxu0 %v2466
        %3314 = vmatpush.bf16.msra.mxu0 %v2462
        %3315 = vmatpush.bf16.msra.mxu0 %v2458
        %3316 = vmatpush.bf16.msra.mxu0 %v2454
        %3317 = vmatpush.bf16.msra.mxu0 %v2450
        %3318 = vmatpush.bf16.msra.mxu0 %v2446
        %3319 = vmatmul.bf16.gmra.mxu0 %v575
        %v3320 = vpop.f32.mrf.mxu0
        %v3321 = vadd.f32 %v3302, %v3320
        %v3322 = vpop.f32.mrf.mxu0
        %v3323 = vadd.f32 %v3304, %v3322
        %3324 = vmatmul.bf16.gmra.mxu0 %v579
        %v3325 = vpop.f32.mrf.mxu0
        %v3326 = vadd.f32 %v3307, %v3325
        %v3327 = vpop.f32.mrf.mxu0
        %v3328 = vadd.f32 %v3309, %v3327
        %3329 = vdwg.mxu0
        %3330 = vmatpush.bf16.msra.mxu0 %v2506
        %3331 = vmatpush.bf16.msra.mxu0 %v2502
        %3332 = vmatpush.bf16.msra.mxu0 %v2498
        %3333 = vmatpush.bf16.msra.mxu0 %v2494
        %3334 = vmatpush.bf16.msra.mxu0 %v2490
        %3335 = vmatpush.bf16.msra.mxu0 %v2486
        %3336 = vmatpush.bf16.msra.mxu0 %v2482
        %3337 = vmatpush.bf16.msra.mxu0 %v2478
        %3338 = vmatmul.bf16.gmra.mxu0 %v576
        %v3339 = vpop.f32.mrf.mxu0
        %v3340 = vadd.f32 %v3321, %v3339
        %v3341 = vpop.f32.mrf.mxu0
        %v3342 = vadd.f32 %v3323, %v3341
        %3343 = vmatmul.bf16.gmra.mxu0 %v580
        %v3344 = vpop.f32.mrf.mxu0
        %v3345 = vadd.f32 %v3326, %v3344
        %v3346 = vpop.f32.mrf.mxu0
        %v3347 = vadd.f32 %v3328, %v3346
        %3348 = vdwg.mxu0
        %3349 = vmatpush.bf16.msra.mxu0 %v2155
        %3350 = vmatpush.bf16.msra.mxu0 %v2151
        %3351 = vmatpush.bf16.msra.mxu0 %v2147
        %3352 = vmatpush.bf16.msra.mxu0 %v2143
        %3353 = vmatpush.bf16.msra.mxu0 %v2139
        %3354 = vmatpush.bf16.msra.mxu0 %v2135
        %3355 = vmatpush.bf16.msra.mxu0 %v2131
        %3356 = vmatpush.bf16.msra.mxu0 %v2127
        %3357 = vmatmul.bf16.gmra.mxu0 %v493
        %v3358 = vpop.f32.mrf.mxu0
        %v3359 = vadd.f32 0.0, %v3358
        %v3360 = vpop.f32.mrf.mxu0
        %v3361 = vadd.f32 0.0, %v3360
        %3362 = vmatmul.bf16.gmra.mxu0 %v497
        %v3363 = vpop.f32.mrf.mxu0
        %v3364 = vadd.f32 0.0, %v3363
        %v3365 = vpop.f32.mrf.mxu0
        %v3366 = vadd.f32 0.0, %v3365
        %3367 = vdwg.mxu0
        %3368 = vmatpush.bf16.msra.mxu0 %v2187
        %3369 = vmatpush.bf16.msra.mxu0 %v2183
        %3370 = vmatpush.bf16.msra.mxu0 %v2179
        %3371 = vmatpush.bf16.msra.mxu0 %v2175
        %3372 = vmatpush.bf16.msra.mxu0 %v2171
        %3373 = vmatpush.bf16.msra.mxu0 %v2167
        %3374 = vmatpush.bf16.msra.mxu0 %v2163
        %3375 = vmatpush.bf16.msra.mxu0 %v2159
        %3376 = vmatmul.bf16.gmra.mxu0 %v494
        %v3377 = vpop.f32.mrf.mxu0
        %v3378 = vadd.f32 %v3359, %v3377
        %v3379 = vpop.f32.mrf.mxu0
        %v3380 = vadd.f32 %v3361, %v3379
        %3381 = vmatmul.bf16.gmra.mxu0 %v498
        %v3382 = vpop.f32.mrf.mxu0
        %v3383 = vadd.f32 %v3364, %v3382
        %v3384 = vpop.f32.mrf.mxu0
        %v3385 = vadd.f32 %v3366, %v3384
        %3386 = vdwg.mxu0
        %3387 = vmatpush.bf16.msra.mxu0 %v2219
        %3388 = vmatpush.bf16.msra.mxu0 %v2215
        %3389 = vmatpush.bf16.msra.mxu0 %v2211
        %3390 = vmatpush.bf16.msra.mxu0 %v2207
        %3391 = vmatpush.bf16.msra.mxu0 %v2203
        %3392 = vmatpush.bf16.msra.mxu0 %v2199
        %3393 = vmatpush.bf16.msra.mxu0 %v2195
        %3394 = vmatpush.bf16.msra.mxu0 %v2191
        %3395 = vmatmul.bf16.gmra.mxu0 %v495
        %v3396 = vpop.f32.mrf.mxu0
        %v3397 = vadd.f32 %v3378, %v3396
        %v3398 = vpop.f32.mrf.mxu0
        %v3399 = vadd.f32 %v3380, %v3398
        %3400 = vmatmul.bf16.gmra.mxu0 %v499
        %v3401 = vpop.f32.mrf.mxu0
        %v3402 = vadd.f32 %v3383, %v3401
        %v3403 = vpop.f32.mrf.mxu0
        %v3404 = vadd.f32 %v3385, %v3403
        %3405 = vdwg.mxu0
        %3406 = vmatpush.bf16.msra.mxu0 %v2251
        %3407 = vmatpush.bf16.msra.mxu0 %v2247
        %3408 = vmatpush.bf16.msra.mxu0 %v2243
        %3409 = vmatpush.bf16.msra.mxu0 %v2239
        %3410 = vmatpush.bf16.msra.mxu0 %v2235
        %3411 = vmatpush.bf16.msra.mxu0 %v2231
        %3412 = vmatpush.bf16.msra.mxu0 %v2227
        %3413 = vmatpush.bf16.msra.mxu0 %v2223
        %3414 = vmatmul.bf16.gmra.mxu0 %v496
        %v3415 = vpop.f32.mrf.mxu0
        %v3416 = vadd.f32 %v3397, %v3415
        %v3417 = vpop.f32.mrf.mxu0
        %v3418 = vadd.f32 %v3399, %v3417
        %3419 = vmatmul.bf16.gmra.mxu0 %v500
        %v3420 = vpop.f32.mrf.mxu0
        %v3421 = vadd.f32 %v3402, %v3420
        %v3422 = vpop.f32.mrf.mxu0
        %v3423 = vadd.f32 %v3404, %v3422
        %3424 = vdwg.mxu0
        %3425 = vmatpush.bf16.msra.mxu0 %v2283
        %3426 = vmatpush.bf16.msra.mxu0 %v2279
        %3427 = vmatpush.bf16.msra.mxu0 %v2275
        %3428 = vmatpush.bf16.msra.mxu0 %v2271
        %3429 = vmatpush.bf16.msra.mxu0 %v2267
        %3430 = vmatpush.bf16.msra.mxu0 %v2263
        %3431 = vmatpush.bf16.msra.mxu0 %v2259
        %3432 = vmatpush.bf16.msra.mxu0 %v2255
        %3433 = vmatmul.bf16.gmra.mxu0 %v533
        %v3434 = vpop.f32.mrf.mxu0
        %v3435 = vadd.f32 %v3416, %v3434
        %v3436 = vpop.f32.mrf.mxu0
        %v3437 = vadd.f32 %v3418, %v3436
        %3438 = vmatmul.bf16.gmra.mxu0 %v537
        %v3439 = vpop.f32.mrf.mxu0
        %v3440 = vadd.f32 %v3421, %v3439
        %v3441 = vpop.f32.mrf.mxu0
        %v3442 = vadd.f32 %v3423, %v3441
        %3443 = vdwg.mxu0
        %3444 = vmatpush.bf16.msra.mxu0 %v2315
        %3445 = vmatpush.bf16.msra.mxu0 %v2311
        %3446 = vmatpush.bf16.msra.mxu0 %v2307
        %3447 = vmatpush.bf16.msra.mxu0 %v2303
        %3448 = vmatpush.bf16.msra.mxu0 %v2299
        %3449 = vmatpush.bf16.msra.mxu0 %v2295
        %3450 = vmatpush.bf16.msra.mxu0 %v2291
        %3451 = vmatpush.bf16.msra.mxu0 %v2287
        %3452 = vmatmul.bf16.gmra.mxu0 %v534
        %v3453 = vpop.f32.mrf.mxu0
        %v3454 = vadd.f32 %v3435, %v3453
        %v3455 = vpop.f32.mrf.mxu0
        %v3456 = vadd.f32 %v3437, %v3455
        %3457 = vmatmul.bf16.gmra.mxu0 %v538
        %v3458 = vpop.f32.mrf.mxu0
        %v3459 = vadd.f32 %v3440, %v3458
        %v3460 = vpop.f32.mrf.mxu0
        %v3461 = vadd.f32 %v3442, %v3460
        %3462 = vdwg.mxu0
        %3463 = vmatpush.bf16.msra.mxu0 %v2347
        %3464 = vmatpush.bf16.msra.mxu0 %v2343
        %3465 = vmatpush.bf16.msra.mxu0 %v2339
        %3466 = vmatpush.bf16.msra.mxu0 %v2335
        %3467 = vmatpush.bf16.msra.mxu0 %v2331
        %3468 = vmatpush.bf16.msra.mxu0 %v2327
        %3469 = vmatpush.bf16.msra.mxu0 %v2323
        %3470 = vmatpush.bf16.msra.mxu0 %v2319
        %3471 = vmatmul.bf16.gmra.mxu0 %v535
        %v3472 = vpop.f32.mrf.mxu0
        %v3473 = vadd.f32 %v3454, %v3472
        %v3474 = vpop.f32.mrf.mxu0
        %v3475 = vadd.f32 %v3456, %v3474
        %3476 = vmatmul.bf16.gmra.mxu0 %v539
        %v3477 = vpop.f32.mrf.mxu0
        %v3478 = vadd.f32 %v3459, %v3477
        %v3479 = vpop.f32.mrf.mxu0
        %v3480 = vadd.f32 %v3461, %v3479
        %3481 = vdwg.mxu0
        %3482 = vmatpush.bf16.msra.mxu0 %v2379
        %3483 = vmatpush.bf16.msra.mxu0 %v2375
        %3484 = vmatpush.bf16.msra.mxu0 %v2371
        %3485 = vmatpush.bf16.msra.mxu0 %v2367
        %3486 = vmatpush.bf16.msra.mxu0 %v2363
        %3487 = vmatpush.bf16.msra.mxu0 %v2359
        %3488 = vmatpush.bf16.msra.mxu0 %v2355
        %3489 = vmatpush.bf16.msra.mxu0 %v2351
        %3490 = vmatmul.bf16.gmra.mxu0 %v536
        %v3491 = vpop.f32.mrf.mxu0
        %v3492 = vadd.f32 %v3473, %v3491
        %v3493 = vpop.f32.mrf.mxu0
        %v3494 = vadd.f32 %v3475, %v3493
        %3495 = vmatmul.bf16.gmra.mxu0 %v540
        %v3496 = vpop.f32.mrf.mxu0
        %v3497 = vadd.f32 %v3478, %v3496
        %v3498 = vpop.f32.mrf.mxu0
        %v3499 = vadd.f32 %v3480, %v3498
        %3500 = vdwg.mxu0
        %3501 = vmatpush.bf16.msra.mxu0 %v2411
        %3502 = vmatpush.bf16.msra.mxu0 %v2407
        %3503 = vmatpush.bf16.msra.mxu0 %v2403
        %3504 = vmatpush.bf16.msra.mxu0 %v2399
        %3505 = vmatpush.bf16.msra.mxu0 %v2395
        %3506 = vmatpush.bf16.msra.mxu0 %v2391
        %3507 = vmatpush.bf16.msra.mxu0 %v2387
        %3508 = vmatpush.bf16.msra.mxu0 %v2383
        %3509 = vmatmul.bf16.gmra.mxu0 %v573
        %v3510 = vpop.f32.mrf.mxu0
        %v3511 = vadd.f32 %v3492, %v3510
        %v3512 = vpop.f32.mrf.mxu0
        %v3513 = vadd.f32 %v3494, %v3512
        %3514 = vmatmul.bf16.gmra.mxu0 %v577
        %v3515 = vpop.f32.mrf.mxu0
        %v3516 = vadd.f32 %v3497, %v3515
        %v3517 = vpop.f32.mrf.mxu0
        %v3518 = vadd.f32 %v3499, %v3517
        %3519 = vdwg.mxu0
        %3520 = vmatpush.bf16.msra.mxu0 %v2443
        %3521 = vmatpush.bf16.msra.mxu0 %v2439
        %3522 = vmatpush.bf16.msra.mxu0 %v2435
        %3523 = vmatpush.bf16.msra.mxu0 %v2431
        %3524 = vmatpush.bf16.msra.mxu0 %v2427
        %3525 = vmatpush.bf16.msra.mxu0 %v2423
        %3526 = vmatpush.bf16.msra.mxu0 %v2419
        %3527 = vmatpush.bf16.msra.mxu0 %v2415
        %3528 = vmatmul.bf16.gmra.mxu0 %v574
        %v3529 = vpop.f32.mrf.mxu0
        %v3530 = vadd.f32 %v3511, %v3529
        %v3531 = vpop.f32.mrf.mxu0
        %v3532 = vadd.f32 %v3513, %v3531
        %3533 = vmatmul.bf16.gmra.mxu0 %v578
        %v3534 = vpop.f32.mrf.mxu0
        %v3535 = vadd.f32 %v3516, %v3534
        %v3536 = vpop.f32.mrf.mxu0
        %v3537 = vadd.f32 %v3518, %v3536
        %3538 = vdwg.mxu0
        %3539 = vmatpush.bf16.msra.mxu0 %v2475
        %3540 = vmatpush.bf16.msra.mxu0 %v2471
        %3541 = vmatpush.bf16.msra.mxu0 %v2467
        %3542 = vmatpush.bf16.msra.mxu0 %v2463
        %3543 = vmatpush.bf16.msra.mxu0 %v2459
        %3544 = vmatpush.bf16.msra.mxu0 %v2455
        %3545 = vmatpush.bf16.msra.mxu0 %v2451
        %3546 = vmatpush.bf16.msra.mxu0 %v2447
        %3547 = vmatmul.bf16.gmra.mxu0 %v575
        %v3548 = vpop.f32.mrf.mxu0
        %v3549 = vadd.f32 %v3530, %v3548
        %v3550 = vpop.f32.mrf.mxu0
        %v3551 = vadd.f32 %v3532, %v3550
        %3552 = vmatmul.bf16.gmra.mxu0 %v579
        %v3553 = vpop.f32.mrf.mxu0
        %v3554 = vadd.f32 %v3535, %v3553
        %v3555 = vpop.f32.mrf.mxu0
        %v3556 = vadd.f32 %v3537, %v3555
        %3557 = vdwg.mxu0
        %3558 = vmatpush.bf16.msra.mxu0 %v2507
        %3559 = vmatpush.bf16.msra.mxu0 %v2503
        %3560 = vmatpush.bf16.msra.mxu0 %v2499
        %3561 = vmatpush.bf16.msra.mxu0 %v2495
        %3562 = vmatpush.bf16.msra.mxu0 %v2491
        %3563 = vmatpush.bf16.msra.mxu0 %v2487
        %3564 = vmatpush.bf16.msra.mxu0 %v2483
        %3565 = vmatpush.bf16.msra.mxu0 %v2479
        %3566 = vmatmul.bf16.gmra.mxu0 %v576
        %v3567 = vpop.f32.mrf.mxu0
        %v3568 = vadd.f32 %v3549, %v3567
        %v3569 = vpop.f32.mrf.mxu0
        %v3570 = vadd.f32 %v3551, %v3569
        %3571 = vmatmul.bf16.gmra.mxu0 %v580
        %v3572 = vpop.f32.mrf.mxu0
        %v3573 = vadd.f32 %v3554, %v3572
        %v3574 = vpop.f32.mrf.mxu0
        %v3575 = vadd.f32 %v3556, %v3574
        %3576 = vdwg.mxu0
        %3577 = vmatpush.bf16.msra.mxu0 %v2156
        %3578 = vmatpush.bf16.msra.mxu0 %v2152
        %3579 = vmatpush.bf16.msra.mxu0 %v2148
        %3580 = vmatpush.bf16.msra.mxu0 %v2144
        %3581 = vmatpush.bf16.msra.mxu0 %v2140
        %3582 = vmatpush.bf16.msra.mxu0 %v2136
        %3583 = vmatpush.bf16.msra.mxu0 %v2132
        %3584 = vmatpush.bf16.msra.mxu0 %v2128
        %3585 = vmatmul.bf16.gmra.mxu0 %v493
        %v3586 = vpop.f32.mrf.mxu0
        %v3587 = vadd.f32 0.0, %v3586
        %v3588 = vpop.f32.mrf.mxu0
        %v3589 = vadd.f32 0.0, %v3588
        %3590 = vmatmul.bf16.gmra.mxu0 %v497
        %v3591 = vpop.f32.mrf.mxu0
        %v3592 = vadd.f32 0.0, %v3591
        %v3593 = vpop.f32.mrf.mxu0
        %v3594 = vadd.f32 0.0, %v3593
        %3595 = vdwg.mxu0
        %3596 = vmatpush.bf16.msra.mxu0 %v2188
        %3597 = vmatpush.bf16.msra.mxu0 %v2184
        %3598 = vmatpush.bf16.msra.mxu0 %v2180
        %3599 = vmatpush.bf16.msra.mxu0 %v2176
        %3600 = vmatpush.bf16.msra.mxu0 %v2172
        %3601 = vmatpush.bf16.msra.mxu0 %v2168
        %3602 = vmatpush.bf16.msra.mxu0 %v2164
        %3603 = vmatpush.bf16.msra.mxu0 %v2160
        %3604 = vmatmul.bf16.gmra.mxu0 %v494
        %v3605 = vpop.f32.mrf.mxu0
        %v3606 = vadd.f32 %v3587, %v3605
        %v3607 = vpop.f32.mrf.mxu0
        %v3608 = vadd.f32 %v3589, %v3607
        %3609 = vmatmul.bf16.gmra.mxu0 %v498
        %v3610 = vpop.f32.mrf.mxu0
        %v3611 = vadd.f32 %v3592, %v3610
        %v3612 = vpop.f32.mrf.mxu0
        %v3613 = vadd.f32 %v3594, %v3612
        %3614 = vdwg.mxu0
        %3615 = vmatpush.bf16.msra.mxu0 %v2220
        %3616 = vmatpush.bf16.msra.mxu0 %v2216
        %3617 = vmatpush.bf16.msra.mxu0 %v2212
        %3618 = vmatpush.bf16.msra.mxu0 %v2208
        %3619 = vmatpush.bf16.msra.mxu0 %v2204
        %3620 = vmatpush.bf16.msra.mxu0 %v2200
        %3621 = vmatpush.bf16.msra.mxu0 %v2196
        %3622 = vmatpush.bf16.msra.mxu0 %v2192
        %3623 = vmatmul.bf16.gmra.mxu0 %v495
        %v3624 = vpop.f32.mrf.mxu0
        %v3625 = vadd.f32 %v3606, %v3624
        %v3626 = vpop.f32.mrf.mxu0
        %v3627 = vadd.f32 %v3608, %v3626
        %3628 = vmatmul.bf16.gmra.mxu0 %v499
        %v3629 = vpop.f32.mrf.mxu0
        %v3630 = vadd.f32 %v3611, %v3629
        %v3631 = vpop.f32.mrf.mxu0
        %v3632 = vadd.f32 %v3613, %v3631
        %3633 = vdwg.mxu0
        %3634 = vmatpush.bf16.msra.mxu0 %v2252
        %3635 = vmatpush.bf16.msra.mxu0 %v2248
        %3636 = vmatpush.bf16.msra.mxu0 %v2244
        %3637 = vmatpush.bf16.msra.mxu0 %v2240
        %3638 = vmatpush.bf16.msra.mxu0 %v2236
        %3639 = vmatpush.bf16.msra.mxu0 %v2232
        %3640 = vmatpush.bf16.msra.mxu0 %v2228
        %3641 = vmatpush.bf16.msra.mxu0 %v2224
        %3642 = vmatmul.bf16.gmra.mxu0 %v496
        %v3643 = vpop.f32.mrf.mxu0
        %v3644 = vadd.f32 %v3625, %v3643
        %v3645 = vpop.f32.mrf.mxu0
        %v3646 = vadd.f32 %v3627, %v3645
        %3647 = vmatmul.bf16.gmra.mxu0 %v500
        %v3648 = vpop.f32.mrf.mxu0
        %v3649 = vadd.f32 %v3630, %v3648
        %v3650 = vpop.f32.mrf.mxu0
        %v3651 = vadd.f32 %v3632, %v3650
        %3652 = vdwg.mxu0
        %3653 = vmatpush.bf16.msra.mxu0 %v2284
        %3654 = vmatpush.bf16.msra.mxu0 %v2280
        %3655 = vmatpush.bf16.msra.mxu0 %v2276
        %3656 = vmatpush.bf16.msra.mxu0 %v2272
        %3657 = vmatpush.bf16.msra.mxu0 %v2268
        %3658 = vmatpush.bf16.msra.mxu0 %v2264
        %3659 = vmatpush.bf16.msra.mxu0 %v2260
        %3660 = vmatpush.bf16.msra.mxu0 %v2256
        %3661 = vmatmul.bf16.gmra.mxu0 %v533
        %v3662 = vpop.f32.mrf.mxu0
        %v3663 = vadd.f32 %v3644, %v3662
        %v3664 = vpop.f32.mrf.mxu0
        %v3665 = vadd.f32 %v3646, %v3664
        %3666 = vmatmul.bf16.gmra.mxu0 %v537
        %v3667 = vpop.f32.mrf.mxu0
        %v3668 = vadd.f32 %v3649, %v3667
        %v3669 = vpop.f32.mrf.mxu0
        %v3670 = vadd.f32 %v3651, %v3669
        %3671 = vdwg.mxu0
        %3672 = vmatpush.bf16.msra.mxu0 %v2316
        %3673 = vmatpush.bf16.msra.mxu0 %v2312
        %3674 = vmatpush.bf16.msra.mxu0 %v2308
        %3675 = vmatpush.bf16.msra.mxu0 %v2304
        %3676 = vmatpush.bf16.msra.mxu0 %v2300
        %3677 = vmatpush.bf16.msra.mxu0 %v2296
        %3678 = vmatpush.bf16.msra.mxu0 %v2292
        %3679 = vmatpush.bf16.msra.mxu0 %v2288
        %3680 = vmatmul.bf16.gmra.mxu0 %v534
        %v3681 = vpop.f32.mrf.mxu0
        %v3682 = vadd.f32 %v3663, %v3681
        %v3683 = vpop.f32.mrf.mxu0
        %v3684 = vadd.f32 %v3665, %v3683
        %3685 = vmatmul.bf16.gmra.mxu0 %v538
        %v3686 = vpop.f32.mrf.mxu0
        %v3687 = vadd.f32 %v3668, %v3686
        %v3688 = vpop.f32.mrf.mxu0
        %v3689 = vadd.f32 %v3670, %v3688
        %3690 = vdwg.mxu0
        %3691 = vmatpush.bf16.msra.mxu0 %v2348
        %3692 = vmatpush.bf16.msra.mxu0 %v2344
        %3693 = vmatpush.bf16.msra.mxu0 %v2340
        %3694 = vmatpush.bf16.msra.mxu0 %v2336
        %3695 = vmatpush.bf16.msra.mxu0 %v2332
        %3696 = vmatpush.bf16.msra.mxu0 %v2328
        %3697 = vmatpush.bf16.msra.mxu0 %v2324
        %3698 = vmatpush.bf16.msra.mxu0 %v2320
        %3699 = vmatmul.bf16.gmra.mxu0 %v535
        %v3700 = vpop.f32.mrf.mxu0
        %v3701 = vadd.f32 %v3682, %v3700
        %v3702 = vpop.f32.mrf.mxu0
        %v3703 = vadd.f32 %v3684, %v3702
        %3704 = vmatmul.bf16.gmra.mxu0 %v539
        %v3705 = vpop.f32.mrf.mxu0
        %v3706 = vadd.f32 %v3687, %v3705
        %v3707 = vpop.f32.mrf.mxu0
        %v3708 = vadd.f32 %v3689, %v3707
        %3709 = vdwg.mxu0
        %3710 = vmatpush.bf16.msra.mxu0 %v2380
        %3711 = vmatpush.bf16.msra.mxu0 %v2376
        %3712 = vmatpush.bf16.msra.mxu0 %v2372
        %3713 = vmatpush.bf16.msra.mxu0 %v2368
        %3714 = vmatpush.bf16.msra.mxu0 %v2364
        %3715 = vmatpush.bf16.msra.mxu0 %v2360
        %3716 = vmatpush.bf16.msra.mxu0 %v2356
        %3717 = vmatpush.bf16.msra.mxu0 %v2352
        %3718 = vmatmul.bf16.gmra.mxu0 %v536
        %v3719 = vpop.f32.mrf.mxu0
        %v3720 = vadd.f32 %v3701, %v3719
        %v3721 = vpop.f32.mrf.mxu0
        %v3722 = vadd.f32 %v3703, %v3721
        %3723 = vmatmul.bf16.gmra.mxu0 %v540
        %v3724 = vpop.f32.mrf.mxu0
        %v3725 = vadd.f32 %v3706, %v3724
        %v3726 = vpop.f32.mrf.mxu0
        %v3727 = vadd.f32 %v3708, %v3726
        %3728 = vdwg.mxu0
        %3729 = vmatpush.bf16.msra.mxu0 %v2412
        %3730 = vmatpush.bf16.msra.mxu0 %v2408
        %3731 = vmatpush.bf16.msra.mxu0 %v2404
        %3732 = vmatpush.bf16.msra.mxu0 %v2400
        %3733 = vmatpush.bf16.msra.mxu0 %v2396
        %3734 = vmatpush.bf16.msra.mxu0 %v2392
        %3735 = vmatpush.bf16.msra.mxu0 %v2388
        %3736 = vmatpush.bf16.msra.mxu0 %v2384
        %3737 = vmatmul.bf16.gmra.mxu0 %v573
        %v3738 = vpop.f32.mrf.mxu0
        %v3739 = vadd.f32 %v3720, %v3738
        %v3740 = vpop.f32.mrf.mxu0
        %v3741 = vadd.f32 %v3722, %v3740
        %3742 = vmatmul.bf16.gmra.mxu0 %v577
        %v3743 = vpop.f32.mrf.mxu0
        %v3744 = vadd.f32 %v3725, %v3743
        %v3745 = vpop.f32.mrf.mxu0
        %v3746 = vadd.f32 %v3727, %v3745
        %3747 = vdwg.mxu0
        %3748 = vmatpush.bf16.msra.mxu0 %v2444
        %3749 = vmatpush.bf16.msra.mxu0 %v2440
        %3750 = vmatpush.bf16.msra.mxu0 %v2436
        %3751 = vmatpush.bf16.msra.mxu0 %v2432
        %3752 = vmatpush.bf16.msra.mxu0 %v2428
        %3753 = vmatpush.bf16.msra.mxu0 %v2424
        %3754 = vmatpush.bf16.msra.mxu0 %v2420
        %3755 = vmatpush.bf16.msra.mxu0 %v2416
        %3756 = vmatmul.bf16.gmra.mxu0 %v574
        %v3757 = vpop.f32.mrf.mxu0
        %v3758 = vadd.f32 %v3739, %v3757
        %v3759 = vpop.f32.mrf.mxu0
        %v3760 = vadd.f32 %v3741, %v3759
        %3761 = vmatmul.bf16.gmra.mxu0 %v578
        %v3762 = vpop.f32.mrf.mxu0
        %v3763 = vadd.f32 %v3744, %v3762
        %v3764 = vpop.f32.mrf.mxu0
        %v3765 = vadd.f32 %v3746, %v3764
        %3766 = vdwg.mxu0
        %3767 = vmatpush.bf16.msra.mxu0 %v2476
        %3768 = vmatpush.bf16.msra.mxu0 %v2472
        %3769 = vmatpush.bf16.msra.mxu0 %v2468
        %3770 = vmatpush.bf16.msra.mxu0 %v2464
        %3771 = vmatpush.bf16.msra.mxu0 %v2460
        %3772 = vmatpush.bf16.msra.mxu0 %v2456
        %3773 = vmatpush.bf16.msra.mxu0 %v2452
        %3774 = vmatpush.bf16.msra.mxu0 %v2448
        %3775 = vmatmul.bf16.gmra.mxu0 %v575
        %v3776 = vpop.f32.mrf.mxu0
        %v3777 = vadd.f32 %v3758, %v3776
        %v3778 = vpop.f32.mrf.mxu0
        %v3779 = vadd.f32 %v3760, %v3778
        %3780 = vmatmul.bf16.gmra.mxu0 %v579
        %v3781 = vpop.f32.mrf.mxu0
        %v3782 = vadd.f32 %v3763, %v3781
        %v3783 = vpop.f32.mrf.mxu0
        %v3784 = vadd.f32 %v3765, %v3783
        %3785 = vdwg.mxu0
        %3786 = vmatpush.bf16.msra.mxu0 %v2508
        %3787 = vmatpush.bf16.msra.mxu0 %v2504
        %3788 = vmatpush.bf16.msra.mxu0 %v2500
        %3789 = vmatpush.bf16.msra.mxu0 %v2496
        %3790 = vmatpush.bf16.msra.mxu0 %v2492
        %3791 = vmatpush.bf16.msra.mxu0 %v2488
        %3792 = vmatpush.bf16.msra.mxu0 %v2484
        %3793 = vmatpush.bf16.msra.mxu0 %v2480
        %3794 = vmatmul.bf16.gmra.mxu0 %v576
        %v3795 = vpop.f32.mrf.mxu0
        %v3796 = vadd.f32 %v3777, %v3795
        %v3797 = vpop.f32.mrf.mxu0
        %v3798 = vadd.f32 %v3779, %v3797
        %3799 = vmatmul.bf16.gmra.mxu0 %v580
        %v3800 = vpop.f32.mrf.mxu0
        %v3801 = vadd.f32 %v3782, %v3800
        %v3802 = vpop.f32.mrf.mxu0
        %v3803 = vadd.f32 %v3784, %v3802
        %3804 = vdwg.mxu0
        %v3805 = vadd.f32 %v3112, %v3114
        %v3806 = vadd.f32 %v3805, %v3117
        %v3807 = vadd.f32 %v3806, %v3119
        %v3808 = vrot.slane %v3807, 4
        %v3809 = vadd.f32 %v3807, %v3808
        %v3810 = vrot.slane %v3809, 2
        %v3811 = vadd.f32 %v3809, %v3810
        %v3812 = vrot.slane %v3811, 1
        %v3813 = vadd.f32 %v3811, %v3812
        %v3814 = vadd.f32 %v3340, %v3342
        %v3815 = vadd.f32 %v3814, %v3345
        %v3816 = vadd.f32 %v3815, %v3347
        %v3817 = vrot.slane %v3816, 4
        %v3818 = vadd.f32 %v3816, %v3817
        %v3819 = vrot.slane %v3818, 2
        %v3820 = vadd.f32 %v3818, %v3819
        %v3821 = vrot.slane %v3820, 1
        %v3822 = vadd.f32 %v3820, %v3821
        %v3823 = vadd.f32 %v3568, %v3570
        %v3824 = vadd.f32 %v3823, %v3573
        %v3825 = vadd.f32 %v3824, %v3575
        %v3826 = vrot.slane %v3825, 4
        %v3827 = vadd.f32 %v3825, %v3826
        %v3828 = vrot.slane %v3827, 2
        %v3829 = vadd.f32 %v3827, %v3828
        %v3830 = vrot.slane %v3829, 1
        %v3831 = vadd.f32 %v3829, %v3830
        %v3832 = vadd.f32 %v3796, %v3798
        %v3833 = vadd.f32 %v3832, %v3801
        %v3834 = vadd.f32 %v3833, %v3803
        %v3835 = vrot.slane %v3834, 4
        %v3836 = vadd.f32 %v3834, %v3835
        %v3837 = vrot.slane %v3836, 2
        %v3838 = vadd.f32 %v3836, %v3837
        %v3839 = vrot.slane %v3838, 1
        %v3840 = vadd.f32 %v3838, %v3839
        %v3841 = vmul.f32 %v3112, %v3112
        %v3842 = vmul.f32 %v3340, %v3340
        %v3843 = vmul.f32 %v3568, %v3568
        %v3844 = vmul.f32 %v3796, %v3796
        %v3845 = vmul.f32 %v3114, %v3114
        %v3846 = vmul.f32 %v3342, %v3342
        %v3847 = vmul.f32 %v3570, %v3570
        %v3848 = vmul.f32 %v3798, %v3798
        %v3849 = vmul.f32 %v3117, %v3117
        %v3850 = vmul.f32 %v3345, %v3345
        %v3851 = vmul.f32 %v3573, %v3573
        %v3852 = vmul.f32 %v3801, %v3801
        %v3853 = vmul.f32 %v3119, %v3119
        %v3854 = vmul.f32 %v3347, %v3347
        %v3855 = vmul.f32 %v3575, %v3575
        %v3856 = vmul.f32 %v3803, %v3803
        %v3857 = vadd.f32 %v3841, %v3845
        %v3858 = vadd.f32 %v3857, %v3849
        %v3859 = vadd.f32 %v3858, %v3853
        %v3860 = vrot.slane %v3859, 4
        %v3861 = vadd.f32 %v3859, %v3860
        %v3862 = vrot.slane %v3861, 2
        %v3863 = vadd.f32 %v3861, %v3862
        %v3864 = vrot.slane %v3863, 1
        %v3865 = vadd.f32 %v3863, %v3864
        %v3866 = vadd.f32 %v3842, %v3846
        %v3867 = vadd.f32 %v3866, %v3850
        %v3868 = vadd.f32 %v3867, %v3854
        %v3869 = vrot.slane %v3868, 4
        %v3870 = vadd.f32 %v3868, %v3869
        %v3871 = vrot.slane %v3870, 2
        %v3872 = vadd.f32 %v3870, %v3871
        %v3873 = vrot.slane %v3872, 1
        %v3874 = vadd.f32 %v3872, %v3873
        %v3875 = vadd.f32 %v3843, %v3847
        %v3876 = vadd.f32 %v3875, %v3851
        %v3877 = vadd.f32 %v3876, %v3855
        %v3878 = vrot.slane %v3877, 4
        %v3879 = vadd.f32 %v3877, %v3878
        %v3880 = vrot.slane %v3879, 2
        %v3881 = vadd.f32 %v3879, %v3880
        %v3882 = vrot.slane %v3881, 1
        %v3883 = vadd.f32 %v3881, %v3882
        %v3884 = vadd.f32 %v3844, %v3848
        %v3885 = vadd.f32 %v3884, %v3852
        %v3886 = vadd.f32 %v3885, %v3856
        %v3887 = vrot.slane %v3886, 4
        %v3888 = vadd.f32 %v3886, %v3887
        %v3889 = vrot.slane %v3888, 2
        %v3890 = vadd.f32 %v3888, %v3889
        %v3891 = vrot.slane %v3890, 1
        %v3892 = vadd.f32 %v3890, %v3891
        %3893 = vrot.lane.b32.xlu0 %v3813, 32
        %v3894 = vpop.permute.xlu0 %3893
        %3895 = vrot.lane.b32.xlu0 %v3822, 32
        %v3896 = vpop.permute.xlu0 %3895
        %3897 = vrot.lane.b32.xlu0 %v3831, 32
        %v3898 = vpop.permute.xlu0 %3897
        %3899 = vrot.lane.b32.xlu0 %v3840, 32
        %v3900 = vpop.permute.xlu0 %3899
        %v3901 = vlaneseq
        %v3902 = vand.u32 %v3901, 127
        %vm3903 = vcmp.lt.s32.totalorder %v3902, 32
        %v3904 = vsel %vm3903, %v3898, %v3900
        %v3905 = vsel %vm3903, %v3896, %v3898
        %v3906 = vsel %vm3903, %v3894, %v3896
        %v3907 = vsel %vm3903, %v3900, %v3894
        %v3908 = vadd.f32 %v3813, %v3907
        %v3909 = vadd.f32 %v3822, %v3906
        %v3910 = vadd.f32 %v3831, %v3905
        %v3911 = vadd.f32 %v3840, %v3904
        %3912 = vrot.lane.b32.xlu0 %v3865, 32
        %v3913 = vpop.permute.xlu0 %3912
        %3914 = vrot.lane.b32.xlu0 %v3874, 32
        %v3915 = vpop.permute.xlu0 %3914
        %3916 = vrot.lane.b32.xlu0 %v3883, 32
        %v3917 = vpop.permute.xlu0 %3916
        %3918 = vrot.lane.b32.xlu0 %v3892, 32
        %v3919 = vpop.permute.xlu0 %3918
        %v3920 = vsel %vm3903, %v3917, %v3919
        %v3921 = vsel %vm3903, %v3915, %v3917
        %v3922 = vsel %vm3903, %v3913, %v3915
        %v3923 = vsel %vm3903, %v3919, %v3913
        %v3924 = vadd.f32 %v3865, %v3923
        %v3925 = vadd.f32 %v3874, %v3922
        %v3926 = vadd.f32 %v3883, %v3921
        %v3927 = vadd.f32 %v3892, %v3920
        %3928 = vrot.lane.b32.xlu0 %v3908, 64
        %v3929 = vpop.permute.xlu0 %3928
        %3930 = vrot.lane.b32.xlu0 %v3909, 64
        %v3931 = vpop.permute.xlu0 %3930
        %3932 = vrot.lane.b32.xlu0 %v3910, 64
        %v3933 = vpop.permute.xlu0 %3932
        %3934 = vrot.lane.b32.xlu0 %v3911, 64
        %v3935 = vpop.permute.xlu0 %3934
        %vm3936 = vcmp.lt.s32.totalorder %v3902, 64
        %v3937 = vsel %vm3936, %v3933, %v3935
        %v3938 = vsel %vm3936, %v3931, %v3933
        %v3939 = vsel %vm3936, %v3929, %v3931
        %v3940 = vsel %vm3936, %v3935, %v3929
        %v3941 = vadd.f32 %v3908, %v3940
        %v3942 = vadd.f32 %v3909, %v3939
        %v3943 = vadd.f32 %v3910, %v3938
        %v3944 = vadd.f32 %v3911, %v3937
        %3945 = vrot.lane.b32.xlu0 %v3924, 64
        %v3946 = vpop.permute.xlu0 %3945
        %3947 = vrot.lane.b32.xlu0 %v3925, 64
        %v3948 = vpop.permute.xlu0 %3947
        %3949 = vrot.lane.b32.xlu0 %v3926, 64
        %v3950 = vpop.permute.xlu0 %3949
        %3951 = vrot.lane.b32.xlu0 %v3927, 64
        %v3952 = vpop.permute.xlu0 %3951
        %v3953 = vsel %vm3936, %v3950, %v3952
        %v3954 = vsel %vm3936, %v3948, %v3950
        %v3955 = vsel %vm3936, %v3946, %v3948
        %v3956 = vsel %vm3936, %v3952, %v3946
        %v3957 = vadd.f32 %v3924, %v3956
        %v3958 = vadd.f32 %v3925, %v3955
        %v3959 = vadd.f32 %v3926, %v3954
        %v3960 = vadd.f32 %v3927, %v3953
        %v3961 = vadd.f32 %v3941, %v3944
        %v3962 = vadd.f32 %v3942, %v3941
        %v3963 = vadd.f32 %v3943, %v3942
        %v3964 = vadd.f32 %v3944, %v3943
        %v3965 = vadd.f32 %v3957, %v3960
        %v3966 = vadd.f32 %v3958, %v3957
        %v3967 = vadd.f32 %v3959, %v3958
        %v3968 = vadd.f32 %v3960, %v3959
        %v3969 = vadd.f32 %v3961, %v3963
        %v3970 = vadd.f32 %v3962, %v3964
        %v3971 = vadd.f32 %v3965, %v3967
        %v3972 = vadd.f32 %v3966, %v3968
        %v3973 = vmul.f32 %v3969, 0.001953125
        %v3974 = vmul.f32 %v3970, 0.001953125
        %v3975 = vmul.f32 %v3971, 0.001953125
        %v3976 = vmul.f32 %v3972, 0.001953125
        %v3977 = vmul.f32 %v3973, %v3973
        %v3978 = vmul.f32 %v3974, %v3974
        %v3979 = vsub.f32 %v3975, %v3977
        %v3980 = vsub.f32 %v3976, %v3978
        %v3981 = vld [vmem:[%s194] sm:$0xff]
        %v3982 = vperm.slane %v3973, 0
        %v3983 = vperm.slane %v3974, 0
        %v3984 = vsub.f32 %v3112, %v3982
        %v3985 = vsub.f32 %v3340, %v3983
        %v3986 = vsub.f32 %v3568, %v3982
        %v3987 = vsub.f32 %v3796, %v3983
        %v3988 = vsub.f32 %v3114, %v3982
        %v3989 = vsub.f32 %v3342, %v3983
        %v3990 = vsub.f32 %v3570, %v3982
        %v3991 = vsub.f32 %v3798, %v3983
        %v3992 = vsub.f32 %v3117, %v3982
        %v3993 = vsub.f32 %v3345, %v3983
        %v3994 = vsub.f32 %v3573, %v3982
        %v3995 = vsub.f32 %v3801, %v3983
        %v3996 = vsub.f32 %v3119, %v3982
        %v3997 = vsub.f32 %v3347, %v3983
        %v3998 = vsub.f32 %v3575, %v3982
        %v3999 = vsub.f32 %v3803, %v3983
        %v4000 = vadd.f32 %v3979, 1e-05
        %v4001 = vadd.f32 %v3980, 1e-05
        %v4002 = vrsqrt.pop %v4000
        %v4003 = vmul.f32 %v4002, %v4000
        %v4004 = vmul.f32 %v4003, %v4002
        %v4005 = vmul.f32 0.5, %v4004
        %v4006 = vsub.f32 1.5, %v4005
        %v4007 = vmul.f32 %v4002, %v4006
        %vm4008 = vweird.f32 %v4000
        %vm4009 = vweird.f32 %v4002
        %vm4010 = vmor %vm4008, %vm4009
        %v4011 = vsel %vm4010, %v4002, %v4007
        %v4012 = vrsqrt.pop %v4001
        %v4013 = vmul.f32 %v4012, %v4001
        %v4014 = vmul.f32 %v4013, %v4012
        %v4015 = vmul.f32 0.5, %v4014
        %v4016 = vsub.f32 1.5, %v4015
        %v4017 = vmul.f32 %v4012, %v4016
        %vm4018 = vweird.f32 %v4001
        %vm4019 = vweird.f32 %v4012
        %vm4020 = vmor %vm4018, %vm4019
        %v4021 = vsel %vm4020, %v4012, %v4017
        %v4022 = vperm.slane %v4011, 0
        %v4023 = vperm.slane %v4021, 0
        %v4024 = vmul.f32 %v3984, %v4022
        %v4025 = vmul.f32 %v3985, %v4023
        %v4026 = vmul.f32 %v3986, %v4022
        %v4027 = vmul.f32 %v3987, %v4023
        %v4028 = vmul.f32 %v3988, %v4022
        %v4029 = vmul.f32 %v3989, %v4023
        %v4030 = vmul.f32 %v3990, %v4022
        %v4031 = vmul.f32 %v3991, %v4023
        %v4032 = vmul.f32 %v3992, %v4022
        %v4033 = vmul.f32 %v3993, %v4023
        %v4034 = vmul.f32 %v3994, %v4022
        %v4035 = vmul.f32 %v3995, %v4023
        %v4036 = vmul.f32 %v3996, %v4022
        %v4037 = vmul.f32 %v3997, %v4023
        %v4038 = vmul.f32 %v3998, %v4022
        %v4039 = vmul.f32 %v3999, %v4023
        %v4041 = vperm.slane %v3981, 0
        %v4042 = vperm.slane %v3981, 2
        %v4043 = vperm.slane %v3981, 4
        %v4044 = vperm.slane %v3981, 6
        %v4049 = vperm.slane %v4041, 0
        %v4050 = vperm.slane %v4042, 0
        %v4051 = vperm.slane %v4043, 0
        %v4052 = vperm.slane %v4044, 0
        %v4053 = vmul.f32 %v4024, %v4049
        %v4054 = vmul.f32 %v4025, %v4050
        %v4055 = vmul.f32 %v4026, %v4051
        %v4056 = vmul.f32 %v4027, %v4052
        %v4057 = vmul.f32 %v4028, %v4049
        %v4058 = vmul.f32 %v4029, %v4050
        %v4059 = vmul.f32 %v4030, %v4051
        %v4060 = vmul.f32 %v4031, %v4052
        %v4061 = vmul.f32 %v4032, %v4049
        %v4062 = vmul.f32 %v4033, %v4050
        %v4063 = vmul.f32 %v4034, %v4051
        %v4064 = vmul.f32 %v4035, %v4052
        %v4065 = vmul.f32 %v4036, %v4049
        %v4066 = vmul.f32 %v4037, %v4050
        %v4067 = vmul.f32 %v4038, %v4051
        %v4068 = vmul.f32 %v4039, %v4052
        %v4069 = vperm.slane %v3981, 1
        %v4070 = vperm.slane %v3981, 3
        %v4071 = vperm.slane %v3981, 5
        %v4072 = vperm.slane %v3981, 7
        %v4077 = vperm.slane %v4069, 1
        %v4078 = vperm.slane %v4070, 1
        %v4079 = vperm.slane %v4071, 1
        %v4080 = vperm.slane %v4072, 1
        %v4081 = vadd.f32 %v4053, %v4077
        %v4082 = vadd.f32 %v4054, %v4078
        %v4083 = vadd.f32 %v4055, %v4079
        %v4084 = vadd.f32 %v4056, %v4080
        %v4085 = vadd.f32 %v4057, %v4077
        %v4086 = vadd.f32 %v4058, %v4078
        %v4087 = vadd.f32 %v4059, %v4079
        %v4088 = vadd.f32 %v4060, %v4080
        %v4089 = vadd.f32 %v4061, %v4077
        %v4090 = vadd.f32 %v4062, %v4078
        %v4091 = vadd.f32 %v4063, %v4079
        %v4092 = vadd.f32 %v4064, %v4080
        %v4093 = vadd.f32 %v4065, %v4077
        %v4094 = vadd.f32 %v4066, %v4078
        %v4095 = vadd.f32 %v4067, %v4079
        %v4096 = vadd.f32 %v4068, %v4080
        %p4097 = scmp.eq.s32.totalorder %s20, 1
        %v4098 = vld [vmem:[%s0] sm:$0xff]
        %v4099 = vld [vmem:[%s0 + $0x8] sm:$0xff]
        %v4100 = vld [vmem:[%s0 + $0x10] sm:$0xff]
        %v4101 = vld [vmem:[%s0 + $0x18] sm:$0xff]
        %v4102 = vld [vmem:[%s0 + $0x20] sm:$0xff]
        %v4103 = vld [vmem:[%s0 + $0x28] sm:$0xff]
        %v4104 = vld [vmem:[%s0 + $0x30] sm:$0xff]
        %v4105 = vld [vmem:[%s0 + $0x38] sm:$0xff]
        %v4106 = vld [vmem:[%s0 + $0x40] sm:$0xff]
        %v4107 = vld [vmem:[%s0 + $0x48] sm:$0xff]
        %v4108 = vld [vmem:[%s0 + $0x50] sm:$0xff]
        %v4109 = vld [vmem:[%s0 + $0x58] sm:$0xff]
        %v4110 = vld [vmem:[%s0 + $0x60] sm:$0xff]
        %v4111 = vld [vmem:[%s0 + $0x68] sm:$0xff]
        %v4112 = vld [vmem:[%s0 + $0x70] sm:$0xff]
        %v4113 = vld [vmem:[%s0 + $0x78] sm:$0xff]
        %v4114 = vadd.f32 %v4081, %v4098
        %v4115 = vadd.f32 %v4082, %v4099
        %v4116 = vadd.f32 %v4083, %v4100
        %v4117 = vadd.f32 %v4084, %v4101
        %v4118 = vadd.f32 %v4085, %v4102
        %v4119 = vadd.f32 %v4086, %v4103
        %v4120 = vadd.f32 %v4087, %v4104
        %v4121 = vadd.f32 %v4088, %v4105
        %v4122 = vadd.f32 %v4089, %v4106
        %v4123 = vadd.f32 %v4090, %v4107
        %v4124 = vadd.f32 %v4091, %v4108
        %v4125 = vadd.f32 %v4092, %v4109
        %v4126 = vadd.f32 %v4093, %v4110
        %v4127 = vadd.f32 %v4094, %v4111
        %v4128 = vadd.f32 %v4095, %v4112
        %v4129 = vadd.f32 %v4096, %v4113
        %v4130 = vmax.f32 %v4081, 0.0
        %v4131 = vmax.f32 %v4082, 0.0
        %v4132 = vmax.f32 %v4083, 0.0
        %v4133 = vmax.f32 %v4084, 0.0
        %v4134 = vmax.f32 %v4085, 0.0
        %v4135 = vmax.f32 %v4086, 0.0
        %v4136 = vmax.f32 %v4087, 0.0
        %v4137 = vmax.f32 %v4088, 0.0
        %v4138 = vmax.f32 %v4089, 0.0
        %v4139 = vmax.f32 %v4090, 0.0
        %v4140 = vmax.f32 %v4091, 0.0
        %v4141 = vmax.f32 %v4092, 0.0
        %v4142 = vmax.f32 %v4093, 0.0
        %v4143 = vmax.f32 %v4094, 0.0
        %v4144 = vmax.f32 %v4095, 0.0
        %v4145 = vmax.f32 %v4096, 0.0
        %s4146 = scalar_select %p4097, 1, 0
        %v4147 = vstv %s4146
        %vm4148 = vcmp.eq.s32.totalorder %v4147, 1
        %v4149 = vsel %vm4148, %v4114, %v4130
        %v4150 = vsel %vm4148, %v4115, %v4131
        %v4151 = vsel %vm4148, %v4116, %v4132
        %v4152 = vsel %vm4148, %v4117, %v4133
        %v4153 = vsel %vm4148, %v4118, %v4134
        %v4154 = vsel %vm4148, %v4119, %v4135
        %v4155 = vsel %vm4148, %v4120, %v4136
        %v4156 = vsel %vm4148, %v4121, %v4137
        %v4157 = vsel %vm4148, %v4122, %v4138
        %v4158 = vsel %vm4148, %v4123, %v4139
        %v4159 = vsel %vm4148, %v4124, %v4140
        %v4160 = vsel %vm4148, %v4125, %v4141
        %v4161 = vsel %vm4148, %v4126, %v4142
        %v4162 = vsel %vm4148, %v4127, %v4143
        %v4163 = vsel %vm4148, %v4128, %v4144
        %v4164 = vsel %vm4148, %v4129, %v4145
        %p4165 = scmp.ne.s32.totalorder %s20, 2
        // Predicated region
        $region45: #{residual_struct_forward.1} parent=31 // pred_check
          %p4166 = pneg %p4165
        $region46: #{residual_struct_forward.1} parent=31 // pred_check_branch
          %4168 = sbr.rel (%p4166) target = $region48
        $region47: #{residual_struct_forward.1} parent=31 // pred_region
          %4169 = vst [vmem:[#allocation2] sm:$0xff] %v4149
          %4170 = vst [vmem:[#allocation2 + $0x8] sm:$0xff] %v4150
          %4171 = vst [vmem:[#allocation2 + $0x10] sm:$0xff] %v4151
          %4172 = vst [vmem:[#allocation2 + $0x18] sm:$0xff] %v4152
          %4173 = vst [vmem:[#allocation2 + $0x20] sm:$0xff] %v4153
          %4174 = vst [vmem:[#allocation2 + $0x28] sm:$0xff] %v4154
          %4175 = vst [vmem:[#allocation2 + $0x30] sm:$0xff] %v4155
          %4176 = vst [vmem:[#allocation2 + $0x38] sm:$0xff] %v4156
          %4177 = vst [vmem:[#allocation2 + $0x40] sm:$0xff] %v4157
          %4178 = vst [vmem:[#allocation2 + $0x48] sm:$0xff] %v4158
          %4179 = vst [vmem:[#allocation2 + $0x50] sm:$0xff] %v4159
          %4180 = vst [vmem:[#allocation2 + $0x58] sm:$0xff] %v4160
          %4181 = vst [vmem:[#allocation2 + $0x60] sm:$0xff] %v4161
          %4182 = vst [vmem:[#allocation2 + $0x68] sm:$0xff] %v4162
          %4183 = vst [vmem:[#allocation2 + $0x70] sm:$0xff] %v4163
          %4184 = vst [vmem:[#allocation2 + $0x78] sm:$0xff] %v4164
        $region48: #{residual_struct_forward.1} parent=31 // pred_fallthru
          _
        %p4185 = scmp.eq.s32.totalorder %s20, 2
        // Predicated region
        $region49: #{residual_struct_forward.1} parent=31 // pred_check
          %p4186 = pneg %p4185
        $region50: #{residual_struct_forward.1} parent=31 // pred_check_branch
          %4188 = sbr.rel (%p4186) target = $region52
        $region51: #{residual_struct_forward.1} parent=31 // pred_region
          %4189 = vst [vmem:[%s3] sm:$0xff] %v4149
          %4190 = vst [vmem:[%s3 + $0x8] sm:$0xff] %v4150
          %4191 = vst [vmem:[%s3 + $0x10] sm:$0xff] %v4151
          %4192 = vst [vmem:[%s3 + $0x18] sm:$0xff] %v4152
          %4193 = vst [vmem:[%s3 + $0x20] sm:$0xff] %v4153
          %4194 = vst [vmem:[%s3 + $0x28] sm:$0xff] %v4154
          %4195 = vst [vmem:[%s3 + $0x30] sm:$0xff] %v4155
          %4196 = vst [vmem:[%s3 + $0x38] sm:$0xff] %v4156
          %4197 = vst [vmem:[%s3 + $0x40] sm:$0xff] %v4157
          %4198 = vst [vmem:[%s3 + $0x48] sm:$0xff] %v4158
          %4199 = vst [vmem:[%s3 + $0x50] sm:$0xff] %v4159
          %4200 = vst [vmem:[%s3 + $0x58] sm:$0xff] %v4160
          %4201 = vst [vmem:[%s3 + $0x60] sm:$0xff] %v4161
          %4202 = vst [vmem:[%s3 + $0x68] sm:$0xff] %v4162
          %4203 = vst [vmem:[%s3 + $0x70] sm:$0xff] %v4163
          %4204 = vst [vmem:[%s3 + $0x78] sm:$0xff] %v4164
        $region52: #{residual_struct_forward.1} parent=31 // pred_fallthru
          _
        // Predicated region
        $region53: #{residual_struct_forward.1} parent=31 // pred_check
          %p4205 = pneg %p106
        $region54: #{residual_struct_forward.1} parent=31 // pred_check_branch
          %4207 = sbr.rel (%p4205) target = $region56
        $region55: #{residual_struct_forward.1} parent=31 // pred_region
          _
        $region56: #{residual_struct_forward.1} parent=31 // pred_fallthru
          _
        // Predicated region
        $region57: #{residual_struct_forward.1} parent=31 // pred_check
          %p4208 = pneg %p106
        $region58: #{residual_struct_forward.1} parent=31 // pred_check_branch
          %4210 = sbr.rel (%p4208) target = $region60
        $region59: #{residual_struct_forward.1} parent=31 // pred_region
          _
        $region60: #{residual_struct_forward.1} parent=31 // pred_fallthru
          _
      $region32: #{residual_struct_forward.1} parent=5 // pred_fallthru
        _
      %p4211 = scmp.le.s32.totalorder 2, %s15
      // Predicated region
      $region61: #{residual_struct_forward.1} parent=5 // pred_check
        %p4212 = pneg %p4211
      $region62: #{residual_struct_forward.1} parent=5 // pred_check_branch
        %4214 = sbr.rel (%p4212) target = $region64
      $region63: #{residual_struct_forward.1} parent=5 // pred_region
        %s4215 = ssub.s32 %s15, 2
      $region64: #{residual_struct_forward.1} parent=5 // pred_fallthru
        _
    $region6: #{residual_struct_forward.1} parent=1 // loop_footer
      %s19 = sadd.s32 1, %s15
    $region7: #{residual_struct_forward.1} parent=1 // loop_footer_branch
      %14 = sbr.rel target = $region3
    $region8: #{residual_struct_forward.1} parent=1 // loop_exit
      _
    %4216 = vsyncpa [#allocation4], 1
    %s4217 = scalar_lea.sflag [#allocation4], 1
    %4218 = vsyncpa %s4217, 1
    %4219 = vsyncpa [#allocation6], 1
    %s4220 = scalar_lea.sflag [#allocation6], 1
    %4221 = vsyncpa %s4220, 1

</llo_original>
